<compile_context>
chip_gen: v7x
topology: tpu7x:2x2x1
jax: 0.10.0
libtpu: 0.0.40
codegen_flags: <defaults>
</compile_context>

<pallas_src>
import functools
import math

import jax
import jax.numpy as jnp
from jax.experimental import pallas as pl
from jax.experimental.pallas import tpu as pltpu

_EPS = 1e-5            # BatchNorm eps (PyTorch default)
_LEAKY_SLOPE = 0.01    # BasicConv = Conv(bias=False) -> BN -> LeakyReLU(0.01)
_LANE = 128            # lane width: output flat length padded to a multiple of this
_CPACK = 16            # bf16 sublane packing: pad channels to a multiple of this
_VMEM_LIMIT = 64 * 1024 * 1024


def _ru(x, m):
    return (x + m - 1) // m * m


# ---------------------------------------------------------------------------
# Core Pallas kernel: one fat matmul per (n, d_out) grid step.
#   xp    : [N, Dp, SC, Ls]  bf16   padded source planes (SC = n_sources*Cin_pad)
#   w_mat : [M, K]           bf16   K = kd * T * Cin_pad, (depth-tap, hw-tap, ci)
#   s/b   : [M, 1]           f32    folded BN scale / bias (phase-tiled for deconv)
#   out   : [N, Do, M, Lo]
# ---------------------------------------------------------------------------
def _conv_core(xp, w_mat, s_col, b_col, *, kd, sd, taps, cin, lo, act, do,
               out_dtype):
    N, Dp, SC, Ls = xp.shape
    M, K = w_mat.shape
    assert K == kd * len(taps) * cin

    def kernel(*refs):
        x_refs = refs[:kd]
        w_ref, s_ref, b_ref, o_ref = refs[kd], refs[kd + 1], refs[kd + 2], refs[kd + 3]
        pieces = []
        for a in range(kd):
            for (sub0, col) in taps:
                pieces.append(x_refs[a][sub0:sub0 + cin, col:col + lo])
        slab = pieces[0] if len(pieces) == 1 else jnp.concatenate(pieces, axis=0)
        y = jnp.dot(w_ref[...], slab, preferred_element_type=jnp.float32)
        y = y * s_ref[...] + b_ref[...]
        if act:
            y = jnp.where(y >= 0.0, y, _LEAKY_SLOPE * y)
        o_ref[...] = y.astype(o_ref.dtype)

    def x_map(a):
        return lambda n, d: (n, d * sd + a, 0, 0)

    const2 = lambda n, d: (0, 0)
    in_specs = ([pl.BlockSpec((None, None, SC, Ls), x_map(a)) for a in range(kd)]
                + [pl.BlockSpec((M, K), const2),
                   pl.BlockSpec((M, 1), const2),
                   pl.BlockSpec((M, 1), const2)])

    return pl.pallas_call(
        kernel,
        out_shape=jax.ShapeDtypeStruct((N, do, M, lo), out_dtype),
        grid_spec=pltpu.PrefetchScalarGridSpec(
            num_scalar_prefetch=0,
            grid=(N, do),
            in_specs=in_specs,
            out_specs=pl.BlockSpec((None, None, M, lo), lambda n, d: (n, d, 0, 0)),
        ),
        compiler_params=pltpu.CompilerParams(
            dimension_semantics=("parallel", "parallel"),
            vmem_limit_bytes=_VMEM_LIMIT),
    )(*([xp] * kd), w_mat, s_col, b_col)


# ---------------------------------------------------------------------------
# CGF element-wise kernels: semantic feature broadcast over D via the index_map.
# ---------------------------------------------------------------------------
def _cgf_add_kernel(f_ref, cv_ref, o_ref):
    f = f_ref[...].astype(jnp.float32)
    o_ref[...] = (f[None] + cv_ref[...].astype(jnp.float32)).astype(o_ref.dtype)


def _cgf_fuse_kernel(att_ref, f_ref, cv_ref, o_ref):
    f = f_ref[...].astype(jnp.float32)
    o_ref[...] = (jax.nn.sigmoid(att_ref[...].astype(jnp.float32)) * f[None]
                  + cv_ref[...].astype(jnp.float32)).astype(o_ref.dtype)


def _cgf_pointwise(feat2d, cv, att=None, out_dtype=jnp.bfloat16):
    # feat2d: [N, C, H, W];  cv (and att): [N, D, C, H, W]
    N, D, C, H, W = cv.shape
    L = H * W
    # Largest divisor of D whose block fits a ~4 MiB budget (amortize step cost).
    td = 1
    for t in range(D, 0, -1):
        if D % t == 0 and t * C * L * 2 <= (4 << 20):
            td = t
            break

    f = feat2d.reshape(N, C, L).astype(jnp.bfloat16)
    cvf = cv.reshape(N, D, C, L).astype(jnp.bfloat16)

    def vol_spec():
        return pl.BlockSpec((None, td, C, L), lambda n, d: (n, d, 0, 0))

    feat_spec = pl.BlockSpec((None, C, L), lambda n, d: (n, 0, 0))

    if att is None:
        kernel, args, in_specs = _cgf_add_kernel, (f, cvf), [feat_spec, vol_spec()]
    else:
        attf = att.reshape(N, D, C, L).astype(jnp.bfloat16)
        kernel, args = _cgf_fuse_kernel, (attf, f, cvf)
        in_specs = [vol_spec(), feat_spec, vol_spec()]

    out = pl.pallas_call(
        kernel,
        out_shape=jax.ShapeDtypeStruct((N, D, C, L), out_dtype),
        grid_spec=pltpu.PrefetchScalarGridSpec(
            num_scalar_prefetch=0,
            grid=(N, D // td),
            in_specs=in_specs,
            out_specs=vol_spec(),
        ),
        compiler_params=pltpu.CompilerParams(
            dimension_semantics=("parallel", "parallel"),
            vmem_limit_bytes=_VMEM_LIMIT),
    )(*args)
    return out.reshape(N, D, C, H, W)


# ---------------------------------------------------------------------------
# Parameter containers & BN folding
# ---------------------------------------------------------------------------
def _make_bn(c):
    return dict(gamma=jnp.ones((c,), jnp.float32), beta=jnp.zeros((c,), jnp.float32),
                mean=jnp.zeros((c,), jnp.float32), var=jnp.ones((c,), jnp.float32))


def _fold_bn(bn, conv_bias, cout):
    if bn is not None:
        s = bn["gamma"] / jnp.sqrt(bn["var"] + _EPS)
        b = bn["beta"] - bn["mean"] * s
        if conv_bias is not None:
            b = b + conv_bias * s
    else:
        s = jnp.ones((cout,), jnp.float32)
        b = conv_bias if conv_bias is not None else jnp.zeros((cout,), jnp.float32)
    return s.astype(jnp.float32), b.astype(jnp.float32)


def basic_conv3d(key, cin, cout, k, stride, pad, bn=True, relu=True,
                 deconv=False, bias=False):
    kd, kh, kw = k
    n = kd * kh * kw * cout
    shape = (cin, cout, kd, kh, kw) if deconv else (cout, cin, kd, kh, kw)
    kw_, kb_ = jax.random.split(key)
    w = jax.random.normal(kw_, shape, jnp.float32) * math.sqrt(2.0 / n)
    b = (jax.random.normal(kb_, (cout,), jnp.float32)
         / math.sqrt(cin * kd * kh * kw)) if bias else None
    return dict(w=w, bias=b, bn=_make_bn(cout) if bn else None, relu=relu,
                k=k, stride=stride, pad=pad, deconv=deconv)


def conv2d_1x1(key, cin, cout, bn=True, relu=True, bias=False):
    kw_, kb_ = jax.random.split(key)
    n = 1 * 1 * cout
    w = jax.random.normal(kw_, (cout, cin, 1, 1), jnp.float32) * math.sqrt(2.0 / n)
    b = (jax.random.normal(kb_, (cout,), jnp.float32) / math.sqrt(cin)) if bias else None
    return dict(w=w, bias=b, bn=_make_bn(cout) if bn else None, relu=relu)


# ---------------------------------------------------------------------------
# Layer application
# ---------------------------------------------------------------------------
def conv3d_layer(p, x, out_dtype=jnp.bfloat16):
    """Direct Conv3d (+folded BN +LeakyReLU).  x: [N, D, Cin, H, W]."""
    if p["deconv"]:
        return deconv3d_layer(p, x, out_dtype)
    w = p["w"]                                 # [cout, cin, kd, kh, kw]
    cout, cin, kd, kh, kw = w.shape
    sd, sh, sw = p["stride"]
    pd, ph, pw = p["pad"]
    scale, bias = _fold_bn(p["bn"], p["bias"], cout)

    N, D, Cin, H, W = x.shape
    assert Cin == cin
    cin_p = _ru(cin, _CPACK)
    Dp = D + 2 * pd
    Do = (Dp - kd) // sd + 1
    Hp, Wp = H + 2 * ph, W + 2 * pw

    xp = jnp.pad(x.astype(jnp.bfloat16),
                 ((0, 0), (pd, pd), (0, cin_p - cin), (ph, ph), (pw, pw)))

    if sh == 1 and sw == 1:
        # Plain dense taps on one source plane.
        Ho, Wo = Hp - kh + 1, Wp - kw + 1
        Ws, S = Wp, 1
        srcs = xp[:, :, None]                                  # [N, Dp, 1, cin_p, Hp, Wp]
        taps = [(0, b * Ws + c) for b in range(kh) for c in range(kw)]
    else:
        # Stride-2 H/W: parity-decompose the padded input -> dense stride-1 taps.
        assert sh == 2 and sw == 2 and kh == 3 and kw == 3 and ph == 1 and pw == 1
        assert H % 2 == 0 and W % 2 == 0
        Ho, Wo = H // 2, W // 2
        Ws, S = Wp // 2, 4
        srcs = jnp.stack([xp[:, :, :, rh::2, rw::2]
                          for rh in range(2) for rw in range(2)], axis=2)
        taps = []
        for b in range(3):
            for c in range(3):
                s = (b % 2) * 2 + (c % 2)
                taps.append((s * cin_p, (b // 2) * Ws + (c // 2)))

    lo_valid = Ho * Ws
    lo = _ru(lo_valid, _LANE)
    max_col = max(col for _, col in taps)
    ls = _ru(max_col + lo, _LANE)

    srcs = srcs.reshape(N, Dp, S, cin_p, -1)
    assert ls >= srcs.shape[-1]
    srcs = jnp.pad(srcs, ((0, 0),) * 4 + ((0, ls - srcs.shape[-1]),))
    srcs = srcs.reshape(N, Dp, S * cin_p, ls)

    # Weight in K order (kd, kh, kw, cin_p) matching the in-kernel slab order.
    w_k = jnp.transpose(w, (0, 2, 3, 4, 1))
    w_k = jnp.pad(w_k, ((0, 0),) * 4 + ((0, cin_p - cin),))
    w_mat = w_k.reshape(cout, kd * kh * kw * cin_p).astype(jnp.bfloat16)

    out = _conv_core(srcs, w_mat, scale.reshape(cout, 1), bias.reshape(cout, 1),
                     kd=kd, sd=sd, taps=tuple(taps), cin=cin_p, lo=lo,
                     act=p["relu"], do=Do, out_dtype=out_dtype)
    out = out[..., :lo_valid].reshape(N, Do, cout, Ho, Ws)[..., :Wo]
    return out


def deconv3d_layer(p, x, out_dtype=jnp.bfloat16):
    """ConvTranspose3d (4,4,4)/s2/p1 via exact sub-pixel decomposition.

    Output (rh, rw) phases are stacked along M (one matmul per plane); the two
    depth parities are two calls; phase interleave is done on the host.
    """
    assert p["k"] == (4, 4, 4) and p["stride"] == (2, 2, 2) and p["pad"] == (1, 1, 1)
    w_t = p["w"]                                 # [cin, cout, 4, 4, 4]
    cin, cout = w_t.shape[0], w_t.shape[1]
    scale, bias = _fold_bn(p["bn"], p["bias"], cout)
    N, D, Cin, H, W = x.shape
    assert Cin == cin
    cin_p = _ru(cin, _CPACK)

    Hp, Wp = H + 2, W + 2
    Ws, Ho, Wo = Wp, H, W
    lo_valid = Ho * Ws
    lo = _ru(lo_valid, _LANE)
    taps = [(0, b * Ws + c) for b in range(3) for c in range(3)]
    max_col = max(col for _, col in taps)
    ls = _ru(max_col + lo, _LANE)
    K = 2 * 9 * cin_p

    s_col = jnp.tile(scale.reshape(cout, 1), (4, 1))
    b_col = jnp.tile(bias.reshape(cout, 1), (4, 1))
    xb = x.astype(jnp.bfloat16)

    halves = []
    for rd in range(2):                           # output depth parity
        xp = jnp.pad(xb, ((0, 0), (1 - rd, rd), (0, cin_p - cin), (1, 1), (1, 1)))
        xp = xp.reshape(N, D + 1, cin_p, Hp * Wp)
        xp = jnp.pad(xp, ((0, 0), (0, 0), (0, 0), (0, ls - Hp * Wp)))

        # [4 phases, cout] x [2 depth taps, 3x3 union positions, cin_p]; unused taps = 0.
        w_big = jnp.zeros((4, cout, 2, 3, 3, cin_p), jnp.float32)
        for rh in range(2):
            for rw in range(2):
                phase = rh * 2 + rw
                for a in range(2):
                    a_d = 3 - rd - 2 * a
                    for th in range(2):
                        for tw in range(2):
                            blk = jnp.transpose(
                                w_t[:, :, a_d, 3 - rh - 2 * th, 3 - rw - 2 * tw], (1, 0))
                            w_big = w_big.at[phase, :, a, rh + th, rw + tw, :cin].set(blk)
        w_mat = w_big.reshape(4 * cout, K).astype(jnp.bfloat16)

        o = _conv_core(xp, w_mat, s_col, b_col, kd=2, sd=1, taps=tuple(taps),
                       cin=cin_p, lo=lo, act=p["relu"], do=D, out_dtype=out_dtype)
        o = o[..., :lo_valid].reshape(N, D, 4, cout, Ho, Ws)[..., :Wo]
        halves.append(o)

    # TODO(synk): the sub-pixel interleave below is a host XLA pass; could be fused.
    o = jnp.stack(halves, axis=2)                 # [N, D, rd, phase, cout, H, W]
    o = o.reshape(N, D, 2, 2, 2, cout, H, W)      # phase -> (rh, rw)
    o = jnp.transpose(o, (0, 1, 2, 5, 6, 3, 7, 4))  # [N, D, rd, cout, H, rh, W, rw]
    return o.reshape(N, 2 * D, cout, 2 * H, 2 * W)


def conv2d_1x1_layer(p, feat, out_dtype=jnp.bfloat16):
    # feat: [N, Cin, H, W] -> [N, Cout, H, W]   (1x1 conv + folded BN + optional act)
    cout, cin = p["w"].shape[0], p["w"].shape[1]
    q = dict(w=p["w"].reshape(cout, cin, 1, 1, 1), bias=p["bias"], bn=p["bn"],
             relu=p["relu"], stride=(1, 1, 1), pad=(0, 0, 0), deconv=False)
    o = conv3d_layer(q, feat[:, None], out_dtype=out_dtype)
    return o[:, 0]


# ---------------------------------------------------------------------------
# Context_Geometry_Fusion and hourglass_fusion
# ---------------------------------------------------------------------------
def init_cgf(key, cv_chan, im_chan):
    k = jax.random.split(key, 5)
    return dict(
        sem0=conv2d_1x1(k[0], im_chan, im_chan // 2, bn=True, relu=True, bias=False),
        sem1=conv2d_1x1(k[1], im_chan // 2, cv_chan, bn=False, relu=False, bias=True),
        att0=basic_conv3d(k[2], cv_chan, cv_chan, (1, 5, 5), (1, 1, 1), (0, 2, 2)),
        att1=basic_conv3d(k[3], cv_chan, cv_chan, (1, 1, 1), (1, 1, 1), (0, 0, 0),
                          bn=False, relu=False),
        agg=basic_conv3d(k[4], cv_chan, cv_chan, (1, 5, 5), (1, 1, 1), (0, 2, 2)),
    )


def apply_cgf(p, cv, img):
    f = conv2d_1x1_layer(p["sem0"], img)
    f = conv2d_1x1_layer(p["sem1"], f)               # [N, cv_chan, H, W]
    s = _cgf_pointwise(f, cv)                        # feat + cv   (broadcast over D)
    att = conv3d_layer(p["att0"], s)
    att = conv3d_layer(p["att1"], att)
    cv = _cgf_pointwise(f, cv, att=att)              # sigmoid(att)*feat + cv
    return conv3d_layer(p["agg"], cv)


def init_hourglass(key, c):
    ks = iter(jax.random.split(key, 24))
    nk = lambda: next(ks)
    P = {}
    P["conv1"] = [basic_conv3d(nk(), c, 2 * c, (3, 3, 3), (2, 2, 2), (1, 1, 1)),
                  basic_conv3d(nk(), 2 * c, 2 * c, (3, 3, 3), (1, 1, 1), (1, 1, 1))]
    P["conv2"] = [basic_conv3d(nk(), 2 * c, 4 * c, (3, 3, 3), (2, 2, 2), (1, 1, 1)),
                  basic_conv3d(nk(), 4 * c, 4 * c, (3, 3, 3), (1, 1, 1), (1, 1, 1))]
    P["conv3"] = [basic_conv3d(nk(), 4 * c, 6 * c, (3, 3, 3), (2, 2, 2), (1, 1, 1)),
                  basic_conv3d(nk(), 6 * c, 6 * c, (3, 3, 3), (1, 1, 1), (1, 1, 1))]
    P["conv3_up"] = basic_conv3d(nk(), 6 * c, 4 * c, (4, 4, 4), (2, 2, 2), (1, 1, 1),
                                 deconv=True)
    P["conv2_up"] = basic_conv3d(nk(), 4 * c, 2 * c, (4, 4, 4), (2, 2, 2), (1, 1, 1),
                                 deconv=True)
    P["conv1_up"] = basic_conv3d(nk(), 2 * c, 1, (4, 4, 4), (2, 2, 2), (1, 1, 1),
                                 bn=False, relu=False, deconv=True)
    P["agg_0"] = [basic_conv3d(nk(), 8 * c, 4 * c, (1, 1, 1), (1, 1, 1), (0, 0, 0)),
                  basic_conv3d(nk(), 4 * c, 4 * c, (3, 3, 3), (1, 1, 1), (1, 1, 1)),
                  basic_conv3d(nk(), 4 * c, 4 * c, (3, 3, 3), (1, 1, 1), (1, 1, 1))]
    P["agg_1"] = [basic_conv3d(nk(), 4 * c, 2 * c, (1, 1, 1), (1, 1, 1), (0, 0, 0)),
                  basic_conv3d(nk(), 2 * c, 2 * c, (3, 3, 3), (1, 1, 1), (1, 1, 1)),
                  basic_conv3d(nk(), 2 * c, 2 * c, (3, 3, 3), (1, 1, 1), (1, 1, 1))]
    P["CGF_32"] = init_cgf(nk(), 6 * c, 160)
    P["CGF_16"] = init_cgf(nk(), 4 * c, 192)
    P["CGF_8"] = init_cgf(nk(), 2 * c, 64)
    return P


def hourglass_fusion_forward(P, x_ncdhw, imgs_nchw):
    """x_ncdhw: [N,C,D,H,W]; imgs[1..3]: NCHW feature maps (64/192/160 channels)."""
    x = jnp.transpose(x_ncdhw, (0, 2, 1, 3, 4))          # NCDHW -> NDCHW
    img1, img2, img3 = imgs_nchw[1], imgs_nchw[2], imgs_nchw[3]

    conv1 = conv3d_layer(P["conv1"][1], conv3d_layer(P["conv1"][0], x))
    conv2 = conv3d_layer(P["conv2"][1], conv3d_layer(P["conv2"][0], conv1))
    conv3 = conv3d_layer(P["conv3"][1], conv3d_layer(P["conv3"][0], conv2))

    conv3 = apply_cgf(P["CGF_32"], conv3, img3)
    conv3_up = conv3d_layer(P["conv3_up"], conv3)        # bf16 (concat path)

    conv2 = jnp.concatenate([conv3_up, conv2], axis=2)
    for q in P["agg_0"]:
        conv2 = conv3d_layer(q, conv2)
    conv2 = apply_cgf(P["CGF_16"], conv2, img2)
    conv2_up = conv3d_layer(P["conv2_up"], conv2)        # bf16 (concat path)

    conv1 = jnp.concatenate([conv2_up, conv1], axis=2)
    for q in P["agg_1"]:
        conv1 = conv3d_layer(q, conv1)
    conv1 = apply_cgf(P["CGF_8"], conv1, img1)

    conv = conv3d_layer(P["conv1_up"], conv1, out_dtype=jnp.float32)

    to_ncdhw = lambda a: jnp.transpose(a, (0, 2, 1, 3, 4))
    return (to_ncdhw(conv),
            to_ncdhw(conv2_up).astype(jnp.float32),
            to_ncdhw(conv3_up).astype(jnp.float32))


if __name__ == "__main__":
    key = jax.random.PRNGKey(0)
    k_param, k_x, k1, k2, k3 = jax.random.split(key, 5)

    C0 = 8                       # in_channels
    N, D, H, W = 2, 8, 16, 16    # small cost-volume shape
    x = jax.random.normal(k_x, (N, C0, D, H, W), jnp.float32)
    imgs = [
        None,
        jax.random.normal(k1, (N, 64, H // 2, W // 2), jnp.float32),   # imgs[1]
        jax.random.normal(k2, (N, 192, H // 4, W // 4), jnp.float32),  # imgs[2]
        jax.random.normal(k3, (N, 160, H // 8, W // 8), jnp.float32),  # imgs[3]
    ]

    params = init_hourglass(k_param, C0)
    fwd = jax.jit(functools.partial(hourglass_fusion_forward, params))

    conv, conv2_up, conv3_up = fwd(x, imgs)
    jax.block_until_ready((conv, conv2_up, conv3_up))

    assert conv.shape == (N, 1, D, H, W)
    assert conv2_up.shape == (N, 2 * C0, D // 2, H // 2, W // 2)
    assert conv3_up.shape == (N, 4 * C0, D // 4, H // 4, W // 4)
    print("KERNEL_OK")
</pallas_src>

<mosaic_0001>
module attributes {stable_mosaic.version = 11 : i64} {
  func.func @kernel(%arg0: i32, %arg1: i32, %arg2: memref<1x1x64x256xbf16, #tpu.memory_space<vmem>>, %arg3: memref<1x1x64x256xbf16, #tpu.memory_space<vmem>>, %arg4: memref<1x1x64x256xbf16, #tpu.memory_space<vmem>>, %arg5: memref<16x432xbf16, #tpu.memory_space<vmem>>, %arg6: memref<16x1xf32, #tpu.memory_space<vmem>>, %arg7: memref<16x1xf32, #tpu.memory_space<vmem>>, %arg8: memref<1x1x16x128xbf16, #tpu.memory_space<vmem>>) attributes {dimension_semantics = [#tpu.dimension_semantics<parallel>, #tpu.dimension_semantics<parallel>], iteration_bounds = array<i64: 2, 4>, scalar_prefetch = 0 : i64, scratch_operands = 0 : i64, tpu.core_type = #tpu.core_type<tc>, window_params = [{transform_indices = @transform_0, window_bounds = array<i64: 1, 1, 64, 256>}, {transform_indices = @transform_1, window_bounds = array<i64: 1, 1, 64, 256>}, {transform_indices = @transform_2, window_bounds = array<i64: 1, 1, 64, 256>}, {pipeline_mode = #tpu.pipeline_mode<synchronous>, transform_indices = @transform_3, window_bounds = array<i64: 16, 432>}, {pipeline_mode = #tpu.pipeline_mode<synchronous>, transform_indices = @transform_4, window_bounds = array<i64: 16, 1>}, {pipeline_mode = #tpu.pipeline_mode<synchronous>, transform_indices = @transform_5, window_bounds = array<i64: 16, 1>}, {transform_indices = @transform_6, window_bounds = array<i64: 1, 1, 16, 128>}]} {
    %c0 = arith.constant 0 : index
    %c0_0 = arith.constant 0 : index
    %c0_1 = arith.constant 0 : index
    %c0_2 = arith.constant 0 : index
    %0 = vector.load %arg2[%c0, %c0_0, %c0_1, %c0_2] : memref<1x1x64x256xbf16, #tpu.memory_space<vmem>>, vector<1x1x16x128xbf16>
    %1 = vector.shape_cast %0 : vector<1x1x16x128xbf16> to vector<16x128xbf16>
    %c0_3 = arith.constant 0 : index
    %c0_4 = arith.constant 0 : index
    %c16 = arith.constant 16 : index
    %c0_5 = arith.constant 0 : index
    %2 = vector.load %arg2[%c0_3, %c0_4, %c16, %c0_5] : memref<1x1x64x256xbf16, #tpu.memory_space<vmem>>, vector<1x1x16x128xbf16>
    %3 = vector.shape_cast %2 : vector<1x1x16x128xbf16> to vector<16x128xbf16>
    %c0_6 = arith.constant 0 : index
    %c0_7 = arith.constant 0 : index
    %c0_8 = arith.constant 0 : index
    %c1 = arith.constant 1 : index
    %4 = vector.load %arg2[%c0_6, %c0_7, %c0_8, %c1] : memref<1x1x64x256xbf16, #tpu.memory_space<vmem>>, vector<1x1x16x128xbf16>
    %5 = vector.shape_cast %4 : vector<1x1x16x128xbf16> to vector<16x128xbf16>
    %c0_9 = arith.constant 0 : index
    %c0_10 = arith.constant 0 : index
    %c32 = arith.constant 32 : index
    %c0_11 = arith.constant 0 : index
    %6 = vector.load %arg2[%c0_9, %c0_10, %c32, %c0_11] : memref<1x1x64x256xbf16, #tpu.memory_space<vmem>>, vector<1x1x16x128xbf16>
    %7 = vector.shape_cast %6 : vector<1x1x16x128xbf16> to vector<16x128xbf16>
    %c0_12 = arith.constant 0 : index
    %c0_13 = arith.constant 0 : index
    %c48 = arith.constant 48 : index
    %c0_14 = arith.constant 0 : index
    %8 = vector.load %arg2[%c0_12, %c0_13, %c48, %c0_14] : memref<1x1x64x256xbf16, #tpu.memory_space<vmem>>, vector<1x1x16x128xbf16>
    %9 = vector.shape_cast %8 : vector<1x1x16x128xbf16> to vector<16x128xbf16>
    %c0_15 = arith.constant 0 : index
    %c0_16 = arith.constant 0 : index
    %c32_17 = arith.constant 32 : index
    %c1_18 = arith.constant 1 : index
    %10 = vector.load %arg2[%c0_15, %c0_16, %c32_17, %c1_18] : memref<1x1x64x256xbf16, #tpu.memory_space<vmem>>, vector<1x1x16x128xbf16>
    %11 = vector.shape_cast %10 : vector<1x1x16x128xbf16> to vector<16x128xbf16>
    %c0_19 = arith.constant 0 : index
    %c0_20 = arith.constant 0 : index
    %c0_21 = arith.constant 0 : index
    %c9 = arith.constant 9 : index
    %12 = vector.load %arg2[%c0_19, %c0_20, %c0_21, %c9] : memref<1x1x64x256xbf16, #tpu.memory_space<vmem>>, vector<1x1x16x128xbf16>
    %13 = vector.shape_cast %12 : vector<1x1x16x128xbf16> to vector<16x128xbf16>
    %c0_22 = arith.constant 0 : index
    %c0_23 = arith.constant 0 : index
    %c16_24 = arith.constant 16 : index
    %c9_25 = arith.constant 9 : index
    %14 = vector.load %arg2[%c0_22, %c0_23, %c16_24, %c9_25] : memref<1x1x64x256xbf16, #tpu.memory_space<vmem>>, vector<1x1x16x128xbf16>
    %15 = vector.shape_cast %14 : vector<1x1x16x128xbf16> to vector<16x128xbf16>
    %c0_26 = arith.constant 0 : index
    %c0_27 = arith.constant 0 : index
    %c0_28 = arith.constant 0 : index
    %c10 = arith.constant 10 : index
    %16 = vector.load %arg2[%c0_26, %c0_27, %c0_28, %c10] : memref<1x1x64x256xbf16, #tpu.memory_space<vmem>>, vector<1x1x16x128xbf16>
    %17 = vector.shape_cast %16 : vector<1x1x16x128xbf16> to vector<16x128xbf16>
    %c0_29 = arith.constant 0 : index
    %c0_30 = arith.constant 0 : index
    %c0_31 = arith.constant 0 : index
    %c0_32 = arith.constant 0 : index
    %18 = vector.load %arg3[%c0_29, %c0_30, %c0_31, %c0_32] : memref<1x1x64x256xbf16, #tpu.memory_space<vmem>>, vector<1x1x16x128xbf16>
    %19 = vector.shape_cast %18 : vector<1x1x16x128xbf16> to vector<16x128xbf16>
    %c0_33 = arith.constant 0 : index
    %c0_34 = arith.constant 0 : index
    %c16_35 = arith.constant 16 : index
    %c0_36 = arith.constant 0 : index
    %20 = vector.load %arg3[%c0_33, %c0_34, %c16_35, %c0_36] : memref<1x1x64x256xbf16, #tpu.memory_space<vmem>>, vector<1x1x16x128xbf16>
    %21 = vector.shape_cast %20 : vector<1x1x16x128xbf16> to vector<16x128xbf16>
    %c0_37 = arith.constant 0 : index
    %c0_38 = arith.constant 0 : index
    %c0_39 = arith.constant 0 : index
    %c1_40 = arith.constant 1 : index
    %22 = vector.load %arg3[%c0_37, %c0_38, %c0_39, %c1_40] : memref<1x1x64x256xbf16, #tpu.memory_space<vmem>>, vector<1x1x16x128xbf16>
    %23 = vector.shape_cast %22 : vector<1x1x16x128xbf16> to vector<16x128xbf16>
    %c0_41 = arith.constant 0 : index
    %c0_42 = arith.constant 0 : index
    %c32_43 = arith.constant 32 : index
    %c0_44 = arith.constant 0 : index
    %24 = vector.load %arg3[%c0_41, %c0_42, %c32_43, %c0_44] : memref<1x1x64x256xbf16, #tpu.memory_space<vmem>>, vector<1x1x16x128xbf16>
    %25 = vector.shape_cast %24 : vector<1x1x16x128xbf16> to vector<16x128xbf16>
    %c0_45 = arith.constant 0 : index
    %c0_46 = arith.constant 0 : index
    %c48_47 = arith.constant 48 : index
    %c0_48 = arith.constant 0 : index
    %26 = vector.load %arg3[%c0_45, %c0_46, %c48_47, %c0_48] : memref<1x1x64x256xbf16, #tpu.memory_space<vmem>>, vector<1x1x16x128xbf16>
    %27 = vector.shape_cast %26 : vector<1x1x16x128xbf16> to vector<16x128xbf16>
    %c0_49 = arith.constant 0 : index
    %c0_50 = arith.constant 0 : index
    %c32_51 = arith.constant 32 : index
    %c1_52 = arith.constant 1 : index
    %28 = vector.load %arg3[%c0_49, %c0_50, %c32_51, %c1_52] : memref<1x1x64x256xbf16, #tpu.memory_space<vmem>>, vector<1x1x16x128xbf16>
    %29 = vector.shape_cast %28 : vector<1x1x16x128xbf16> to vector<16x128xbf16>
    %c0_53 = arith.constant 0 : index
    %c0_54 = arith.constant 0 : index
    %c0_55 = arith.constant 0 : index
    %c9_56 = arith.constant 9 : index
    %30 = vector.load %arg3[%c0_53, %c0_54, %c0_55, %c9_56] : memref<1x1x64x256xbf16, #tpu.memory_space<vmem>>, vector<1x1x16x128xbf16>
    %31 = vector.shape_cast %30 : vector<1x1x16x128xbf16> to vector<16x128xbf16>
    %c0_57 = arith.constant 0 : index
    %c0_58 = arith.constant 0 : index
    %c16_59 = arith.constant 16 : index
    %c9_60 = arith.constant 9 : index
    %32 = vector.load %arg3[%c0_57, %c0_58, %c16_59, %c9_60] : memref<1x1x64x256xbf16, #tpu.memory_space<vmem>>, vector<1x1x16x128xbf16>
    %33 = vector.shape_cast %32 : vector<1x1x16x128xbf16> to vector<16x128xbf16>
    %c0_61 = arith.constant 0 : index
    %c0_62 = arith.constant 0 : index
    %c0_63 = arith.constant 0 : index
    %c10_64 = arith.constant 10 : index
    %34 = vector.load %arg3[%c0_61, %c0_62, %c0_63, %c10_64] : memref<1x1x64x256xbf16, #tpu.memory_space<vmem>>, vector<1x1x16x128xbf16>
    %35 = vector.shape_cast %34 : vector<1x1x16x128xbf16> to vector<16x128xbf16>
    %c0_65 = arith.constant 0 : index
    %c0_66 = arith.constant 0 : index
    %c0_67 = arith.constant 0 : index
    %c0_68 = arith.constant 0 : index
    %36 = vector.load %arg4[%c0_65, %c0_66, %c0_67, %c0_68] : memref<1x1x64x256xbf16, #tpu.memory_space<vmem>>, vector<1x1x16x128xbf16>
    %37 = vector.shape_cast %36 : vector<1x1x16x128xbf16> to vector<16x128xbf16>
    %c0_69 = arith.constant 0 : index
    %c0_70 = arith.constant 0 : index
    %c16_71 = arith.constant 16 : index
    %c0_72 = arith.constant 0 : index
    %38 = vector.load %arg4[%c0_69, %c0_70, %c16_71, %c0_72] : memref<1x1x64x256xbf16, #tpu.memory_space<vmem>>, vector<1x1x16x128xbf16>
    %39 = vector.shape_cast %38 : vector<1x1x16x128xbf16> to vector<16x128xbf16>
    %c0_73 = arith.constant 0 : index
    %c0_74 = arith.constant 0 : index
    %c0_75 = arith.constant 0 : index
    %c1_76 = arith.constant 1 : index
    %40 = vector.load %arg4[%c0_73, %c0_74, %c0_75, %c1_76] : memref<1x1x64x256xbf16, #tpu.memory_space<vmem>>, vector<1x1x16x128xbf16>
    %41 = vector.shape_cast %40 : vector<1x1x16x128xbf16> to vector<16x128xbf16>
    %c0_77 = arith.constant 0 : index
    %c0_78 = arith.constant 0 : index
    %c32_79 = arith.constant 32 : index
    %c0_80 = arith.constant 0 : index
    %42 = vector.load %arg4[%c0_77, %c0_78, %c32_79, %c0_80] : memref<1x1x64x256xbf16, #tpu.memory_space<vmem>>, vector<1x1x16x128xbf16>
    %43 = vector.shape_cast %42 : vector<1x1x16x128xbf16> to vector<16x128xbf16>
    %c0_81 = arith.constant 0 : index
    %c0_82 = arith.constant 0 : index
    %c48_83 = arith.constant 48 : index
    %c0_84 = arith.constant 0 : index
    %44 = vector.load %arg4[%c0_81, %c0_82, %c48_83, %c0_84] : memref<1x1x64x256xbf16, #tpu.memory_space<vmem>>, vector<1x1x16x128xbf16>
    %45 = vector.shape_cast %44 : vector<1x1x16x128xbf16> to vector<16x128xbf16>
    %c0_85 = arith.constant 0 : index
    %c0_86 = arith.constant 0 : index
    %c32_87 = arith.constant 32 : index
    %c1_88 = arith.constant 1 : index
    %46 = vector.load %arg4[%c0_85, %c0_86, %c32_87, %c1_88] : memref<1x1x64x256xbf16, #tpu.memory_space<vmem>>, vector<1x1x16x128xbf16>
    %47 = vector.shape_cast %46 : vector<1x1x16x128xbf16> to vector<16x128xbf16>
    %c0_89 = arith.constant 0 : index
    %c0_90 = arith.constant 0 : index
    %c0_91 = arith.constant 0 : index
    %c9_92 = arith.constant 9 : index
    %48 = vector.load %arg4[%c0_89, %c0_90, %c0_91, %c9_92] : memref<1x1x64x256xbf16, #tpu.memory_space<vmem>>, vector<1x1x16x128xbf16>
    %49 = vector.shape_cast %48 : vector<1x1x16x128xbf16> to vector<16x128xbf16>
    %c0_93 = arith.constant 0 : index
    %c0_94 = arith.constant 0 : index
    %c16_95 = arith.constant 16 : index
    %c9_96 = arith.constant 9 : index
    %50 = vector.load %arg4[%c0_93, %c0_94, %c16_95, %c9_96] : memref<1x1x64x256xbf16, #tpu.memory_space<vmem>>, vector<1x1x16x128xbf16>
    %51 = vector.shape_cast %50 : vector<1x1x16x128xbf16> to vector<16x128xbf16>
    %c0_97 = arith.constant 0 : index
    %c0_98 = arith.constant 0 : index
    %c0_99 = arith.constant 0 : index
    %c10_100 = arith.constant 10 : index
    %52 = vector.load %arg4[%c0_97, %c0_98, %c0_99, %c10_100] : memref<1x1x64x256xbf16, #tpu.memory_space<vmem>>, vector<1x1x16x128xbf16>
    %53 = vector.shape_cast %52 : vector<1x1x16x128xbf16> to vector<16x128xbf16>
    %54 = tpu.concatenate %1, %3, %5, %7, %9, %11, %13, %15, %17, %19, %21, %23, %25, %27, %29, %31 in 0 : vector<16x128xbf16>, vector<16x128xbf16>, vector<16x128xbf16>, vector<16x128xbf16>, vector<16x128xbf16>, vector<16x128xbf16>, vector<16x128xbf16>, vector<16x128xbf16>, vector<16x128xbf16>, vector<16x128xbf16>, vector<16x128xbf16>, vector<16x128xbf16>, vector<16x128xbf16>, vector<16x128xbf16>, vector<16x128xbf16>, vector<16x128xbf16> -> vector<256x128xbf16>
    %55 = tpu.concatenate %33, %35, %37, %39, %41, %43, %45, %47, %49, %51, %53 in 0 : vector<16x128xbf16>, vector<16x128xbf16>, vector<16x128xbf16>, vector<16x128xbf16>, vector<16x128xbf16>, vector<16x128xbf16>, vector<16x128xbf16>, vector<16x128xbf16>, vector<16x128xbf16>, vector<16x128xbf16>, vector<16x128xbf16> -> vector<176x128xbf16>
    %56 = tpu.concatenate %54, %55 in 0 : vector<256x128xbf16>, vector<176x128xbf16> -> vector<432x128xbf16>
    %c0_101 = arith.constant 0 : index
    %c0_102 = arith.constant 0 : index
    %57 = vector.load %arg5[%c0_101, %c0_102] : memref<16x432xbf16, #tpu.memory_space<vmem>>, vector<16x432xbf16>
    %cst = arith.constant dense<0.000000e+00> : vector<16x128xf32>
    %58 = tpu.matmul %57, %56, %cst {dimension_numbers = #tpu.dot_dimension_numbers<[1], [0], [0], [1], [0, 0, 1, 1], [], []>} : vector<16x432xbf16>, vector<432x128xbf16>, vector<16x128xf32> -> vector<16x128xf32>
    %c0_103 = arith.constant 0 : index
    %c0_104 = arith.constant 0 : index
    %59 = vector.load %arg6[%c0_103, %c0_104] : memref<16x1xf32, #tpu.memory_space<vmem>>, vector<16x1xf32>
    %60 = vector.broadcast %59 : vector<16x1xf32> to vector<16x128xf32>
    %61 = arith.mulf %58, %60 : vector<16x128xf32>
    %c0_105 = arith.constant 0 : index
    %c0_106 = arith.constant 0 : index
    %62 = vector.load %arg7[%c0_105, %c0_106] : memref<16x1xf32, #tpu.memory_space<vmem>>, vector<16x1xf32>
    %63 = vector.broadcast %62 : vector<16x1xf32> to vector<16x128xf32>
    %64 = arith.addf %61, %63 : vector<16x128xf32>
    %cst_107 = arith.constant 0.000000e+00 : f32
    %65 = vector.broadcast %cst_107 : f32 to vector<16x128xf32>
    %66 = arith.cmpf oge, %64, %65 : vector<16x128xf32>
    %cst_108 = arith.constant 0.00999999977 : f32
    %67 = vector.broadcast %cst_108 : f32 to vector<16x128xf32>
    %68 = arith.mulf %67, %64 : vector<16x128xf32>
    %69 = arith.select %66, %64, %68 : vector<16x128xi1>, vector<16x128xf32>
    %70 = arith.truncf %69 : vector<16x128xf32> to vector<16x128xbf16>
    %c0_109 = arith.constant 0 : index
    %c0_110 = arith.constant 0 : index
    %c0_111 = arith.constant 0 : index
    %c0_112 = arith.constant 0 : index
    %71 = vector.load %arg8[%c0_109, %c0_110, %c0_111, %c0_112] : memref<1x1x16x128xbf16, #tpu.memory_space<vmem>>, vector<1x1x16x128xbf16>
    %72 = vector.shape_cast %71 : vector<1x1x16x128xbf16> to vector<16x128xbf16>
    %73 = vector.shape_cast %70 : vector<16x128xbf16> to vector<1x1x16x128xbf16>
    tpu.vector_store %arg8[%c0_109, %c0_110, %c0_111, %c0_112], %73 {strides = array<i32>} : memref<1x1x16x128xbf16, #tpu.memory_space<vmem>>, vector<1x1x16x128xbf16>,
    return
  }
  func.func @transform_0(%arg0: i32, %arg1: i32) -> (i32, i32, i32, i32) {
    %c2_i32 = arith.constant 2 : i32
    %0 = arith.muli %arg1, %c2_i32 : i32
    %c0_i32 = arith.constant 0 : i32
    %1 = arith.addi %0, %c0_i32 : i32
    %c0_i32_0 = arith.constant 0 : i32
    %c0_i32_1 = arith.constant 0 : i32
    %c0_i32_2 = arith.constant 0 : i32
    return %arg0, %1, %c0_i32_0, %c0_i32_1 : i32, i32, i32, i32
  }
  func.func @transform_1(%arg0: i32, %arg1: i32) -> (i32, i32, i32, i32) {
    %c2_i32 = arith.constant 2 : i32
    %0 = arith.muli %arg1, %c2_i32 : i32
    %c1_i32 = arith.constant 1 : i32
    %1 = arith.addi %0, %c1_i32 : i32
    %c0_i32 = arith.constant 0 : i32
    %c0_i32_0 = arith.constant 0 : i32
    %c0_i32_1 = arith.constant 0 : i32
    return %arg0, %1, %c0_i32, %c0_i32_0 : i32, i32, i32, i32
  }
  func.func @transform_2(%arg0: i32, %arg1: i32) -> (i32, i32, i32, i32) {
    %c2_i32 = arith.constant 2 : i32
    %0 = arith.muli %arg1, %c2_i32 : i32
    %c2_i32_0 = arith.constant 2 : i32
    %1 = arith.addi %0, %c2_i32_0 : i32
    %c0_i32 = arith.constant 0 : i32
    %c0_i32_1 = arith.constant 0 : i32
    %c0_i32_2 = arith.constant 0 : i32
    return %arg0, %1, %c0_i32, %c0_i32_1 : i32, i32, i32, i32
  }
  func.func @transform_3(%arg0: i32, %arg1: i32) -> (i32, i32) {
    %c0_i32 = arith.constant 0 : i32
    %c0_i32_0 = arith.constant 0 : i32
    %c0_i32_1 = arith.constant 0 : i32
    return %c0_i32, %c0_i32_0 : i32, i32
  }
  func.func @transform_4(%arg0: i32, %arg1: i32) -> (i32, i32) {
    %c0_i32 = arith.constant 0 : i32
    %c0_i32_0 = arith.constant 0 : i32
    %c0_i32_1 = arith.constant 0 : i32
    return %c0_i32, %c0_i32_0 : i32, i32
  }
  func.func @transform_5(%arg0: i32, %arg1: i32) -> (i32, i32) {
    %c0_i32 = arith.constant 0 : i32
    %c0_i32_0 = arith.constant 0 : i32
    %c0_i32_1 = arith.constant 0 : i32
    return %c0_i32, %c0_i32_0 : i32, i32
  }
  func.func @transform_6(%arg0: i32, %arg1: i32) -> (i32, i32, i32, i32) {
    %c0_i32 = arith.constant 0 : i32
    %c0_i32_0 = arith.constant 0 : i32
    %c0_i32_1 = arith.constant 0 : i32
    return %arg0, %arg1, %c0_i32, %c0_i32_0 : i32, i32, i32, i32
  }
}

module attributes {stable_mosaic.version = 11 : i64} {
  func.func @kernel(%arg0: i32, %arg1: i32, %arg2: memref<1x1x16x256xbf16, #tpu.memory_space<vmem>>, %arg3: memref<1x1x16x256xbf16, #tpu.memory_space<vmem>>, %arg4: memref<1x1x16x256xbf16, #tpu.memory_space<vmem>>, %arg5: memref<16x432xbf16, #tpu.memory_space<vmem>>, %arg6: memref<16x1xf32, #tpu.memory_space<vmem>>, %arg7: memref<16x1xf32, #tpu.memory_space<vmem>>, %arg8: memref<1x1x16x128xbf16, #tpu.memory_space<vmem>>) attributes {dimension_semantics = [#tpu.dimension_semantics<parallel>, #tpu.dimension_semantics<parallel>], iteration_bounds = array<i64: 2, 4>, scalar_prefetch = 0 : i64, scratch_operands = 0 : i64, tpu.core_type = #tpu.core_type<tc>, window_params = [{transform_indices = @transform_0, window_bounds = array<i64: 1, 1, 16, 256>}, {transform_indices = @transform_1, window_bounds = array<i64: 1, 1, 16, 256>}, {transform_indices = @transform_2, window_bounds = array<i64: 1, 1, 16, 256>}, {pipeline_mode = #tpu.pipeline_mode<synchronous>, transform_indices = @transform_3, window_bounds = array<i64: 16, 432>}, {pipeline_mode = #tpu.pipeline_mode<synchronous>, transform_indices = @transform_4, window_bounds = array<i64: 16, 1>}, {pipeline_mode = #tpu.pipeline_mode<synchronous>, transform_indices = @transform_5, window_bounds = array<i64: 16, 1>}, {transform_indices = @transform_6, window_bounds = array<i64: 1, 1, 16, 128>}]} {
    %c0 = arith.constant 0 : index
    %c0_0 = arith.constant 0 : index
    %c0_1 = arith.constant 0 : index
    %c0_2 = arith.constant 0 : index
    %0 = vector.load %arg2[%c0, %c0_0, %c0_1, %c0_2] : memref<1x1x16x256xbf16, #tpu.memory_space<vmem>>, vector<1x1x16x128xbf16>
    %1 = vector.shape_cast %0 : vector<1x1x16x128xbf16> to vector<16x128xbf16>
    %c0_3 = arith.constant 0 : index
    %c0_4 = arith.constant 0 : index
    %c0_5 = arith.constant 0 : index
    %c1 = arith.constant 1 : index
    %2 = vector.load %arg2[%c0_3, %c0_4, %c0_5, %c1] : memref<1x1x16x256xbf16, #tpu.memory_space<vmem>>, vector<1x1x16x128xbf16>
    %3 = vector.shape_cast %2 : vector<1x1x16x128xbf16> to vector<16x128xbf16>
    %c0_6 = arith.constant 0 : index
    %c0_7 = arith.constant 0 : index
    %c0_8 = arith.constant 0 : index
    %c2 = arith.constant 2 : index
    %4 = vector.load %arg2[%c0_6, %c0_7, %c0_8, %c2] : memref<1x1x16x256xbf16, #tpu.memory_space<vmem>>, vector<1x1x16x128xbf16>
    %5 = vector.shape_cast %4 : vector<1x1x16x128xbf16> to vector<16x128xbf16>
    %c0_9 = arith.constant 0 : index
    %c0_10 = arith.constant 0 : index
    %c0_11 = arith.constant 0 : index
    %c10 = arith.constant 10 : index
    %6 = vector.load %arg2[%c0_9, %c0_10, %c0_11, %c10] : memref<1x1x16x256xbf16, #tpu.memory_space<vmem>>, vector<1x1x16x128xbf16>
    %7 = vector.shape_cast %6 : vector<1x1x16x128xbf16> to vector<16x128xbf16>
    %c0_12 = arith.constant 0 : index
    %c0_13 = arith.constant 0 : index
    %c0_14 = arith.constant 0 : index
    %c11 = arith.constant 11 : index
    %8 = vector.load %arg2[%c0_12, %c0_13, %c0_14, %c11] : memref<1x1x16x256xbf16, #tpu.memory_space<vmem>>, vector<1x1x16x128xbf16>
    %9 = vector.shape_cast %8 : vector<1x1x16x128xbf16> to vector<16x128xbf16>
    %c0_15 = arith.constant 0 : index
    %c0_16 = arith.constant 0 : index
    %c0_17 = arith.constant 0 : index
    %c12 = arith.constant 12 : index
    %10 = vector.load %arg2[%c0_15, %c0_16, %c0_17, %c12] : memref<1x1x16x256xbf16, #tpu.memory_space<vmem>>, vector<1x1x16x128xbf16>
    %11 = vector.shape_cast %10 : vector<1x1x16x128xbf16> to vector<16x128xbf16>
    %c0_18 = arith.constant 0 : index
    %c0_19 = arith.constant 0 : index
    %c0_20 = arith.constant 0 : index
    %c20 = arith.constant 20 : index
    %12 = vector.load %arg2[%c0_18, %c0_19, %c0_20, %c20] : memref<1x1x16x256xbf16, #tpu.memory_space<vmem>>, vector<1x1x16x128xbf16>
    %13 = vector.shape_cast %12 : vector<1x1x16x128xbf16> to vector<16x128xbf16>
    %c0_21 = arith.constant 0 : index
    %c0_22 = arith.constant 0 : index
    %c0_23 = arith.constant 0 : index
    %c21 = arith.constant 21 : index
    %14 = vector.load %arg2[%c0_21, %c0_22, %c0_23, %c21] : memref<1x1x16x256xbf16, #tpu.memory_space<vmem>>, vector<1x1x16x128xbf16>
    %15 = vector.shape_cast %14 : vector<1x1x16x128xbf16> to vector<16x128xbf16>
    %c0_24 = arith.constant 0 : index
    %c0_25 = arith.constant 0 : index
    %c0_26 = arith.constant 0 : index
    %c22 = arith.constant 22 : index
    %16 = vector.load %arg2[%c0_24, %c0_25, %c0_26, %c22] : memref<1x1x16x256xbf16, #tpu.memory_space<vmem>>, vector<1x1x16x128xbf16>
    %17 = vector.shape_cast %16 : vector<1x1x16x128xbf16> to vector<16x128xbf16>
    %c0_27 = arith.constant 0 : index
    %c0_28 = arith.constant 0 : index
    %c0_29 = arith.constant 0 : index
    %c0_30 = arith.constant 0 : index
    %18 = vector.load %arg3[%c0_27, %c0_28, %c0_29, %c0_30] : memref<1x1x16x256xbf16, #tpu.memory_space<vmem>>, vector<1x1x16x128xbf16>
    %19 = vector.shape_cast %18 : vector<1x1x16x128xbf16> to vector<16x128xbf16>
    %c0_31 = arith.constant 0 : index
    %c0_32 = arith.constant 0 : index
    %c0_33 = arith.constant 0 : index
    %c1_34 = arith.constant 1 : index
    %20 = vector.load %arg3[%c0_31, %c0_32, %c0_33, %c1_34] : memref<1x1x16x256xbf16, #tpu.memory_space<vmem>>, vector<1x1x16x128xbf16>
    %21 = vector.shape_cast %20 : vector<1x1x16x128xbf16> to vector<16x128xbf16>
    %c0_35 = arith.constant 0 : index
    %c0_36 = arith.constant 0 : index
    %c0_37 = arith.constant 0 : index
    %c2_38 = arith.constant 2 : index
    %22 = vector.load %arg3[%c0_35, %c0_36, %c0_37, %c2_38] : memref<1x1x16x256xbf16, #tpu.memory_space<vmem>>, vector<1x1x16x128xbf16>
    %23 = vector.shape_cast %22 : vector<1x1x16x128xbf16> to vector<16x128xbf16>
    %c0_39 = arith.constant 0 : index
    %c0_40 = arith.constant 0 : index
    %c0_41 = arith.constant 0 : index
    %c10_42 = arith.constant 10 : index
    %24 = vector.load %arg3[%c0_39, %c0_40, %c0_41, %c10_42] : memref<1x1x16x256xbf16, #tpu.memory_space<vmem>>, vector<1x1x16x128xbf16>
    %25 = vector.shape_cast %24 : vector<1x1x16x128xbf16> to vector<16x128xbf16>
    %c0_43 = arith.constant 0 : index
    %c0_44 = arith.constant 0 : index
    %c0_45 = arith.constant 0 : index
    %c11_46 = arith.constant 11 : index
    %26 = vector.load %arg3[%c0_43, %c0_44, %c0_45, %c11_46] : memref<1x1x16x256xbf16, #tpu.memory_space<vmem>>, vector<1x1x16x128xbf16>
    %27 = vector.shape_cast %26 : vector<1x1x16x128xbf16> to vector<16x128xbf16>
    %c0_47 = arith.constant 0 : index
    %c0_48 = arith.constant 0 : index
    %c0_49 = arith.constant 0 : index
    %c12_50 = arith.constant 12 : index
    %28 = vector.load %arg3[%c0_47, %c0_48, %c0_49, %c12_50] : memref<1x1x16x256xbf16, #tpu.memory_space<vmem>>, vector<1x1x16x128xbf16>
    %29 = vector.shape_cast %28 : vector<1x1x16x128xbf16> to vector<16x128xbf16>
    %c0_51 = arith.constant 0 : index
    %c0_52 = arith.constant 0 : index
    %c0_53 = arith.constant 0 : index
    %c20_54 = arith.constant 20 : index
    %30 = vector.load %arg3[%c0_51, %c0_52, %c0_53, %c20_54] : memref<1x1x16x256xbf16, #tpu.memory_space<vmem>>, vector<1x1x16x128xbf16>
    %31 = vector.shape_cast %30 : vector<1x1x16x128xbf16> to vector<16x128xbf16>
    %c0_55 = arith.constant 0 : index
    %c0_56 = arith.constant 0 : index
    %c0_57 = arith.constant 0 : index
    %c21_58 = arith.constant 21 : index
    %32 = vector.load %arg3[%c0_55, %c0_56, %c0_57, %c21_58] : memref<1x1x16x256xbf16, #tpu.memory_space<vmem>>, vector<1x1x16x128xbf16>
    %33 = vector.shape_cast %32 : vector<1x1x16x128xbf16> to vector<16x128xbf16>
    %c0_59 = arith.constant 0 : index
    %c0_60 = arith.constant 0 : index
    %c0_61 = arith.constant 0 : index
    %c22_62 = arith.constant 22 : index
    %34 = vector.load %arg3[%c0_59, %c0_60, %c0_61, %c22_62] : memref<1x1x16x256xbf16, #tpu.memory_space<vmem>>, vector<1x1x16x128xbf16>
    %35 = vector.shape_cast %34 : vector<1x1x16x128xbf16> to vector<16x128xbf16>
    %c0_63 = arith.constant 0 : index
    %c0_64 = arith.constant 0 : index
    %c0_65 = arith.constant 0 : index
    %c0_66 = arith.constant 0 : index
    %36 = vector.load %arg4[%c0_63, %c0_64, %c0_65, %c0_66] : memref<1x1x16x256xbf16, #tpu.memory_space<vmem>>, vector<1x1x16x128xbf16>
    %37 = vector.shape_cast %36 : vector<1x1x16x128xbf16> to vector<16x128xbf16>
    %c0_67 = arith.constant 0 : index
    %c0_68 = arith.constant 0 : index
    %c0_69 = arith.constant 0 : index
    %c1_70 = arith.constant 1 : index
    %38 = vector.load %arg4[%c0_67, %c0_68, %c0_69, %c1_70] : memref<1x1x16x256xbf16, #tpu.memory_space<vmem>>, vector<1x1x16x128xbf16>
    %39 = vector.shape_cast %38 : vector<1x1x16x128xbf16> to vector<16x128xbf16>
    %c0_71 = arith.constant 0 : index
    %c0_72 = arith.constant 0 : index
    %c0_73 = arith.constant 0 : index
    %c2_74 = arith.constant 2 : index
    %40 = vector.load %arg4[%c0_71, %c0_72, %c0_73, %c2_74] : memref<1x1x16x256xbf16, #tpu.memory_space<vmem>>, vector<1x1x16x128xbf16>
    %41 = vector.shape_cast %40 : vector<1x1x16x128xbf16> to vector<16x128xbf16>
    %c0_75 = arith.constant 0 : index
    %c0_76 = arith.constant 0 : index
    %c0_77 = arith.constant 0 : index
    %c10_78 = arith.constant 10 : index
    %42 = vector.load %arg4[%c0_75, %c0_76, %c0_77, %c10_78] : memref<1x1x16x256xbf16, #tpu.memory_space<vmem>>, vector<1x1x16x128xbf16>
    %43 = vector.shape_cast %42 : vector<1x1x16x128xbf16> to vector<16x128xbf16>
    %c0_79 = arith.constant 0 : index
    %c0_80 = arith.constant 0 : index
    %c0_81 = arith.constant 0 : index
    %c11_82 = arith.constant 11 : index
    %44 = vector.load %arg4[%c0_79, %c0_80, %c0_81, %c11_82] : memref<1x1x16x256xbf16, #tpu.memory_space<vmem>>, vector<1x1x16x128xbf16>
    %45 = vector.shape_cast %44 : vector<1x1x16x128xbf16> to vector<16x128xbf16>
    %c0_83 = arith.constant 0 : index
    %c0_84 = arith.constant 0 : index
    %c0_85 = arith.constant 0 : index
    %c12_86 = arith.constant 12 : index
    %46 = vector.load %arg4[%c0_83, %c0_84, %c0_85, %c12_86] : memref<1x1x16x256xbf16, #tpu.memory_space<vmem>>, vector<1x1x16x128xbf16>
    %47 = vector.shape_cast %46 : vector<1x1x16x128xbf16> to vector<16x128xbf16>
    %c0_87 = arith.constant 0 : index
    %c0_88 = arith.constant 0 : index
    %c0_89 = arith.constant 0 : index
    %c20_90 = arith.constant 20 : index
    %48 = vector.load %arg4[%c0_87, %c0_88, %c0_89, %c20_90] : memref<1x1x16x256xbf16, #tpu.memory_space<vmem>>, vector<1x1x16x128xbf16>
    %49 = vector.shape_cast %48 : vector<1x1x16x128xbf16> to vector<16x128xbf16>
    %c0_91 = arith.constant 0 : index
    %c0_92 = arith.constant 0 : index
    %c0_93 = arith.constant 0 : index
    %c21_94 = arith.constant 21 : index
    %50 = vector.load %arg4[%c0_91, %c0_92, %c0_93, %c21_94] : memref<1x1x16x256xbf16, #tpu.memory_space<vmem>>, vector<1x1x16x128xbf16>
    %51 = vector.shape_cast %50 : vector<1x1x16x128xbf16> to vector<16x128xbf16>
    %c0_95 = arith.constant 0 : index
    %c0_96 = arith.constant 0 : index
    %c0_97 = arith.constant 0 : index
    %c22_98 = arith.constant 22 : index
    %52 = vector.load %arg4[%c0_95, %c0_96, %c0_97, %c22_98] : memref<1x1x16x256xbf16, #tpu.memory_space<vmem>>, vector<1x1x16x128xbf16>
    %53 = vector.shape_cast %52 : vector<1x1x16x128xbf16> to vector<16x128xbf16>
    %54 = tpu.concatenate %1, %3, %5, %7, %9, %11, %13, %15, %17, %19, %21, %23, %25, %27, %29, %31 in 0 : vector<16x128xbf16>, vector<16x128xbf16>, vector<16x128xbf16>, vector<16x128xbf16>, vector<16x128xbf16>, vector<16x128xbf16>, vector<16x128xbf16>, vector<16x128xbf16>, vector<16x128xbf16>, vector<16x128xbf16>, vector<16x128xbf16>, vector<16x128xbf16>, vector<16x128xbf16>, vector<16x128xbf16>, vector<16x128xbf16>, vector<16x128xbf16> -> vector<256x128xbf16>
    %55 = tpu.concatenate %33, %35, %37, %39, %41, %43, %45, %47, %49, %51, %53 in 0 : vector<16x128xbf16>, vector<16x128xbf16>, vector<16x128xbf16>, vector<16x128xbf16>, vector<16x128xbf16>, vector<16x128xbf16>, vector<16x128xbf16>, vector<16x128xbf16>, vector<16x128xbf16>, vector<16x128xbf16>, vector<16x128xbf16> -> vector<176x128xbf16>
    %56 = tpu.concatenate %54, %55 in 0 : vector<256x128xbf16>, vector<176x128xbf16> -> vector<432x128xbf16>
    %c0_99 = arith.constant 0 : index
    %c0_100 = arith.constant 0 : index
    %57 = vector.load %arg5[%c0_99, %c0_100] : memref<16x432xbf16, #tpu.memory_space<vmem>>, vector<16x432xbf16>
    %cst = arith.constant dense<0.000000e+00> : vector<16x128xf32>
    %58 = tpu.matmul %57, %56, %cst {dimension_numbers = #tpu.dot_dimension_numbers<[1], [0], [0], [1], [0, 0, 1, 1], [], []>} : vector<16x432xbf16>, vector<432x128xbf16>, vector<16x128xf32> -> vector<16x128xf32>
    %c0_101 = arith.constant 0 : index
    %c0_102 = arith.constant 0 : index
    %59 = vector.load %arg6[%c0_101, %c0_102] : memref<16x1xf32, #tpu.memory_space<vmem>>, vector<16x1xf32>
    %60 = vector.broadcast %59 : vector<16x1xf32> to vector<16x128xf32>
    %61 = arith.mulf %58, %60 : vector<16x128xf32>
    %c0_103 = arith.constant 0 : index
    %c0_104 = arith.constant 0 : index
    %62 = vector.load %arg7[%c0_103, %c0_104] : memref<16x1xf32, #tpu.memory_space<vmem>>, vector<16x1xf32>
    %63 = vector.broadcast %62 : vector<16x1xf32> to vector<16x128xf32>
    %64 = arith.addf %61, %63 : vector<16x128xf32>
    %cst_105 = arith.constant 0.000000e+00 : f32
    %65 = vector.broadcast %cst_105 : f32 to vector<16x128xf32>
    %66 = arith.cmpf oge, %64, %65 : vector<16x128xf32>
    %cst_106 = arith.constant 0.00999999977 : f32
    %67 = vector.broadcast %cst_106 : f32 to vector<16x128xf32>
    %68 = arith.mulf %67, %64 : vector<16x128xf32>
    %69 = arith.select %66, %64, %68 : vector<16x128xi1>, vector<16x128xf32>
    %70 = arith.truncf %69 : vector<16x128xf32> to vector<16x128xbf16>
    %c0_107 = arith.constant 0 : index
    %c0_108 = arith.constant 0 : index
    %c0_109 = arith.constant 0 : index
    %c0_110 = arith.constant 0 : index
    %71 = vector.load %arg8[%c0_107, %c0_108, %c0_109, %c0_110] : memref<1x1x16x128xbf16, #tpu.memory_space<vmem>>, vector<1x1x16x128xbf16>
    %72 = vector.shape_cast %71 : vector<1x1x16x128xbf16> to vector<16x128xbf16>
    %73 = vector.shape_cast %70 : vector<16x128xbf16> to vector<1x1x16x128xbf16>
    tpu.vector_store %arg8[%c0_107, %c0_108, %c0_109, %c0_110], %73 {strides = array<i32>} : memref<1x1x16x128xbf16, #tpu.memory_space<vmem>>, vector<1x1x16x128xbf16>,
    return
  }
  func.func @transform_0(%arg0: i32, %arg1: i32) -> (i32, i32, i32, i32) {
    %c1_i32 = arith.constant 1 : i32
    %0 = arith.muli %arg1, %c1_i32 : i32
    %c0_i32 = arith.constant 0 : i32
    %1 = arith.addi %0, %c0_i32 : i32
    %c0_i32_0 = arith.constant 0 : i32
    %c0_i32_1 = arith.constant 0 : i32
    %c0_i32_2 = arith.constant 0 : i32
    return %arg0, %1, %c0_i32_0, %c0_i32_1 : i32, i32, i32, i32
  }
  func.func @transform_1(%arg0: i32, %arg1: i32) -> (i32, i32, i32, i32) {
    %c1_i32 = arith.constant 1 : i32
    %0 = arith.muli %arg1, %c1_i32 : i32
    %c1_i32_0 = arith.constant 1 : i32
    %1 = arith.addi %0, %c1_i32_0 : i32
    %c0_i32 = arith.constant 0 : i32
    %c0_i32_1 = arith.constant 0 : i32
    %c0_i32_2 = arith.constant 0 : i32
    return %arg0, %1, %c0_i32, %c0_i32_1 : i32, i32, i32, i32
  }
  func.func @transform_2(%arg0: i32, %arg1: i32) -> (i32, i32, i32, i32) {
    %c1_i32 = arith.constant 1 : i32
    %0 = arith.muli %arg1, %c1_i32 : i32
    %c2_i32 = arith.constant 2 : i32
    %1 = arith.addi %0, %c2_i32 : i32
    %c0_i32 = arith.constant 0 : i32
    %c0_i32_0 = arith.constant 0 : i32
    %c0_i32_1 = arith.constant 0 : i32
    return %arg0, %1, %c0_i32, %c0_i32_0 : i32, i32, i32, i32
  }
  func.func @transform_3(%arg0: i32, %arg1: i32) -> (i32, i32) {
    %c0_i32 = arith.constant 0 : i32
    %c0_i32_0 = arith.constant 0 : i32
    %c0_i32_1 = arith.constant 0 : i32
    return %c0_i32, %c0_i32_0 : i32, i32
  }
  func.func @transform_4(%arg0: i32, %arg1: i32) -> (i32, i32) {
    %c0_i32 = arith.constant 0 : i32
    %c0_i32_0 = arith.constant 0 : i32
    %c0_i32_1 = arith.constant 0 : i32
    return %c0_i32, %c0_i32_0 : i32, i32
  }
  func.func @transform_5(%arg0: i32, %arg1: i32) -> (i32, i32) {
    %c0_i32 = arith.constant 0 : i32
    %c0_i32_0 = arith.constant 0 : i32
    %c0_i32_1 = arith.constant 0 : i32
    return %c0_i32, %c0_i32_0 : i32, i32
  }
  func.func @transform_6(%arg0: i32, %arg1: i32) -> (i32, i32, i32, i32) {
    %c0_i32 = arith.constant 0 : i32
    %c0_i32_0 = arith.constant 0 : i32
    %c0_i32_1 = arith.constant 0 : i32
    return %arg0, %arg1, %c0_i32, %c0_i32_0 : i32, i32, i32, i32
  }
}

module attributes {stable_mosaic.version = 11 : i64} {
  func.func @kernel(%arg0: i32, %arg1: i32, %arg2: memref<1x1x64x256xbf16, #tpu.memory_space<vmem>>, %arg3: memref<1x1x64x256xbf16, #tpu.memory_space<vmem>>, %arg4: memref<1x1x64x256xbf16, #tpu.memory_space<vmem>>, %arg5: memref<32x432xbf16, #tpu.memory_space<vmem>>, %arg6: memref<32x1xf32, #tpu.memory_space<vmem>>, %arg7: memref<32x1xf32, #tpu.memory_space<vmem>>, %arg8: memref<1x1x32x128xbf16, #tpu.memory_space<vmem>>) attributes {dimension_semantics = [#tpu.dimension_semantics<parallel>, #tpu.dimension_semantics<parallel>], iteration_bounds = array<i64: 2, 2>, scalar_prefetch = 0 : i64, scratch_operands = 0 : i64, tpu.core_type = #tpu.core_type<tc>, window_params = [{transform_indices = @transform_0, window_bounds = array<i64: 1, 1, 64, 256>}, {transform_indices = @transform_1, window_bounds = array<i64: 1, 1, 64, 256>}, {transform_indices = @transform_2, window_bounds = array<i64: 1, 1, 64, 256>}, {pipeline_mode = #tpu.pipeline_mode<synchronous>, transform_indices = @transform_3, window_bounds = array<i64: 32, 432>}, {pipeline_mode = #tpu.pipeline_mode<synchronous>, transform_indices = @transform_4, window_bounds = array<i64: 32, 1>}, {pipeline_mode = #tpu.pipeline_mode<synchronous>, transform_indices = @transform_5, window_bounds = array<i64: 32, 1>}, {transform_indices = @transform_6, window_bounds = array<i64: 1, 1, 32, 128>}]} {
    %c0 = arith.constant 0 : index
    %c0_0 = arith.constant 0 : index
    %c0_1 = arith.constant 0 : index
    %c0_2 = arith.constant 0 : index
    %0 = vector.load %arg2[%c0, %c0_0, %c0_1, %c0_2] : memref<1x1x64x256xbf16, #tpu.memory_space<vmem>>, vector<1x1x16x128xbf16>
    %1 = vector.shape_cast %0 : vector<1x1x16x128xbf16> to vector<16x128xbf16>
    %c0_3 = arith.constant 0 : index
    %c0_4 = arith.constant 0 : index
    %c16 = arith.constant 16 : index
    %c0_5 = arith.constant 0 : index
    %2 = vector.load %arg2[%c0_3, %c0_4, %c16, %c0_5] : memref<1x1x64x256xbf16, #tpu.memory_space<vmem>>, vector<1x1x16x128xbf16>
    %3 = vector.shape_cast %2 : vector<1x1x16x128xbf16> to vector<16x128xbf16>
    %c0_6 = arith.constant 0 : index
    %c0_7 = arith.constant 0 : index
    %c0_8 = arith.constant 0 : index
    %c1 = arith.constant 1 : index
    %4 = vector.load %arg2[%c0_6, %c0_7, %c0_8, %c1] : memref<1x1x64x256xbf16, #tpu.memory_space<vmem>>, vector<1x1x16x128xbf16>
    %5 = vector.shape_cast %4 : vector<1x1x16x128xbf16> to vector<16x128xbf16>
    %c0_9 = arith.constant 0 : index
    %c0_10 = arith.constant 0 : index
    %c32 = arith.constant 32 : index
    %c0_11 = arith.constant 0 : index
    %6 = vector.load %arg2[%c0_9, %c0_10, %c32, %c0_11] : memref<1x1x64x256xbf16, #tpu.memory_space<vmem>>, vector<1x1x16x128xbf16>
    %7 = vector.shape_cast %6 : vector<1x1x16x128xbf16> to vector<16x128xbf16>
    %c0_12 = arith.constant 0 : index
    %c0_13 = arith.constant 0 : index
    %c48 = arith.constant 48 : index
    %c0_14 = arith.constant 0 : index
    %8 = vector.load %arg2[%c0_12, %c0_13, %c48, %c0_14] : memref<1x1x64x256xbf16, #tpu.memory_space<vmem>>, vector<1x1x16x128xbf16>
    %9 = vector.shape_cast %8 : vector<1x1x16x128xbf16> to vector<16x128xbf16>
    %c0_15 = arith.constant 0 : index
    %c0_16 = arith.constant 0 : index
    %c32_17 = arith.constant 32 : index
    %c1_18 = arith.constant 1 : index
    %10 = vector.load %arg2[%c0_15, %c0_16, %c32_17, %c1_18] : memref<1x1x64x256xbf16, #tpu.memory_space<vmem>>, vector<1x1x16x128xbf16>
    %11 = vector.shape_cast %10 : vector<1x1x16x128xbf16> to vector<16x128xbf16>
    %c0_19 = arith.constant 0 : index
    %c0_20 = arith.constant 0 : index
    %c0_21 = arith.constant 0 : index
    %c5 = arith.constant 5 : index
    %12 = vector.load %arg2[%c0_19, %c0_20, %c0_21, %c5] : memref<1x1x64x256xbf16, #tpu.memory_space<vmem>>, vector<1x1x16x128xbf16>
    %13 = vector.shape_cast %12 : vector<1x1x16x128xbf16> to vector<16x128xbf16>
    %c0_22 = arith.constant 0 : index
    %c0_23 = arith.constant 0 : index
    %c16_24 = arith.constant 16 : index
    %c5_25 = arith.constant 5 : index
    %14 = vector.load %arg2[%c0_22, %c0_23, %c16_24, %c5_25] : memref<1x1x64x256xbf16, #tpu.memory_space<vmem>>, vector<1x1x16x128xbf16>
    %15 = vector.shape_cast %14 : vector<1x1x16x128xbf16> to vector<16x128xbf16>
    %c0_26 = arith.constant 0 : index
    %c0_27 = arith.constant 0 : index
    %c0_28 = arith.constant 0 : index
    %c6 = arith.constant 6 : index
    %16 = vector.load %arg2[%c0_26, %c0_27, %c0_28, %c6] : memref<1x1x64x256xbf16, #tpu.memory_space<vmem>>, vector<1x1x16x128xbf16>
    %17 = vector.shape_cast %16 : vector<1x1x16x128xbf16> to vector<16x128xbf16>
    %c0_29 = arith.constant 0 : index
    %c0_30 = arith.constant 0 : index
    %c0_31 = arith.constant 0 : index
    %c0_32 = arith.constant 0 : index
    %18 = vector.load %arg3[%c0_29, %c0_30, %c0_31, %c0_32] : memref<1x1x64x256xbf16, #tpu.memory_space<vmem>>, vector<1x1x16x128xbf16>
    %19 = vector.shape_cast %18 : vector<1x1x16x128xbf16> to vector<16x128xbf16>
    %c0_33 = arith.constant 0 : index
    %c0_34 = arith.constant 0 : index
    %c16_35 = arith.constant 16 : index
    %c0_36 = arith.constant 0 : index
    %20 = vector.load %arg3[%c0_33, %c0_34, %c16_35, %c0_36] : memref<1x1x64x256xbf16, #tpu.memory_space<vmem>>, vector<1x1x16x128xbf16>
    %21 = vector.shape_cast %20 : vector<1x1x16x128xbf16> to vector<16x128xbf16>
    %c0_37 = arith.constant 0 : index
    %c0_38 = arith.constant 0 : index
    %c0_39 = arith.constant 0 : index
    %c1_40 = arith.constant 1 : index
    %22 = vector.load %arg3[%c0_37, %c0_38, %c0_39, %c1_40] : memref<1x1x64x256xbf16, #tpu.memory_space<vmem>>, vector<1x1x16x128xbf16>
    %23 = vector.shape_cast %22 : vector<1x1x16x128xbf16> to vector<16x128xbf16>
    %c0_41 = arith.constant 0 : index
    %c0_42 = arith.constant 0 : index
    %c32_43 = arith.constant 32 : index
    %c0_44 = arith.constant 0 : index
    %24 = vector.load %arg3[%c0_41, %c0_42, %c32_43, %c0_44] : memref<1x1x64x256xbf16, #tpu.memory_space<vmem>>, vector<1x1x16x128xbf16>
    %25 = vector.shape_cast %24 : vector<1x1x16x128xbf16> to vector<16x128xbf16>
    %c0_45 = arith.constant 0 : index
    %c0_46 = arith.constant 0 : index
    %c48_47 = arith.constant 48 : index
    %c0_48 = arith.constant 0 : index
    %26 = vector.load %arg3[%c0_45, %c0_46, %c48_47, %c0_48] : memref<1x1x64x256xbf16, #tpu.memory_space<vmem>>, vector<1x1x16x128xbf16>
    %27 = vector.shape_cast %26 : vector<1x1x16x128xbf16> to vector<16x128xbf16>
    %c0_49 = arith.constant 0 : index
    %c0_50 = arith.constant 0 : index
    %c32_51 = arith.constant 32 : index
    %c1_52 = arith.constant 1 : index
    %28 = vector.load %arg3[%c0_49, %c0_50, %c32_51, %c1_52] : memref<1x1x64x256xbf16, #tpu.memory_space<vmem>>, vector<1x1x16x128xbf16>
    %29 = vector.shape_cast %28 : vector<1x1x16x128xbf16> to vector<16x128xbf16>
    %c0_53 = arith.constant 0 : index
    %c0_54 = arith.constant 0 : index
    %c0_55 = arith.constant 0 : index
    %c5_56 = arith.constant 5 : index
    %30 = vector.load %arg3[%c0_53, %c0_54, %c0_55, %c5_56] : memref<1x1x64x256xbf16, #tpu.memory_space<vmem>>, vector<1x1x16x128xbf16>
    %31 = vector.shape_cast %30 : vector<1x1x16x128xbf16> to vector<16x128xbf16>
    %c0_57 = arith.constant 0 : index
    %c0_58 = arith.constant 0 : index
    %c16_59 = arith.constant 16 : index
    %c5_60 = arith.constant 5 : index
    %32 = vector.load %arg3[%c0_57, %c0_58, %c16_59, %c5_60] : memref<1x1x64x256xbf16, #tpu.memory_space<vmem>>, vector<1x1x16x128xbf16>
    %33 = vector.shape_cast %32 : vector<1x1x16x128xbf16> to vector<16x128xbf16>
    %c0_61 = arith.constant 0 : index
    %c0_62 = arith.constant 0 : index
    %c0_63 = arith.constant 0 : index
    %c6_64 = arith.constant 6 : index
    %34 = vector.load %arg3[%c0_61, %c0_62, %c0_63, %c6_64] : memref<1x1x64x256xbf16, #tpu.memory_space<vmem>>, vector<1x1x16x128xbf16>
    %35 = vector.shape_cast %34 : vector<1x1x16x128xbf16> to vector<16x128xbf16>
    %c0_65 = arith.constant 0 : index
    %c0_66 = arith.constant 0 : index
    %c0_67 = arith.constant 0 : index
    %c0_68 = arith.constant 0 : index
    %36 = vector.load %arg4[%c0_65, %c0_66, %c0_67, %c0_68] : memref<1x1x64x256xbf16, #tpu.memory_space<vmem>>, vector<1x1x16x128xbf16>
    %37 = vector.shape_cast %36 : vector<1x1x16x128xbf16> to vector<16x128xbf16>
    %c0_69 = arith.constant 0 : index
    %c0_70 = arith.constant 0 : index
    %c16_71 = arith.constant 16 : index
    %c0_72 = arith.constant 0 : index
    %38 = vector.load %arg4[%c0_69, %c0_70, %c16_71, %c0_72] : memref<1x1x64x256xbf16, #tpu.memory_space<vmem>>, vector<1x1x16x128xbf16>
    %39 = vector.shape_cast %38 : vector<1x1x16x128xbf16> to vector<16x128xbf16>
    %c0_73 = arith.constant 0 : index
    %c0_74 = arith.constant 0 : index
    %c0_75 = arith.constant 0 : index
    %c1_76 = arith.constant 1 : index
    %40 = vector.load %arg4[%c0_73, %c0_74, %c0_75, %c1_76] : memref<1x1x64x256xbf16, #tpu.memory_space<vmem>>, vector<1x1x16x128xbf16>
    %41 = vector.shape_cast %40 : vector<1x1x16x128xbf16> to vector<16x128xbf16>
    %c0_77 = arith.constant 0 : index
    %c0_78 = arith.constant 0 : index
    %c32_79 = arith.constant 32 : index
    %c0_80 = arith.constant 0 : index
    %42 = vector.load %arg4[%c0_77, %c0_78, %c32_79, %c0_80] : memref<1x1x64x256xbf16, #tpu.memory_space<vmem>>, vector<1x1x16x128xbf16>
    %43 = vector.shape_cast %42 : vector<1x1x16x128xbf16> to vector<16x128xbf16>
    %c0_81 = arith.constant 0 : index
    %c0_82 = arith.constant 0 : index
    %c48_83 = arith.constant 48 : index
    %c0_84 = arith.constant 0 : index
    %44 = vector.load %arg4[%c0_81, %c0_82, %c48_83, %c0_84] : memref<1x1x64x256xbf16, #tpu.memory_space<vmem>>, vector<1x1x16x128xbf16>
    %45 = vector.shape_cast %44 : vector<1x1x16x128xbf16> to vector<16x128xbf16>
    %c0_85 = arith.constant 0 : index
    %c0_86 = arith.constant 0 : index
    %c32_87 = arith.constant 32 : index
    %c1_88 = arith.constant 1 : index
    %46 = vector.load %arg4[%c0_85, %c0_86, %c32_87, %c1_88] : memref<1x1x64x256xbf16, #tpu.memory_space<vmem>>, vector<1x1x16x128xbf16>
    %47 = vector.shape_cast %46 : vector<1x1x16x128xbf16> to vector<16x128xbf16>
    %c0_89 = arith.constant 0 : index
    %c0_90 = arith.constant 0 : index
    %c0_91 = arith.constant 0 : index
    %c5_92 = arith.constant 5 : index
    %48 = vector.load %arg4[%c0_89, %c0_90, %c0_91, %c5_92] : memref<1x1x64x256xbf16, #tpu.memory_space<vmem>>, vector<1x1x16x128xbf16>
    %49 = vector.shape_cast %48 : vector<1x1x16x128xbf16> to vector<16x128xbf16>
    %c0_93 = arith.constant 0 : index
    %c0_94 = arith.constant 0 : index
    %c16_95 = arith.constant 16 : index
    %c5_96 = arith.constant 5 : index
    %50 = vector.load %arg4[%c0_93, %c0_94, %c16_95, %c5_96] : memref<1x1x64x256xbf16, #tpu.memory_space<vmem>>, vector<1x1x16x128xbf16>
    %51 = vector.shape_cast %50 : vector<1x1x16x128xbf16> to vector<16x128xbf16>
    %c0_97 = arith.constant 0 : index
    %c0_98 = arith.constant 0 : index
    %c0_99 = arith.constant 0 : index
    %c6_100 = arith.constant 6 : index
    %52 = vector.load %arg4[%c0_97, %c0_98, %c0_99, %c6_100] : memref<1x1x64x256xbf16, #tpu.memory_space<vmem>>, vector<1x1x16x128xbf16>
    %53 = vector.shape_cast %52 : vector<1x1x16x128xbf16> to vector<16x128xbf16>
    %54 = tpu.concatenate %1, %3, %5, %7, %9, %11, %13, %15, %17, %19, %21, %23, %25, %27, %29, %31 in 0 : vector<16x128xbf16>, vector<16x128xbf16>, vector<16x128xbf16>, vector<16x128xbf16>, vector<16x128xbf16>, vector<16x128xbf16>, vector<16x128xbf16>, vector<16x128xbf16>, vector<16x128xbf16>, vector<16x128xbf16>, vector<16x128xbf16>, vector<16x128xbf16>, vector<16x128xbf16>, vector<16x128xbf16>, vector<16x128xbf16>, vector<16x128xbf16> -> vector<256x128xbf16>
    %55 = tpu.concatenate %33, %35, %37, %39, %41, %43, %45, %47, %49, %51, %53 in 0 : vector<16x128xbf16>, vector<16x128xbf16>, vector<16x128xbf16>, vector<16x128xbf16>, vector<16x128xbf16>, vector<16x128xbf16>, vector<16x128xbf16>, vector<16x128xbf16>, vector<16x128xbf16>, vector<16x128xbf16>, vector<16x128xbf16> -> vector<176x128xbf16>
    %56 = tpu.concatenate %54, %55 in 0 : vector<256x128xbf16>, vector<176x128xbf16> -> vector<432x128xbf16>
    %c0_101 = arith.constant 0 : index
    %c0_102 = arith.constant 0 : index
    %57 = vector.load %arg5[%c0_101, %c0_102] : memref<32x432xbf16, #tpu.memory_space<vmem>>, vector<32x432xbf16>
    %cst = arith.constant dense<0.000000e+00> : vector<32x128xf32>
    %58 = tpu.matmul %57, %56, %cst {dimension_numbers = #tpu.dot_dimension_numbers<[1], [0], [0], [1], [0, 0, 1, 1], [], []>} : vector<32x432xbf16>, vector<432x128xbf16>, vector<32x128xf32> -> vector<32x128xf32>
    %c0_103 = arith.constant 0 : index
    %c0_104 = arith.constant 0 : index
    %59 = vector.load %arg6[%c0_103, %c0_104] : memref<32x1xf32, #tpu.memory_space<vmem>>, vector<32x1xf32>
    %60 = vector.broadcast %59 : vector<32x1xf32> to vector<32x128xf32>
    %61 = arith.mulf %58, %60 : vector<32x128xf32>
    %c0_105 = arith.constant 0 : index
    %c0_106 = arith.constant 0 : index
    %62 = vector.load %arg7[%c0_105, %c0_106] : memref<32x1xf32, #tpu.memory_space<vmem>>, vector<32x1xf32>
    %63 = vector.broadcast %62 : vector<32x1xf32> to vector<32x128xf32>
    %64 = arith.addf %61, %63 : vector<32x128xf32>
    %cst_107 = arith.constant 0.000000e+00 : f32
    %65 = vector.broadcast %cst_107 : f32 to vector<32x128xf32>
    %66 = arith.cmpf oge, %64, %65 : vector<32x128xf32>
    %cst_108 = arith.constant 0.00999999977 : f32
    %67 = vector.broadcast %cst_108 : f32 to vector<32x128xf32>
    %68 = arith.mulf %67, %64 : vector<32x128xf32>
    %69 = arith.select %66, %64, %68 : vector<32x128xi1>, vector<32x128xf32>
    %70 = arith.truncf %69 : vector<32x128xf32> to vector<32x128xbf16>
    %c0_109 = arith.constant 0 : index
    %c0_110 = arith.constant 0 : index
    %c0_111 = arith.constant 0 : index
    %c0_112 = arith.constant 0 : index
    %71 = vector.load %arg8[%c0_109, %c0_110, %c0_111, %c0_112] : memref<1x1x32x128xbf16, #tpu.memory_space<vmem>>, vector<1x1x32x128xbf16>
    %72 = vector.shape_cast %71 : vector<1x1x32x128xbf16> to vector<32x128xbf16>
    %73 = vector.shape_cast %70 : vector<32x128xbf16> to vector<1x1x32x128xbf16>
    tpu.vector_store %arg8[%c0_109, %c0_110, %c0_111, %c0_112], %73 {strides = array<i32>} : memref<1x1x32x128xbf16, #tpu.memory_space<vmem>>, vector<1x1x32x128xbf16>,
    return
  }
  func.func @transform_0(%arg0: i32, %arg1: i32) -> (i32, i32, i32, i32) {
    %c2_i32 = arith.constant 2 : i32
    %0 = arith.muli %arg1, %c2_i32 : i32
    %c0_i32 = arith.constant 0 : i32
    %1 = arith.addi %0, %c0_i32 : i32
    %c0_i32_0 = arith.constant 0 : i32
    %c0_i32_1 = arith.constant 0 : i32
    %c0_i32_2 = arith.constant 0 : i32
    return %arg0, %1, %c0_i32_0, %c0_i32_1 : i32, i32, i32, i32
  }
  func.func @transform_1(%arg0: i32, %arg1: i32) -> (i32, i32, i32, i32) {
    %c2_i32 = arith.constant 2 : i32
    %0 = arith.muli %arg1, %c2_i32 : i32
    %c1_i32 = arith.constant 1 : i32
    %1 = arith.addi %0, %c1_i32 : i32
    %c0_i32 = arith.constant 0 : i32
    %c0_i32_0 = arith.constant 0 : i32
    %c0_i32_1 = arith.constant 0 : i32
    return %arg0, %1, %c0_i32, %c0_i32_0 : i32, i32, i32, i32
  }
  func.func @transform_2(%arg0: i32, %arg1: i32) -> (i32, i32, i32, i32) {
    %c2_i32 = arith.constant 2 : i32
    %0 = arith.muli %arg1, %c2_i32 : i32
    %c2_i32_0 = arith.constant 2 : i32
    %1 = arith.addi %0, %c2_i32_0 : i32
    %c0_i32 = arith.constant 0 : i32
    %c0_i32_1 = arith.constant 0 : i32
    %c0_i32_2 = arith.constant 0 : i32
    return %arg0, %1, %c0_i32, %c0_i32_1 : i32, i32, i32, i32
  }
  func.func @transform_3(%arg0: i32, %arg1: i32) -> (i32, i32) {
    %c0_i32 = arith.constant 0 : i32
    %c0_i32_0 = arith.constant 0 : i32
    %c0_i32_1 = arith.constant 0 : i32
    return %c0_i32, %c0_i32_0 : i32, i32
  }
  func.func @transform_4(%arg0: i32, %arg1: i32) -> (i32, i32) {
    %c0_i32 = arith.constant 0 : i32
    %c0_i32_0 = arith.constant 0 : i32
    %c0_i32_1 = arith.constant 0 : i32
    return %c0_i32, %c0_i32_0 : i32, i32
  }
  func.func @transform_5(%arg0: i32, %arg1: i32) -> (i32, i32) {
    %c0_i32 = arith.constant 0 : i32
    %c0_i32_0 = arith.constant 0 : i32
    %c0_i32_1 = arith.constant 0 : i32
    return %c0_i32, %c0_i32_0 : i32, i32
  }
  func.func @transform_6(%arg0: i32, %arg1: i32) -> (i32, i32, i32, i32) {
    %c0_i32 = arith.constant 0 : i32
    %c0_i32_0 = arith.constant 0 : i32
    %c0_i32_1 = arith.constant 0 : i32
    return %arg0, %arg1, %c0_i32, %c0_i32_0 : i32, i32, i32, i32
  }
}

module attributes {stable_mosaic.version = 11 : i64} {
  func.func @kernel(%arg0: i32, %arg1: i32, %arg2: memref<1x1x32x256xbf16, #tpu.memory_space<vmem>>, %arg3: memref<1x1x32x256xbf16, #tpu.memory_space<vmem>>, %arg4: memref<1x1x32x256xbf16, #tpu.memory_space<vmem>>, %arg5: memref<32x864xbf16, #tpu.memory_space<vmem>>, %arg6: memref<32x1xf32, #tpu.memory_space<vmem>>, %arg7: memref<32x1xf32, #tpu.memory_space<vmem>>, %arg8: memref<1x1x32x128xbf16, #tpu.memory_space<vmem>>) attributes {dimension_semantics = [#tpu.dimension_semantics<parallel>, #tpu.dimension_semantics<parallel>], iteration_bounds = array<i64: 2, 2>, scalar_prefetch = 0 : i64, scratch_operands = 0 : i64, tpu.core_type = #tpu.core_type<tc>, window_params = [{transform_indices = @transform_0, window_bounds = array<i64: 1, 1, 32, 256>}, {transform_indices = @transform_1, window_bounds = array<i64: 1, 1, 32, 256>}, {transform_indices = @transform_2, window_bounds = array<i64: 1, 1, 32, 256>}, {pipeline_mode = #tpu.pipeline_mode<synchronous>, transform_indices = @transform_3, window_bounds = array<i64: 32, 864>}, {pipeline_mode = #tpu.pipeline_mode<synchronous>, transform_indices = @transform_4, window_bounds = array<i64: 32, 1>}, {pipeline_mode = #tpu.pipeline_mode<synchronous>, transform_indices = @transform_5, window_bounds = array<i64: 32, 1>}, {transform_indices = @transform_6, window_bounds = array<i64: 1, 1, 32, 128>}]} {
    %c0 = arith.constant 0 : index
    %c0_0 = arith.constant 0 : index
    %c0_1 = arith.constant 0 : index
    %c0_2 = arith.constant 0 : index
    %0 = vector.load %arg2[%c0, %c0_0, %c0_1, %c0_2] : memref<1x1x32x256xbf16, #tpu.memory_space<vmem>>, vector<1x1x32x128xbf16>
    %1 = vector.shape_cast %0 : vector<1x1x32x128xbf16> to vector<32x128xbf16>
    %c0_3 = arith.constant 0 : index
    %c0_4 = arith.constant 0 : index
    %c0_5 = arith.constant 0 : index
    %c1 = arith.constant 1 : index
    %2 = vector.load %arg2[%c0_3, %c0_4, %c0_5, %c1] : memref<1x1x32x256xbf16, #tpu.memory_space<vmem>>, vector<1x1x32x128xbf16>
    %3 = vector.shape_cast %2 : vector<1x1x32x128xbf16> to vector<32x128xbf16>
    %c0_6 = arith.constant 0 : index
    %c0_7 = arith.constant 0 : index
    %c0_8 = arith.constant 0 : index
    %c2 = arith.constant 2 : index
    %4 = vector.load %arg2[%c0_6, %c0_7, %c0_8, %c2] : memref<1x1x32x256xbf16, #tpu.memory_space<vmem>>, vector<1x1x32x128xbf16>
    %5 = vector.shape_cast %4 : vector<1x1x32x128xbf16> to vector<32x128xbf16>
    %c0_9 = arith.constant 0 : index
    %c0_10 = arith.constant 0 : index
    %c0_11 = arith.constant 0 : index
    %c6 = arith.constant 6 : index
    %6 = vector.load %arg2[%c0_9, %c0_10, %c0_11, %c6] : memref<1x1x32x256xbf16, #tpu.memory_space<vmem>>, vector<1x1x32x128xbf16>
    %7 = vector.shape_cast %6 : vector<1x1x32x128xbf16> to vector<32x128xbf16>
    %c0_12 = arith.constant 0 : index
    %c0_13 = arith.constant 0 : index
    %c0_14 = arith.constant 0 : index
    %c7 = arith.constant 7 : index
    %8 = vector.load %arg2[%c0_12, %c0_13, %c0_14, %c7] : memref<1x1x32x256xbf16, #tpu.memory_space<vmem>>, vector<1x1x32x128xbf16>
    %9 = vector.shape_cast %8 : vector<1x1x32x128xbf16> to vector<32x128xbf16>
    %c0_15 = arith.constant 0 : index
    %c0_16 = arith.constant 0 : index
    %c0_17 = arith.constant 0 : index
    %c8 = arith.constant 8 : index
    %10 = vector.load %arg2[%c0_15, %c0_16, %c0_17, %c8] : memref<1x1x32x256xbf16, #tpu.memory_space<vmem>>, vector<1x1x32x128xbf16>
    %11 = vector.shape_cast %10 : vector<1x1x32x128xbf16> to vector<32x128xbf16>
    %c0_18 = arith.constant 0 : index
    %c0_19 = arith.constant 0 : index
    %c0_20 = arith.constant 0 : index
    %c12 = arith.constant 12 : index
    %12 = vector.load %arg2[%c0_18, %c0_19, %c0_20, %c12] : memref<1x1x32x256xbf16, #tpu.memory_space<vmem>>, vector<1x1x32x128xbf16>
    %13 = vector.shape_cast %12 : vector<1x1x32x128xbf16> to vector<32x128xbf16>
    %c0_21 = arith.constant 0 : index
    %c0_22 = arith.constant 0 : index
    %c0_23 = arith.constant 0 : index
    %c13 = arith.constant 13 : index
    %14 = vector.load %arg2[%c0_21, %c0_22, %c0_23, %c13] : memref<1x1x32x256xbf16, #tpu.memory_space<vmem>>, vector<1x1x32x128xbf16>
    %15 = vector.shape_cast %14 : vector<1x1x32x128xbf16> to vector<32x128xbf16>
    %c0_24 = arith.constant 0 : index
    %c0_25 = arith.constant 0 : index
    %c0_26 = arith.constant 0 : index
    %c14 = arith.constant 14 : index
    %16 = vector.load %arg2[%c0_24, %c0_25, %c0_26, %c14] : memref<1x1x32x256xbf16, #tpu.memory_space<vmem>>, vector<1x1x32x128xbf16>
    %17 = vector.shape_cast %16 : vector<1x1x32x128xbf16> to vector<32x128xbf16>
    %c0_27 = arith.constant 0 : index
    %c0_28 = arith.constant 0 : index
    %c0_29 = arith.constant 0 : index
    %c0_30 = arith.constant 0 : index
    %18 = vector.load %arg3[%c0_27, %c0_28, %c0_29, %c0_30] : memref<1x1x32x256xbf16, #tpu.memory_space<vmem>>, vector<1x1x32x128xbf16>
    %19 = vector.shape_cast %18 : vector<1x1x32x128xbf16> to vector<32x128xbf16>
    %c0_31 = arith.constant 0 : index
    %c0_32 = arith.constant 0 : index
    %c0_33 = arith.constant 0 : index
    %c1_34 = arith.constant 1 : index
    %20 = vector.load %arg3[%c0_31, %c0_32, %c0_33, %c1_34] : memref<1x1x32x256xbf16, #tpu.memory_space<vmem>>, vector<1x1x32x128xbf16>
    %21 = vector.shape_cast %20 : vector<1x1x32x128xbf16> to vector<32x128xbf16>
    %c0_35 = arith.constant 0 : index
    %c0_36 = arith.constant 0 : index
    %c0_37 = arith.constant 0 : index
    %c2_38 = arith.constant 2 : index
    %22 = vector.load %arg3[%c0_35, %c0_36, %c0_37, %c2_38] : memref<1x1x32x256xbf16, #tpu.memory_space<vmem>>, vector<1x1x32x128xbf16>
    %23 = vector.shape_cast %22 : vector<1x1x32x128xbf16> to vector<32x128xbf16>
    %c0_39 = arith.constant 0 : index
    %c0_40 = arith.constant 0 : index
    %c0_41 = arith.constant 0 : index
    %c6_42 = arith.constant 6 : index
    %24 = vector.load %arg3[%c0_39, %c0_40, %c0_41, %c6_42] : memref<1x1x32x256xbf16, #tpu.memory_space<vmem>>, vector<1x1x32x128xbf16>
    %25 = vector.shape_cast %24 : vector<1x1x32x128xbf16> to vector<32x128xbf16>
    %c0_43 = arith.constant 0 : index
    %c0_44 = arith.constant 0 : index
    %c0_45 = arith.constant 0 : index
    %c7_46 = arith.constant 7 : index
    %26 = vector.load %arg3[%c0_43, %c0_44, %c0_45, %c7_46] : memref<1x1x32x256xbf16, #tpu.memory_space<vmem>>, vector<1x1x32x128xbf16>
    %27 = vector.shape_cast %26 : vector<1x1x32x128xbf16> to vector<32x128xbf16>
    %c0_47 = arith.constant 0 : index
    %c0_48 = arith.constant 0 : index
    %c0_49 = arith.constant 0 : index
    %c8_50 = arith.constant 8 : index
    %28 = vector.load %arg3[%c0_47, %c0_48, %c0_49, %c8_50] : memref<1x1x32x256xbf16, #tpu.memory_space<vmem>>, vector<1x1x32x128xbf16>
    %29 = vector.shape_cast %28 : vector<1x1x32x128xbf16> to vector<32x128xbf16>
    %c0_51 = arith.constant 0 : index
    %c0_52 = arith.constant 0 : index
    %c0_53 = arith.constant 0 : index
    %c12_54 = arith.constant 12 : index
    %30 = vector.load %arg3[%c0_51, %c0_52, %c0_53, %c12_54] : memref<1x1x32x256xbf16, #tpu.memory_space<vmem>>, vector<1x1x32x128xbf16>
    %31 = vector.shape_cast %30 : vector<1x1x32x128xbf16> to vector<32x128xbf16>
    %c0_55 = arith.constant 0 : index
    %c0_56 = arith.constant 0 : index
    %c0_57 = arith.constant 0 : index
    %c13_58 = arith.constant 13 : index
    %32 = vector.load %arg3[%c0_55, %c0_56, %c0_57, %c13_58] : memref<1x1x32x256xbf16, #tpu.memory_space<vmem>>, vector<1x1x32x128xbf16>
    %33 = vector.shape_cast %32 : vector<1x1x32x128xbf16> to vector<32x128xbf16>
    %c0_59 = arith.constant 0 : index
    %c0_60 = arith.constant 0 : index
    %c0_61 = arith.constant 0 : index
    %c14_62 = arith.constant 14 : index
    %34 = vector.load %arg3[%c0_59, %c0_60, %c0_61, %c14_62] : memref<1x1x32x256xbf16, #tpu.memory_space<vmem>>, vector<1x1x32x128xbf16>
    %35 = vector.shape_cast %34 : vector<1x1x32x128xbf16> to vector<32x128xbf16>
    %c0_63 = arith.constant 0 : index
    %c0_64 = arith.constant 0 : index
    %c0_65 = arith.constant 0 : index
    %c0_66 = arith.constant 0 : index
    %36 = vector.load %arg4[%c0_63, %c0_64, %c0_65, %c0_66] : memref<1x1x32x256xbf16, #tpu.memory_space<vmem>>, vector<1x1x32x128xbf16>
    %37 = vector.shape_cast %36 : vector<1x1x32x128xbf16> to vector<32x128xbf16>
    %c0_67 = arith.constant 0 : index
    %c0_68 = arith.constant 0 : index
    %c0_69 = arith.constant 0 : index
    %c1_70 = arith.constant 1 : index
    %38 = vector.load %arg4[%c0_67, %c0_68, %c0_69, %c1_70] : memref<1x1x32x256xbf16, #tpu.memory_space<vmem>>, vector<1x1x32x128xbf16>
    %39 = vector.shape_cast %38 : vector<1x1x32x128xbf16> to vector<32x128xbf16>
    %c0_71 = arith.constant 0 : index
    %c0_72 = arith.constant 0 : index
    %c0_73 = arith.constant 0 : index
    %c2_74 = arith.constant 2 : index
    %40 = vector.load %arg4[%c0_71, %c0_72, %c0_73, %c2_74] : memref<1x1x32x256xbf16, #tpu.memory_space<vmem>>, vector<1x1x32x128xbf16>
    %41 = vector.shape_cast %40 : vector<1x1x32x128xbf16> to vector<32x128xbf16>
    %c0_75 = arith.constant 0 : index
    %c0_76 = arith.constant 0 : index
    %c0_77 = arith.constant 0 : index
    %c6_78 = arith.constant 6 : index
    %42 = vector.load %arg4[%c0_75, %c0_76, %c0_77, %c6_78] : memref<1x1x32x256xbf16, #tpu.memory_space<vmem>>, vector<1x1x32x128xbf16>
    %43 = vector.shape_cast %42 : vector<1x1x32x128xbf16> to vector<32x128xbf16>
    %c0_79 = arith.constant 0 : index
    %c0_80 = arith.constant 0 : index
    %c0_81 = arith.constant 0 : index
    %c7_82 = arith.constant 7 : index
    %44 = vector.load %arg4[%c0_79, %c0_80, %c0_81, %c7_82] : memref<1x1x32x256xbf16, #tpu.memory_space<vmem>>, vector<1x1x32x128xbf16>
    %45 = vector.shape_cast %44 : vector<1x1x32x128xbf16> to vector<32x128xbf16>
    %c0_83 = arith.constant 0 : index
    %c0_84 = arith.constant 0 : index
    %c0_85 = arith.constant 0 : index
    %c8_86 = arith.constant 8 : index
    %46 = vector.load %arg4[%c0_83, %c0_84, %c0_85, %c8_86] : memref<1x1x32x256xbf16, #tpu.memory_space<vmem>>, vector<1x1x32x128xbf16>
    %47 = vector.shape_cast %46 : vector<1x1x32x128xbf16> to vector<32x128xbf16>
    %c0_87 = arith.constant 0 : index
    %c0_88 = arith.constant 0 : index
    %c0_89 = arith.constant 0 : index
    %c12_90 = arith.constant 12 : index
    %48 = vector.load %arg4[%c0_87, %c0_88, %c0_89, %c12_90] : memref<1x1x32x256xbf16, #tpu.memory_space<vmem>>, vector<1x1x32x128xbf16>
    %49 = vector.shape_cast %48 : vector<1x1x32x128xbf16> to vector<32x128xbf16>
    %c0_91 = arith.constant 0 : index
    %c0_92 = arith.constant 0 : index
    %c0_93 = arith.constant 0 : index
    %c13_94 = arith.constant 13 : index
    %50 = vector.load %arg4[%c0_91, %c0_92, %c0_93, %c13_94] : memref<1x1x32x256xbf16, #tpu.memory_space<vmem>>, vector<1x1x32x128xbf16>
    %51 = vector.shape_cast %50 : vector<1x1x32x128xbf16> to vector<32x128xbf16>
    %c0_95 = arith.constant 0 : index
    %c0_96 = arith.constant 0 : index
    %c0_97 = arith.constant 0 : index
    %c14_98 = arith.constant 14 : index
    %52 = vector.load %arg4[%c0_95, %c0_96, %c0_97, %c14_98] : memref<1x1x32x256xbf16, #tpu.memory_space<vmem>>, vector<1x1x32x128xbf16>
    %53 = vector.shape_cast %52 : vector<1x1x32x128xbf16> to vector<32x128xbf16>
    %54 = tpu.concatenate %1, %3, %5, %7, %9, %11, %13, %15, %17, %19, %21, %23, %25, %27, %29, %31 in 0 : vector<32x128xbf16>, vector<32x128xbf16>, vector<32x128xbf16>, vector<32x128xbf16>, vector<32x128xbf16>, vector<32x128xbf16>, vector<32x128xbf16>, vector<32x128xbf16>, vector<32x128xbf16>, vector<32x128xbf16>, vector<32x128xbf16>, vector<32x128xbf16>, vector<32x128xbf16>, vector<32x128xbf16>, vector<32x128xbf16>, vector<32x128xbf16> -> vector<512x128xbf16>
    %55 = tpu.concatenate %33, %35, %37, %39, %41, %43, %45, %47, %49, %51, %53 in 0 : vector<32x128xbf16>, vector<32x128xbf16>, vector<32x128xbf16>, vector<32x128xbf16>, vector<32x128xbf16>, vector<32x128xbf16>, vector<32x128xbf16>, vector<32x128xbf16>, vector<32x128xbf16>, vector<32x128xbf16>, vector<32x128xbf16> -> vector<352x128xbf16>
    %56 = tpu.concatenate %54, %55 in 0 : vector<512x128xbf16>, vector<352x128xbf16> -> vector<864x128xbf16>
    %c0_99 = arith.constant 0 : index
    %c0_100 = arith.constant 0 : index
    %57 = vector.load %arg5[%c0_99, %c0_100] : memref<32x864xbf16, #tpu.memory_space<vmem>>, vector<32x864xbf16>
    %cst = arith.constant dense<0.000000e+00> : vector<32x128xf32>
    %58 = tpu.matmul %57, %56, %cst {dimension_numbers = #tpu.dot_dimension_numbers<[1], [0], [0], [1], [0, 0, 1, 1], [], []>} : vector<32x864xbf16>, vector<864x128xbf16>, vector<32x128xf32> -> vector<32x128xf32>
    %c0_101 = arith.constant 0 : index
    %c0_102 = arith.constant 0 : index
    %59 = vector.load %arg6[%c0_101, %c0_102] : memref<32x1xf32, #tpu.memory_space<vmem>>, vector<32x1xf32>
    %60 = vector.broadcast %59 : vector<32x1xf32> to vector<32x128xf32>
    %61 = arith.mulf %58, %60 : vector<32x128xf32>
    %c0_103 = arith.constant 0 : index
    %c0_104 = arith.constant 0 : index
    %62 = vector.load %arg7[%c0_103, %c0_104] : memref<32x1xf32, #tpu.memory_space<vmem>>, vector<32x1xf32>
    %63 = vector.broadcast %62 : vector<32x1xf32> to vector<32x128xf32>
    %64 = arith.addf %61, %63 : vector<32x128xf32>
    %cst_105 = arith.constant 0.000000e+00 : f32
    %65 = vector.broadcast %cst_105 : f32 to vector<32x128xf32>
    %66 = arith.cmpf oge, %64, %65 : vector<32x128xf32>
    %cst_106 = arith.constant 0.00999999977 : f32
    %67 = vector.broadcast %cst_106 : f32 to vector<32x128xf32>
    %68 = arith.mulf %67, %64 : vector<32x128xf32>
    %69 = arith.select %66, %64, %68 : vector<32x128xi1>, vector<32x128xf32>
    %70 = arith.truncf %69 : vector<32x128xf32> to vector<32x128xbf16>
    %c0_107 = arith.constant 0 : index
    %c0_108 = arith.constant 0 : index
    %c0_109 = arith.constant 0 : index
    %c0_110 = arith.constant 0 : index
    %71 = vector.load %arg8[%c0_107, %c0_108, %c0_109, %c0_110] : memref<1x1x32x128xbf16, #tpu.memory_space<vmem>>, vector<1x1x32x128xbf16>
    %72 = vector.shape_cast %71 : vector<1x1x32x128xbf16> to vector<32x128xbf16>
    %73 = vector.shape_cast %70 : vector<32x128xbf16> to vector<1x1x32x128xbf16>
    tpu.vector_store %arg8[%c0_107, %c0_108, %c0_109, %c0_110], %73 {strides = array<i32>} : memref<1x1x32x128xbf16, #tpu.memory_space<vmem>>, vector<1x1x32x128xbf16>,
    return
  }
  func.func @transform_0(%arg0: i32, %arg1: i32) -> (i32, i32, i32, i32) {
    %c1_i32 = arith.constant 1 : i32
    %0 = arith.muli %arg1, %c1_i32 : i32
    %c0_i32 = arith.constant 0 : i32
    %1 = arith.addi %0, %c0_i32 : i32
    %c0_i32_0 = arith.constant 0 : i32
    %c0_i32_1 = arith.constant 0 : i32
    %c0_i32_2 = arith.constant 0 : i32
    return %arg0, %1, %c0_i32_0, %c0_i32_1 : i32, i32, i32, i32
  }
  func.func @transform_1(%arg0: i32, %arg1: i32) -> (i32, i32, i32, i32) {
    %c1_i32 = arith.constant 1 : i32
    %0 = arith.muli %arg1, %c1_i32 : i32
    %c1_i32_0 = arith.constant 1 : i32
    %1 = arith.addi %0, %c1_i32_0 : i32
    %c0_i32 = arith.constant 0 : i32
    %c0_i32_1 = arith.constant 0 : i32
    %c0_i32_2 = arith.constant 0 : i32
    return %arg0, %1, %c0_i32, %c0_i32_1 : i32, i32, i32, i32
  }
  func.func @transform_2(%arg0: i32, %arg1: i32) -> (i32, i32, i32, i32) {
    %c1_i32 = arith.constant 1 : i32
    %0 = arith.muli %arg1, %c1_i32 : i32
    %c2_i32 = arith.constant 2 : i32
    %1 = arith.addi %0, %c2_i32 : i32
    %c0_i32 = arith.constant 0 : i32
    %c0_i32_0 = arith.constant 0 : i32
    %c0_i32_1 = arith.constant 0 : i32
    return %arg0, %1, %c0_i32, %c0_i32_0 : i32, i32, i32, i32
  }
  func.func @transform_3(%arg0: i32, %arg1: i32) -> (i32, i32) {
    %c0_i32 = arith.constant 0 : i32
    %c0_i32_0 = arith.constant 0 : i32
    %c0_i32_1 = arith.constant 0 : i32
    return %c0_i32, %c0_i32_0 : i32, i32
  }
  func.func @transform_4(%arg0: i32, %arg1: i32) -> (i32, i32) {
    %c0_i32 = arith.constant 0 : i32
    %c0_i32_0 = arith.constant 0 : i32
    %c0_i32_1 = arith.constant 0 : i32
    return %c0_i32, %c0_i32_0 : i32, i32
  }
  func.func @transform_5(%arg0: i32, %arg1: i32) -> (i32, i32) {
    %c0_i32 = arith.constant 0 : i32
    %c0_i32_0 = arith.constant 0 : i32
    %c0_i32_1 = arith.constant 0 : i32
    return %c0_i32, %c0_i32_0 : i32, i32
  }
  func.func @transform_6(%arg0: i32, %arg1: i32) -> (i32, i32, i32, i32) {
    %c0_i32 = arith.constant 0 : i32
    %c0_i32_0 = arith.constant 0 : i32
    %c0_i32_1 = arith.constant 0 : i32
    return %arg0, %arg1, %c0_i32, %c0_i32_0 : i32, i32, i32, i32
  }
}

module attributes {stable_mosaic.version = 11 : i64} {
  func.func @kernel(%arg0: i32, %arg1: i32, %arg2: memref<1x1x128x256xbf16, #tpu.memory_space<vmem>>, %arg3: memref<1x1x128x256xbf16, #tpu.memory_space<vmem>>, %arg4: memref<1x1x128x256xbf16, #tpu.memory_space<vmem>>, %arg5: memref<48x864xbf16, #tpu.memory_space<vmem>>, %arg6: memref<48x1xf32, #tpu.memory_space<vmem>>, %arg7: memref<48x1xf32, #tpu.memory_space<vmem>>, %arg8: memref<1x1x48x128xbf16, #tpu.memory_space<vmem>>) attributes {dimension_semantics = [#tpu.dimension_semantics<parallel>, #tpu.dimension_semantics<parallel>], iteration_bounds = array<i64: 2, 1>, scalar_prefetch = 0 : i64, scratch_operands = 0 : i64, tpu.core_type = #tpu.core_type<tc>, window_params = [{transform_indices = @transform_0, window_bounds = array<i64: 1, 1, 128, 256>}, {transform_indices = @transform_1, window_bounds = array<i64: 1, 1, 128, 256>}, {transform_indices = @transform_2, window_bounds = array<i64: 1, 1, 128, 256>}, {pipeline_mode = #tpu.pipeline_mode<synchronous>, transform_indices = @transform_3, window_bounds = array<i64: 48, 864>}, {pipeline_mode = #tpu.pipeline_mode<synchronous>, transform_indices = @transform_4, window_bounds = array<i64: 48, 1>}, {pipeline_mode = #tpu.pipeline_mode<synchronous>, transform_indices = @transform_5, window_bounds = array<i64: 48, 1>}, {transform_indices = @transform_6, window_bounds = array<i64: 1, 1, 48, 128>}]} {
    %c0 = arith.constant 0 : index
    %c0_0 = arith.constant 0 : index
    %c0_1 = arith.constant 0 : index
    %c0_2 = arith.constant 0 : index
    %0 = vector.load %arg2[%c0, %c0_0, %c0_1, %c0_2] : memref<1x1x128x256xbf16, #tpu.memory_space<vmem>>, vector<1x1x32x128xbf16>
    %1 = vector.shape_cast %0 : vector<1x1x32x128xbf16> to vector<32x128xbf16>
    %c0_3 = arith.constant 0 : index
    %c0_4 = arith.constant 0 : index
    %c32 = arith.constant 32 : index
    %c0_5 = arith.constant 0 : index
    %2 = vector.load %arg2[%c0_3, %c0_4, %c32, %c0_5] : memref<1x1x128x256xbf16, #tpu.memory_space<vmem>>, vector<1x1x32x128xbf16>
    %3 = vector.shape_cast %2 : vector<1x1x32x128xbf16> to vector<32x128xbf16>
    %c0_6 = arith.constant 0 : index
    %c0_7 = arith.constant 0 : index
    %c0_8 = arith.constant 0 : index
    %c1 = arith.constant 1 : index
    %4 = vector.load %arg2[%c0_6, %c0_7, %c0_8, %c1] : memref<1x1x128x256xbf16, #tpu.memory_space<vmem>>, vector<1x1x32x128xbf16>
    %5 = vector.shape_cast %4 : vector<1x1x32x128xbf16> to vector<32x128xbf16>
    %c0_9 = arith.constant 0 : index
    %c0_10 = arith.constant 0 : index
    %c64 = arith.constant 64 : index
    %c0_11 = arith.constant 0 : index
    %6 = vector.load %arg2[%c0_9, %c0_10, %c64, %c0_11] : memref<1x1x128x256xbf16, #tpu.memory_space<vmem>>, vector<1x1x32x128xbf16>
    %7 = vector.shape_cast %6 : vector<1x1x32x128xbf16> to vector<32x128xbf16>
    %c0_12 = arith.constant 0 : index
    %c0_13 = arith.constant 0 : index
    %c96 = arith.constant 96 : index
    %c0_14 = arith.constant 0 : index
    %8 = vector.load %arg2[%c0_12, %c0_13, %c96, %c0_14] : memref<1x1x128x256xbf16, #tpu.memory_space<vmem>>, vector<1x1x32x128xbf16>
    %9 = vector.shape_cast %8 : vector<1x1x32x128xbf16> to vector<32x128xbf16>
    %c0_15 = arith.constant 0 : index
    %c0_16 = arith.constant 0 : index
    %c64_17 = arith.constant 64 : index
    %c1_18 = arith.constant 1 : index
    %10 = vector.load %arg2[%c0_15, %c0_16, %c64_17, %c1_18] : memref<1x1x128x256xbf16, #tpu.memory_space<vmem>>, vector<1x1x32x128xbf16>
    %11 = vector.shape_cast %10 : vector<1x1x32x128xbf16> to vector<32x128xbf16>
    %c0_19 = arith.constant 0 : index
    %c0_20 = arith.constant 0 : index
    %c0_21 = arith.constant 0 : index
    %c3 = arith.constant 3 : index
    %12 = vector.load %arg2[%c0_19, %c0_20, %c0_21, %c3] : memref<1x1x128x256xbf16, #tpu.memory_space<vmem>>, vector<1x1x32x128xbf16>
    %13 = vector.shape_cast %12 : vector<1x1x32x128xbf16> to vector<32x128xbf16>
    %c0_22 = arith.constant 0 : index
    %c0_23 = arith.constant 0 : index
    %c32_24 = arith.constant 32 : index
    %c3_25 = arith.constant 3 : index
    %14 = vector.load %arg2[%c0_22, %c0_23, %c32_24, %c3_25] : memref<1x1x128x256xbf16, #tpu.memory_space<vmem>>, vector<1x1x32x128xbf16>
    %15 = vector.shape_cast %14 : vector<1x1x32x128xbf16> to vector<32x128xbf16>
    %c0_26 = arith.constant 0 : index
    %c0_27 = arith.constant 0 : index
    %c0_28 = arith.constant 0 : index
    %c4 = arith.constant 4 : index
    %16 = vector.load %arg2[%c0_26, %c0_27, %c0_28, %c4] : memref<1x1x128x256xbf16, #tpu.memory_space<vmem>>, vector<1x1x32x128xbf16>
    %17 = vector.shape_cast %16 : vector<1x1x32x128xbf16> to vector<32x128xbf16>
    %c0_29 = arith.constant 0 : index
    %c0_30 = arith.constant 0 : index
    %c0_31 = arith.constant 0 : index
    %c0_32 = arith.constant 0 : index
    %18 = vector.load %arg3[%c0_29, %c0_30, %c0_31, %c0_32] : memref<1x1x128x256xbf16, #tpu.memory_space<vmem>>, vector<1x1x32x128xbf16>
    %19 = vector.shape_cast %18 : vector<1x1x32x128xbf16> to vector<32x128xbf16>
    %c0_33 = arith.constant 0 : index
    %c0_34 = arith.constant 0 : index
    %c32_35 = arith.constant 32 : index
    %c0_36 = arith.constant 0 : index
    %20 = vector.load %arg3[%c0_33, %c0_34, %c32_35, %c0_36] : memref<1x1x128x256xbf16, #tpu.memory_space<vmem>>, vector<1x1x32x128xbf16>
    %21 = vector.shape_cast %20 : vector<1x1x32x128xbf16> to vector<32x128xbf16>
    %c0_37 = arith.constant 0 : index
    %c0_38 = arith.constant 0 : index
    %c0_39 = arith.constant 0 : index
    %c1_40 = arith.constant 1 : index
    %22 = vector.load %arg3[%c0_37, %c0_38, %c0_39, %c1_40] : memref<1x1x128x256xbf16, #tpu.memory_space<vmem>>, vector<1x1x32x128xbf16>
    %23 = vector.shape_cast %22 : vector<1x1x32x128xbf16> to vector<32x128xbf16>
    %c0_41 = arith.constant 0 : index
    %c0_42 = arith.constant 0 : index
    %c64_43 = arith.constant 64 : index
    %c0_44 = arith.constant 0 : index
    %24 = vector.load %arg3[%c0_41, %c0_42, %c64_43, %c0_44] : memref<1x1x128x256xbf16, #tpu.memory_space<vmem>>, vector<1x1x32x128xbf16>
    %25 = vector.shape_cast %24 : vector<1x1x32x128xbf16> to vector<32x128xbf16>
    %c0_45 = arith.constant 0 : index
    %c0_46 = arith.constant 0 : index
    %c96_47 = arith.constant 96 : index
    %c0_48 = arith.constant 0 : index
    %26 = vector.load %arg3[%c0_45, %c0_46, %c96_47, %c0_48] : memref<1x1x128x256xbf16, #tpu.memory_space<vmem>>, vector<1x1x32x128xbf16>
    %27 = vector.shape_cast %26 : vector<1x1x32x128xbf16> to vector<32x128xbf16>
    %c0_49 = arith.constant 0 : index
    %c0_50 = arith.constant 0 : index
    %c64_51 = arith.constant 64 : index
    %c1_52 = arith.constant 1 : index
    %28 = vector.load %arg3[%c0_49, %c0_50, %c64_51, %c1_52] : memref<1x1x128x256xbf16, #tpu.memory_space<vmem>>, vector<1x1x32x128xbf16>
    %29 = vector.shape_cast %28 : vector<1x1x32x128xbf16> to vector<32x128xbf16>
    %c0_53 = arith.constant 0 : index
    %c0_54 = arith.constant 0 : index
    %c0_55 = arith.constant 0 : index
    %c3_56 = arith.constant 3 : index
    %30 = vector.load %arg3[%c0_53, %c0_54, %c0_55, %c3_56] : memref<1x1x128x256xbf16, #tpu.memory_space<vmem>>, vector<1x1x32x128xbf16>
    %31 = vector.shape_cast %30 : vector<1x1x32x128xbf16> to vector<32x128xbf16>
    %c0_57 = arith.constant 0 : index
    %c0_58 = arith.constant 0 : index
    %c32_59 = arith.constant 32 : index
    %c3_60 = arith.constant 3 : index
    %32 = vector.load %arg3[%c0_57, %c0_58, %c32_59, %c3_60] : memref<1x1x128x256xbf16, #tpu.memory_space<vmem>>, vector<1x1x32x128xbf16>
    %33 = vector.shape_cast %32 : vector<1x1x32x128xbf16> to vector<32x128xbf16>
    %c0_61 = arith.constant 0 : index
    %c0_62 = arith.constant 0 : index
    %c0_63 = arith.constant 0 : index
    %c4_64 = arith.constant 4 : index
    %34 = vector.load %arg3[%c0_61, %c0_62, %c0_63, %c4_64] : memref<1x1x128x256xbf16, #tpu.memory_space<vmem>>, vector<1x1x32x128xbf16>
    %35 = vector.shape_cast %34 : vector<1x1x32x128xbf16> to vector<32x128xbf16>
    %c0_65 = arith.constant 0 : index
    %c0_66 = arith.constant 0 : index
    %c0_67 = arith.constant 0 : index
    %c0_68 = arith.constant 0 : index
    %36 = vector.load %arg4[%c0_65, %c0_66, %c0_67, %c0_68] : memref<1x1x128x256xbf16, #tpu.memory_space<vmem>>, vector<1x1x32x128xbf16>
    %37 = vector.shape_cast %36 : vector<1x1x32x128xbf16> to vector<32x128xbf16>
    %c0_69 = arith.constant 0 : index
    %c0_70 = arith.constant 0 : index
    %c32_71 = arith.constant 32 : index
    %c0_72 = arith.constant 0 : index
    %38 = vector.load %arg4[%c0_69, %c0_70, %c32_71, %c0_72] : memref<1x1x128x256xbf16, #tpu.memory_space<vmem>>, vector<1x1x32x128xbf16>
    %39 = vector.shape_cast %38 : vector<1x1x32x128xbf16> to vector<32x128xbf16>
    %c0_73 = arith.constant 0 : index
    %c0_74 = arith.constant 0 : index
    %c0_75 = arith.constant 0 : index
    %c1_76 = arith.constant 1 : index
    %40 = vector.load %arg4[%c0_73, %c0_74, %c0_75, %c1_76] : memref<1x1x128x256xbf16, #tpu.memory_space<vmem>>, vector<1x1x32x128xbf16>
    %41 = vector.shape_cast %40 : vector<1x1x32x128xbf16> to vector<32x128xbf16>
    %c0_77 = arith.constant 0 : index
    %c0_78 = arith.constant 0 : index
    %c64_79 = arith.constant 64 : index
    %c0_80 = arith.constant 0 : index
    %42 = vector.load %arg4[%c0_77, %c0_78, %c64_79, %c0_80] : memref<1x1x128x256xbf16, #tpu.memory_space<vmem>>, vector<1x1x32x128xbf16>
    %43 = vector.shape_cast %42 : vector<1x1x32x128xbf16> to vector<32x128xbf16>
    %c0_81 = arith.constant 0 : index
    %c0_82 = arith.constant 0 : index
    %c96_83 = arith.constant 96 : index
    %c0_84 = arith.constant 0 : index
    %44 = vector.load %arg4[%c0_81, %c0_82, %c96_83, %c0_84] : memref<1x1x128x256xbf16, #tpu.memory_space<vmem>>, vector<1x1x32x128xbf16>
    %45 = vector.shape_cast %44 : vector<1x1x32x128xbf16> to vector<32x128xbf16>
    %c0_85 = arith.constant 0 : index
    %c0_86 = arith.constant 0 : index
    %c64_87 = arith.constant 64 : index
    %c1_88 = arith.constant 1 : index
    %46 = vector.load %arg4[%c0_85, %c0_86, %c64_87, %c1_88] : memref<1x1x128x256xbf16, #tpu.memory_space<vmem>>, vector<1x1x32x128xbf16>
    %47 = vector.shape_cast %46 : vector<1x1x32x128xbf16> to vector<32x128xbf16>
    %c0_89 = arith.constant 0 : index
    %c0_90 = arith.constant 0 : index
    %c0_91 = arith.constant 0 : index
    %c3_92 = arith.constant 3 : index
    %48 = vector.load %arg4[%c0_89, %c0_90, %c0_91, %c3_92] : memref<1x1x128x256xbf16, #tpu.memory_space<vmem>>, vector<1x1x32x128xbf16>
    %49 = vector.shape_cast %48 : vector<1x1x32x128xbf16> to vector<32x128xbf16>
    %c0_93 = arith.constant 0 : index
    %c0_94 = arith.constant 0 : index
    %c32_95 = arith.constant 32 : index
    %c3_96 = arith.constant 3 : index
    %50 = vector.load %arg4[%c0_93, %c0_94, %c32_95, %c3_96] : memref<1x1x128x256xbf16, #tpu.memory_space<vmem>>, vector<1x1x32x128xbf16>
    %51 = vector.shape_cast %50 : vector<1x1x32x128xbf16> to vector<32x128xbf16>
    %c0_97 = arith.constant 0 : index
    %c0_98 = arith.constant 0 : index
    %c0_99 = arith.constant 0 : index
    %c4_100 = arith.constant 4 : index
    %52 = vector.load %arg4[%c0_97, %c0_98, %c0_99, %c4_100] : memref<1x1x128x256xbf16, #tpu.memory_space<vmem>>, vector<1x1x32x128xbf16>
    %53 = vector.shape_cast %52 : vector<1x1x32x128xbf16> to vector<32x128xbf16>
    %54 = tpu.concatenate %1, %3, %5, %7, %9, %11, %13, %15, %17, %19, %21, %23, %25, %27, %29, %31 in 0 : vector<32x128xbf16>, vector<32x128xbf16>, vector<32x128xbf16>, vector<32x128xbf16>, vector<32x128xbf16>, vector<32x128xbf16>, vector<32x128xbf16>, vector<32x128xbf16>, vector<32x128xbf16>, vector<32x128xbf16>, vector<32x128xbf16>, vector<32x128xbf16>, vector<32x128xbf16>, vector<32x128xbf16>, vector<32x128xbf16>, vector<32x128xbf16> -> vector<512x128xbf16>
    %55 = tpu.concatenate %33, %35, %37, %39, %41, %43, %45, %47, %49, %51, %53 in 0 : vector<32x128xbf16>, vector<32x128xbf16>, vector<32x128xbf16>, vector<32x128xbf16>, vector<32x128xbf16>, vector<32x128xbf16>, vector<32x128xbf16>, vector<32x128xbf16>, vector<32x128xbf16>, vector<32x128xbf16>, vector<32x128xbf16> -> vector<352x128xbf16>
    %56 = tpu.concatenate %54, %55 in 0 : vector<512x128xbf16>, vector<352x128xbf16> -> vector<864x128xbf16>
    %c0_101 = arith.constant 0 : index
    %c0_102 = arith.constant 0 : index
    %57 = vector.load %arg5[%c0_101, %c0_102] : memref<48x864xbf16, #tpu.memory_space<vmem>>, vector<48x864xbf16>
    %cst = arith.constant dense<0.000000e+00> : vector<48x128xf32>
    %58 = tpu.matmul %57, %56, %cst {dimension_numbers = #tpu.dot_dimension_numbers<[1], [0], [0], [1], [0, 0, 1, 1], [], []>} : vector<48x864xbf16>, vector<864x128xbf16>, vector<48x128xf32> -> vector<48x128xf32>
    %c0_103 = arith.constant 0 : index
    %c0_104 = arith.constant 0 : index
    %59 = vector.load %arg6[%c0_103, %c0_104] : memref<48x1xf32, #tpu.memory_space<vmem>>, vector<48x1xf32>
    %60 = vector.broadcast %59 : vector<48x1xf32> to vector<48x128xf32>
    %61 = arith.mulf %58, %60 : vector<48x128xf32>
    %c0_105 = arith.constant 0 : index
    %c0_106 = arith.constant 0 : index
    %62 = vector.load %arg7[%c0_105, %c0_106] : memref<48x1xf32, #tpu.memory_space<vmem>>, vector<48x1xf32>
    %63 = vector.broadcast %62 : vector<48x1xf32> to vector<48x128xf32>
    %64 = arith.addf %61, %63 : vector<48x128xf32>
    %cst_107 = arith.constant 0.000000e+00 : f32
    %65 = vector.broadcast %cst_107 : f32 to vector<48x128xf32>
    %66 = arith.cmpf oge, %64, %65 : vector<48x128xf32>
    %cst_108 = arith.constant 0.00999999977 : f32
    %67 = vector.broadcast %cst_108 : f32 to vector<48x128xf32>
    %68 = arith.mulf %67, %64 : vector<48x128xf32>
    %69 = arith.select %66, %64, %68 : vector<48x128xi1>, vector<48x128xf32>
    %70 = arith.truncf %69 : vector<48x128xf32> to vector<48x128xbf16>
    %c0_109 = arith.constant 0 : index
    %c0_110 = arith.constant 0 : index
    %c0_111 = arith.constant 0 : index
    %c0_112 = arith.constant 0 : index
    %71 = vector.load %arg8[%c0_109, %c0_110, %c0_111, %c0_112] : memref<1x1x48x128xbf16, #tpu.memory_space<vmem>>, vector<1x1x48x128xbf16>
    %72 = vector.shape_cast %71 : vector<1x1x48x128xbf16> to vector<48x128xbf16>
    %73 = vector.shape_cast %70 : vector<48x128xbf16> to vector<1x1x48x128xbf16>
    tpu.vector_store %arg8[%c0_109, %c0_110, %c0_111, %c0_112], %73 {strides = array<i32>} : memref<1x1x48x128xbf16, #tpu.memory_space<vmem>>, vector<1x1x48x128xbf16>,
    return
  }
  func.func @transform_0(%arg0: i32, %arg1: i32) -> (i32, i32, i32, i32) {
    %c2_i32 = arith.constant 2 : i32
    %0 = arith.muli %arg1, %c2_i32 : i32
    %c0_i32 = arith.constant 0 : i32
    %1 = arith.addi %0, %c0_i32 : i32
    %c0_i32_0 = arith.constant 0 : i32
    %c0_i32_1 = arith.constant 0 : i32
    %c0_i32_2 = arith.constant 0 : i32
    return %arg0, %1, %c0_i32_0, %c0_i32_1 : i32, i32, i32, i32
  }
  func.func @transform_1(%arg0: i32, %arg1: i32) -> (i32, i32, i32, i32) {
    %c2_i32 = arith.constant 2 : i32
    %0 = arith.muli %arg1, %c2_i32 : i32
    %c1_i32 = arith.constant 1 : i32
    %1 = arith.addi %0, %c1_i32 : i32
    %c0_i32 = arith.constant 0 : i32
    %c0_i32_0 = arith.constant 0 : i32
    %c0_i32_1 = arith.constant 0 : i32
    return %arg0, %1, %c0_i32, %c0_i32_0 : i32, i32, i32, i32
  }
  func.func @transform_2(%arg0: i32, %arg1: i32) -> (i32, i32, i32, i32) {
    %c2_i32 = arith.constant 2 : i32
    %0 = arith.muli %arg1, %c2_i32 : i32
    %c2_i32_0 = arith.constant 2 : i32
    %1 = arith.addi %0, %c2_i32_0 : i32
    %c0_i32 = arith.constant 0 : i32
    %c0_i32_1 = arith.constant 0 : i32
    %c0_i32_2 = arith.constant 0 : i32
    return %arg0, %1, %c0_i32, %c0_i32_1 : i32, i32, i32, i32
  }
  func.func @transform_3(%arg0: i32, %arg1: i32) -> (i32, i32) {
    %c0_i32 = arith.constant 0 : i32
    %c0_i32_0 = arith.constant 0 : i32
    %c0_i32_1 = arith.constant 0 : i32
    return %c0_i32, %c0_i32_0 : i32, i32
  }
  func.func @transform_4(%arg0: i32, %arg1: i32) -> (i32, i32) {
    %c0_i32 = arith.constant 0 : i32
    %c0_i32_0 = arith.constant 0 : i32
    %c0_i32_1 = arith.constant 0 : i32
    return %c0_i32, %c0_i32_0 : i32, i32
  }
  func.func @transform_5(%arg0: i32, %arg1: i32) -> (i32, i32) {
    %c0_i32 = arith.constant 0 : i32
    %c0_i32_0 = arith.constant 0 : i32
    %c0_i32_1 = arith.constant 0 : i32
    return %c0_i32, %c0_i32_0 : i32, i32
  }
  func.func @transform_6(%arg0: i32, %arg1: i32) -> (i32, i32, i32, i32) {
    %c0_i32 = arith.constant 0 : i32
    %c0_i32_0 = arith.constant 0 : i32
    %c0_i32_1 = arith.constant 0 : i32
    return %arg0, %arg1, %c0_i32, %c0_i32_0 : i32, i32, i32, i32
  }
}

module attributes {stable_mosaic.version = 11 : i64} {
  func.func @kernel(%arg0: i32, %arg1: i32, %arg2: memref<1x1x48x256xbf16, #tpu.memory_space<vmem>>, %arg3: memref<1x1x48x256xbf16, #tpu.memory_space<vmem>>, %arg4: memref<1x1x48x256xbf16, #tpu.memory_space<vmem>>, %arg5: memref<48x1296xbf16, #tpu.memory_space<vmem>>, %arg6: memref<48x1xf32, #tpu.memory_space<vmem>>, %arg7: memref<48x1xf32, #tpu.memory_space<vmem>>, %arg8: memref<1x1x48x128xbf16, #tpu.memory_space<vmem>>) attributes {dimension_semantics = [#tpu.dimension_semantics<parallel>, #tpu.dimension_semantics<parallel>], iteration_bounds = array<i64: 2, 1>, scalar_prefetch = 0 : i64, scratch_operands = 0 : i64, tpu.core_type = #tpu.core_type<tc>, window_params = [{transform_indices = @transform_0, window_bounds = array<i64: 1, 1, 48, 256>}, {transform_indices = @transform_1, window_bounds = array<i64: 1, 1, 48, 256>}, {transform_indices = @transform_2, window_bounds = array<i64: 1, 1, 48, 256>}, {pipeline_mode = #tpu.pipeline_mode<synchronous>, transform_indices = @transform_3, window_bounds = array<i64: 48, 1296>}, {pipeline_mode = #tpu.pipeline_mode<synchronous>, transform_indices = @transform_4, window_bounds = array<i64: 48, 1>}, {pipeline_mode = #tpu.pipeline_mode<synchronous>, transform_indices = @transform_5, window_bounds = array<i64: 48, 1>}, {transform_indices = @transform_6, window_bounds = array<i64: 1, 1, 48, 128>}]} {
    %c0 = arith.constant 0 : index
    %c0_0 = arith.constant 0 : index
    %c0_1 = arith.constant 0 : index
    %c0_2 = arith.constant 0 : index
    %0 = vector.load %arg2[%c0, %c0_0, %c0_1, %c0_2] : memref<1x1x48x256xbf16, #tpu.memory_space<vmem>>, vector<1x1x48x128xbf16>
    %1 = vector.shape_cast %0 : vector<1x1x48x128xbf16> to vector<48x128xbf16>
    %c0_3 = arith.constant 0 : index
    %c0_4 = arith.constant 0 : index
    %c0_5 = arith.constant 0 : index
    %c1 = arith.constant 1 : index
    %2 = vector.load %arg2[%c0_3, %c0_4, %c0_5, %c1] : memref<1x1x48x256xbf16, #tpu.memory_space<vmem>>, vector<1x1x48x128xbf16>
    %3 = vector.shape_cast %2 : vector<1x1x48x128xbf16> to vector<48x128xbf16>
    %c0_6 = arith.constant 0 : index
    %c0_7 = arith.constant 0 : index
    %c0_8 = arith.constant 0 : index
    %c2 = arith.constant 2 : index
    %4 = vector.load %arg2[%c0_6, %c0_7, %c0_8, %c2] : memref<1x1x48x256xbf16, #tpu.memory_space<vmem>>, vector<1x1x48x128xbf16>
    %5 = vector.shape_cast %4 : vector<1x1x48x128xbf16> to vector<48x128xbf16>
    %c0_9 = arith.constant 0 : index
    %c0_10 = arith.constant 0 : index
    %c0_11 = arith.constant 0 : index
    %c4 = arith.constant 4 : index
    %6 = vector.load %arg2[%c0_9, %c0_10, %c0_11, %c4] : memref<1x1x48x256xbf16, #tpu.memory_space<vmem>>, vector<1x1x48x128xbf16>
    %7 = vector.shape_cast %6 : vector<1x1x48x128xbf16> to vector<48x128xbf16>
    %c0_12 = arith.constant 0 : index
    %c0_13 = arith.constant 0 : index
    %c0_14 = arith.constant 0 : index
    %c5 = arith.constant 5 : index
    %8 = vector.load %arg2[%c0_12, %c0_13, %c0_14, %c5] : memref<1x1x48x256xbf16, #tpu.memory_space<vmem>>, vector<1x1x48x128xbf16>
    %9 = vector.shape_cast %8 : vector<1x1x48x128xbf16> to vector<48x128xbf16>
    %c0_15 = arith.constant 0 : index
    %c0_16 = arith.constant 0 : index
    %c0_17 = arith.constant 0 : index
    %c6 = arith.constant 6 : index
    %10 = vector.load %arg2[%c0_15, %c0_16, %c0_17, %c6] : memref<1x1x48x256xbf16, #tpu.memory_space<vmem>>, vector<1x1x48x128xbf16>
    %11 = vector.shape_cast %10 : vector<1x1x48x128xbf16> to vector<48x128xbf16>
    %c0_18 = arith.constant 0 : index
    %c0_19 = arith.constant 0 : index
    %c0_20 = arith.constant 0 : index
    %c8 = arith.constant 8 : index
    %12 = vector.load %arg2[%c0_18, %c0_19, %c0_20, %c8] : memref<1x1x48x256xbf16, #tpu.memory_space<vmem>>, vector<1x1x48x128xbf16>
    %13 = vector.shape_cast %12 : vector<1x1x48x128xbf16> to vector<48x128xbf16>
    %c0_21 = arith.constant 0 : index
    %c0_22 = arith.constant 0 : index
    %c0_23 = arith.constant 0 : index
    %c9 = arith.constant 9 : index
    %14 = vector.load %arg2[%c0_21, %c0_22, %c0_23, %c9] : memref<1x1x48x256xbf16, #tpu.memory_space<vmem>>, vector<1x1x48x128xbf16>
    %15 = vector.shape_cast %14 : vector<1x1x48x128xbf16> to vector<48x128xbf16>
    %c0_24 = arith.constant 0 : index
    %c0_25 = arith.constant 0 : index
    %c0_26 = arith.constant 0 : index
    %c10 = arith.constant 10 : index
    %16 = vector.load %arg2[%c0_24, %c0_25, %c0_26, %c10] : memref<1x1x48x256xbf16, #tpu.memory_space<vmem>>, vector<1x1x48x128xbf16>
    %17 = vector.shape_cast %16 : vector<1x1x48x128xbf16> to vector<48x128xbf16>
    %c0_27 = arith.constant 0 : index
    %c0_28 = arith.constant 0 : index
    %c0_29 = arith.constant 0 : index
    %c0_30 = arith.constant 0 : index
    %18 = vector.load %arg3[%c0_27, %c0_28, %c0_29, %c0_30] : memref<1x1x48x256xbf16, #tpu.memory_space<vmem>>, vector<1x1x48x128xbf16>
    %19 = vector.shape_cast %18 : vector<1x1x48x128xbf16> to vector<48x128xbf16>
    %c0_31 = arith.constant 0 : index
    %c0_32 = arith.constant 0 : index
    %c0_33 = arith.constant 0 : index
    %c1_34 = arith.constant 1 : index
    %20 = vector.load %arg3[%c0_31, %c0_32, %c0_33, %c1_34] : memref<1x1x48x256xbf16, #tpu.memory_space<vmem>>, vector<1x1x48x128xbf16>
    %21 = vector.shape_cast %20 : vector<1x1x48x128xbf16> to vector<48x128xbf16>
    %c0_35 = arith.constant 0 : index
    %c0_36 = arith.constant 0 : index
    %c0_37 = arith.constant 0 : index
    %c2_38 = arith.constant 2 : index
    %22 = vector.load %arg3[%c0_35, %c0_36, %c0_37, %c2_38] : memref<1x1x48x256xbf16, #tpu.memory_space<vmem>>, vector<1x1x48x128xbf16>
    %23 = vector.shape_cast %22 : vector<1x1x48x128xbf16> to vector<48x128xbf16>
    %c0_39 = arith.constant 0 : index
    %c0_40 = arith.constant 0 : index
    %c0_41 = arith.constant 0 : index
    %c4_42 = arith.constant 4 : index
    %24 = vector.load %arg3[%c0_39, %c0_40, %c0_41, %c4_42] : memref<1x1x48x256xbf16, #tpu.memory_space<vmem>>, vector<1x1x48x128xbf16>
    %25 = vector.shape_cast %24 : vector<1x1x48x128xbf16> to vector<48x128xbf16>
    %c0_43 = arith.constant 0 : index
    %c0_44 = arith.constant 0 : index
    %c0_45 = arith.constant 0 : index
    %c5_46 = arith.constant 5 : index
    %26 = vector.load %arg3[%c0_43, %c0_44, %c0_45, %c5_46] : memref<1x1x48x256xbf16, #tpu.memory_space<vmem>>, vector<1x1x48x128xbf16>
    %27 = vector.shape_cast %26 : vector<1x1x48x128xbf16> to vector<48x128xbf16>
    %c0_47 = arith.constant 0 : index
    %c0_48 = arith.constant 0 : index
    %c0_49 = arith.constant 0 : index
    %c6_50 = arith.constant 6 : index
    %28 = vector.load %arg3[%c0_47, %c0_48, %c0_49, %c6_50] : memref<1x1x48x256xbf16, #tpu.memory_space<vmem>>, vector<1x1x48x128xbf16>
    %29 = vector.shape_cast %28 : vector<1x1x48x128xbf16> to vector<48x128xbf16>
    %c0_51 = arith.constant 0 : index
    %c0_52 = arith.constant 0 : index
    %c0_53 = arith.constant 0 : index
    %c8_54 = arith.constant 8 : index
    %30 = vector.load %arg3[%c0_51, %c0_52, %c0_53, %c8_54] : memref<1x1x48x256xbf16, #tpu.memory_space<vmem>>, vector<1x1x48x128xbf16>
    %31 = vector.shape_cast %30 : vector<1x1x48x128xbf16> to vector<48x128xbf16>
    %c0_55 = arith.constant 0 : index
    %c0_56 = arith.constant 0 : index
    %c0_57 = arith.constant 0 : index
    %c9_58 = arith.constant 9 : index
    %32 = vector.load %arg3[%c0_55, %c0_56, %c0_57, %c9_58] : memref<1x1x48x256xbf16, #tpu.memory_space<vmem>>, vector<1x1x48x128xbf16>
    %33 = vector.shape_cast %32 : vector<1x1x48x128xbf16> to vector<48x128xbf16>
    %c0_59 = arith.constant 0 : index
    %c0_60 = arith.constant 0 : index
    %c0_61 = arith.constant 0 : index
    %c10_62 = arith.constant 10 : index
    %34 = vector.load %arg3[%c0_59, %c0_60, %c0_61, %c10_62] : memref<1x1x48x256xbf16, #tpu.memory_space<vmem>>, vector<1x1x48x128xbf16>
    %35 = vector.shape_cast %34 : vector<1x1x48x128xbf16> to vector<48x128xbf16>
    %c0_63 = arith.constant 0 : index
    %c0_64 = arith.constant 0 : index
    %c0_65 = arith.constant 0 : index
    %c0_66 = arith.constant 0 : index
    %36 = vector.load %arg4[%c0_63, %c0_64, %c0_65, %c0_66] : memref<1x1x48x256xbf16, #tpu.memory_space<vmem>>, vector<1x1x48x128xbf16>
    %37 = vector.shape_cast %36 : vector<1x1x48x128xbf16> to vector<48x128xbf16>
    %c0_67 = arith.constant 0 : index
    %c0_68 = arith.constant 0 : index
    %c0_69 = arith.constant 0 : index
    %c1_70 = arith.constant 1 : index
    %38 = vector.load %arg4[%c0_67, %c0_68, %c0_69, %c1_70] : memref<1x1x48x256xbf16, #tpu.memory_space<vmem>>, vector<1x1x48x128xbf16>
    %39 = vector.shape_cast %38 : vector<1x1x48x128xbf16> to vector<48x128xbf16>
    %c0_71 = arith.constant 0 : index
    %c0_72 = arith.constant 0 : index
    %c0_73 = arith.constant 0 : index
    %c2_74 = arith.constant 2 : index
    %40 = vector.load %arg4[%c0_71, %c0_72, %c0_73, %c2_74] : memref<1x1x48x256xbf16, #tpu.memory_space<vmem>>, vector<1x1x48x128xbf16>
    %41 = vector.shape_cast %40 : vector<1x1x48x128xbf16> to vector<48x128xbf16>
    %c0_75 = arith.constant 0 : index
    %c0_76 = arith.constant 0 : index
    %c0_77 = arith.constant 0 : index
    %c4_78 = arith.constant 4 : index
    %42 = vector.load %arg4[%c0_75, %c0_76, %c0_77, %c4_78] : memref<1x1x48x256xbf16, #tpu.memory_space<vmem>>, vector<1x1x48x128xbf16>
    %43 = vector.shape_cast %42 : vector<1x1x48x128xbf16> to vector<48x128xbf16>
    %c0_79 = arith.constant 0 : index
    %c0_80 = arith.constant 0 : index
    %c0_81 = arith.constant 0 : index
    %c5_82 = arith.constant 5 : index
    %44 = vector.load %arg4[%c0_79, %c0_80, %c0_81, %c5_82] : memref<1x1x48x256xbf16, #tpu.memory_space<vmem>>, vector<1x1x48x128xbf16>
    %45 = vector.shape_cast %44 : vector<1x1x48x128xbf16> to vector<48x128xbf16>
    %c0_83 = arith.constant 0 : index
    %c0_84 = arith.constant 0 : index
    %c0_85 = arith.constant 0 : index
    %c6_86 = arith.constant 6 : index
    %46 = vector.load %arg4[%c0_83, %c0_84, %c0_85, %c6_86] : memref<1x1x48x256xbf16, #tpu.memory_space<vmem>>, vector<1x1x48x128xbf16>
    %47 = vector.shape_cast %46 : vector<1x1x48x128xbf16> to vector<48x128xbf16>
    %c0_87 = arith.constant 0 : index
    %c0_88 = arith.constant 0 : index
    %c0_89 = arith.constant 0 : index
    %c8_90 = arith.constant 8 : index
    %48 = vector.load %arg4[%c0_87, %c0_88, %c0_89, %c8_90] : memref<1x1x48x256xbf16, #tpu.memory_space<vmem>>, vector<1x1x48x128xbf16>
    %49 = vector.shape_cast %48 : vector<1x1x48x128xbf16> to vector<48x128xbf16>
    %c0_91 = arith.constant 0 : index
    %c0_92 = arith.constant 0 : index
    %c0_93 = arith.constant 0 : index
    %c9_94 = arith.constant 9 : index
    %50 = vector.load %arg4[%c0_91, %c0_92, %c0_93, %c9_94] : memref<1x1x48x256xbf16, #tpu.memory_space<vmem>>, vector<1x1x48x128xbf16>
    %51 = vector.shape_cast %50 : vector<1x1x48x128xbf16> to vector<48x128xbf16>
    %c0_95 = arith.constant 0 : index
    %c0_96 = arith.constant 0 : index
    %c0_97 = arith.constant 0 : index
    %c10_98 = arith.constant 10 : index
    %52 = vector.load %arg4[%c0_95, %c0_96, %c0_97, %c10_98] : memref<1x1x48x256xbf16, #tpu.memory_space<vmem>>, vector<1x1x48x128xbf16>
    %53 = vector.shape_cast %52 : vector<1x1x48x128xbf16> to vector<48x128xbf16>
    %54 = tpu.concatenate %1, %3, %5, %7, %9, %11, %13, %15, %17, %19, %21, %23, %25, %27, %29, %31 in 0 : vector<48x128xbf16>, vector<48x128xbf16>, vector<48x128xbf16>, vector<48x128xbf16>, vector<48x128xbf16>, vector<48x128xbf16>, vector<48x128xbf16>, vector<48x128xbf16>, vector<48x128xbf16>, vector<48x128xbf16>, vector<48x128xbf16>, vector<48x128xbf16>, vector<48x128xbf16>, vector<48x128xbf16>, vector<48x128xbf16>, vector<48x128xbf16> -> vector<768x128xbf16>
    %55 = tpu.concatenate %33, %35, %37, %39, %41, %43, %45, %47, %49, %51, %53 in 0 : vector<48x128xbf16>, vector<48x128xbf16>, vector<48x128xbf16>, vector<48x128xbf16>, vector<48x128xbf16>, vector<48x128xbf16>, vector<48x128xbf16>, vector<48x128xbf16>, vector<48x128xbf16>, vector<48x128xbf16>, vector<48x128xbf16> -> vector<528x128xbf16>
    %56 = tpu.concatenate %54, %55 in 0 : vector<768x128xbf16>, vector<528x128xbf16> -> vector<1296x128xbf16>
    %c0_99 = arith.constant 0 : index
    %c0_100 = arith.constant 0 : index
    %57 = vector.load %arg5[%c0_99, %c0_100] : memref<48x1296xbf16, #tpu.memory_space<vmem>>, vector<48x1296xbf16>
    %cst = arith.constant dense<0.000000e+00> : vector<48x128xf32>
    %58 = tpu.matmul %57, %56, %cst {dimension_numbers = #tpu.dot_dimension_numbers<[1], [0], [0], [1], [0, 0, 1, 1], [], []>} : vector<48x1296xbf16>, vector<1296x128xbf16>, vector<48x128xf32> -> vector<48x128xf32>
    %c0_101 = arith.constant 0 : index
    %c0_102 = arith.constant 0 : index
    %59 = vector.load %arg6[%c0_101, %c0_102] : memref<48x1xf32, #tpu.memory_space<vmem>>, vector<48x1xf32>
    %60 = vector.broadcast %59 : vector<48x1xf32> to vector<48x128xf32>
    %61 = arith.mulf %58, %60 : vector<48x128xf32>
    %c0_103 = arith.constant 0 : index
    %c0_104 = arith.constant 0 : index
    %62 = vector.load %arg7[%c0_103, %c0_104] : memref<48x1xf32, #tpu.memory_space<vmem>>, vector<48x1xf32>
    %63 = vector.broadcast %62 : vector<48x1xf32> to vector<48x128xf32>
    %64 = arith.addf %61, %63 : vector<48x128xf32>
    %cst_105 = arith.constant 0.000000e+00 : f32
    %65 = vector.broadcast %cst_105 : f32 to vector<48x128xf32>
    %66 = arith.cmpf oge, %64, %65 : vector<48x128xf32>
    %cst_106 = arith.constant 0.00999999977 : f32
    %67 = vector.broadcast %cst_106 : f32 to vector<48x128xf32>
    %68 = arith.mulf %67, %64 : vector<48x128xf32>
    %69 = arith.select %66, %64, %68 : vector<48x128xi1>, vector<48x128xf32>
    %70 = arith.truncf %69 : vector<48x128xf32> to vector<48x128xbf16>
    %c0_107 = arith.constant 0 : index
    %c0_108 = arith.constant 0 : index
    %c0_109 = arith.constant 0 : index
    %c0_110 = arith.constant 0 : index
    %71 = vector.load %arg8[%c0_107, %c0_108, %c0_109, %c0_110] : memref<1x1x48x128xbf16, #tpu.memory_space<vmem>>, vector<1x1x48x128xbf16>
    %72 = vector.shape_cast %71 : vector<1x1x48x128xbf16> to vector<48x128xbf16>
    %73 = vector.shape_cast %70 : vector<48x128xbf16> to vector<1x1x48x128xbf16>
    tpu.vector_store %arg8[%c0_107, %c0_108, %c0_109, %c0_110], %73 {strides = array<i32>} : memref<1x1x48x128xbf16, #tpu.memory_space<vmem>>, vector<1x1x48x128xbf16>,
    return
  }
  func.func @transform_0(%arg0: i32, %arg1: i32) -> (i32, i32, i32, i32) {
    %c1_i32 = arith.constant 1 : i32
    %0 = arith.muli %arg1, %c1_i32 : i32
    %c0_i32 = arith.constant 0 : i32
    %1 = arith.addi %0, %c0_i32 : i32
    %c0_i32_0 = arith.constant 0 : i32
    %c0_i32_1 = arith.constant 0 : i32
    %c0_i32_2 = arith.constant 0 : i32
    return %arg0, %1, %c0_i32_0, %c0_i32_1 : i32, i32, i32, i32
  }
  func.func @transform_1(%arg0: i32, %arg1: i32) -> (i32, i32, i32, i32) {
    %c1_i32 = arith.constant 1 : i32
    %0 = arith.muli %arg1, %c1_i32 : i32
    %c1_i32_0 = arith.constant 1 : i32
    %1 = arith.addi %0, %c1_i32_0 : i32
    %c0_i32 = arith.constant 0 : i32
    %c0_i32_1 = arith.constant 0 : i32
    %c0_i32_2 = arith.constant 0 : i32
    return %arg0, %1, %c0_i32, %c0_i32_1 : i32, i32, i32, i32
  }
  func.func @transform_2(%arg0: i32, %arg1: i32) -> (i32, i32, i32, i32) {
    %c1_i32 = arith.constant 1 : i32
    %0 = arith.muli %arg1, %c1_i32 : i32
    %c2_i32 = arith.constant 2 : i32
    %1 = arith.addi %0, %c2_i32 : i32
    %c0_i32 = arith.constant 0 : i32
    %c0_i32_0 = arith.constant 0 : i32
    %c0_i32_1 = arith.constant 0 : i32
    return %arg0, %1, %c0_i32, %c0_i32_0 : i32, i32, i32, i32
  }
  func.func @transform_3(%arg0: i32, %arg1: i32) -> (i32, i32) {
    %c0_i32 = arith.constant 0 : i32
    %c0_i32_0 = arith.constant 0 : i32
    %c0_i32_1 = arith.constant 0 : i32
    return %c0_i32, %c0_i32_0 : i32, i32
  }
  func.func @transform_4(%arg0: i32, %arg1: i32) -> (i32, i32) {
    %c0_i32 = arith.constant 0 : i32
    %c0_i32_0 = arith.constant 0 : i32
    %c0_i32_1 = arith.constant 0 : i32
    return %c0_i32, %c0_i32_0 : i32, i32
  }
  func.func @transform_5(%arg0: i32, %arg1: i32) -> (i32, i32) {
    %c0_i32 = arith.constant 0 : i32
    %c0_i32_0 = arith.constant 0 : i32
    %c0_i32_1 = arith.constant 0 : i32
    return %c0_i32, %c0_i32_0 : i32, i32
  }
  func.func @transform_6(%arg0: i32, %arg1: i32) -> (i32, i32, i32, i32) {
    %c0_i32 = arith.constant 0 : i32
    %c0_i32_0 = arith.constant 0 : i32
    %c0_i32_1 = arith.constant 0 : i32
    return %arg0, %arg1, %c0_i32, %c0_i32_0 : i32, i32, i32, i32
  }
}

module attributes {stable_mosaic.version = 11 : i64} {
  func.func @kernel(%arg0: i32, %arg1: i32, %arg2: memref<1x1x80x128xbf16, #tpu.memory_space<vmem>>, %arg3: memref<48x80xbf16, #tpu.memory_space<vmem>>, %arg4: memref<48x1xf32, #tpu.memory_space<vmem>>, %arg5: memref<48x1xf32, #tpu.memory_space<vmem>>, %arg6: memref<1x1x48x128xbf16, #tpu.memory_space<vmem>>) attributes {dimension_semantics = [#tpu.dimension_semantics<parallel>, #tpu.dimension_semantics<parallel>], iteration_bounds = array<i64: 2, 1>, scalar_prefetch = 0 : i64, scratch_operands = 0 : i64, tpu.core_type = #tpu.core_type<tc>, window_params = [{transform_indices = @transform_0, window_bounds = array<i64: 1, 1, 80, 128>}, {pipeline_mode = #tpu.pipeline_mode<synchronous>, transform_indices = @transform_1, window_bounds = array<i64: 48, 80>}, {pipeline_mode = #tpu.pipeline_mode<synchronous>, transform_indices = @transform_2, window_bounds = array<i64: 48, 1>}, {pipeline_mode = #tpu.pipeline_mode<synchronous>, transform_indices = @transform_3, window_bounds = array<i64: 48, 1>}, {transform_indices = @transform_4, window_bounds = array<i64: 1, 1, 48, 128>}]} {
    %c0 = arith.constant 0 : index
    %c0_0 = arith.constant 0 : index
    %c0_1 = arith.constant 0 : index
    %c0_2 = arith.constant 0 : index
    %0 = vector.load %arg2[%c0, %c0_0, %c0_1, %c0_2] : memref<1x1x80x128xbf16, #tpu.memory_space<vmem>>, vector<1x1x80x128xbf16>
    %1 = vector.shape_cast %0 : vector<1x1x80x128xbf16> to vector<80x128xbf16>
    %c0_3 = arith.constant 0 : index
    %c0_4 = arith.constant 0 : index
    %2 = vector.load %arg3[%c0_3, %c0_4] : memref<48x80xbf16, #tpu.memory_space<vmem>>, vector<48x80xbf16>
    %cst = arith.constant dense<0.000000e+00> : vector<48x128xf32>
    %3 = tpu.matmul %2, %1, %cst {dimension_numbers = #tpu.dot_dimension_numbers<[1], [0], [0], [1], [0, 0, 1, 1], [], []>} : vector<48x80xbf16>, vector<80x128xbf16>, vector<48x128xf32> -> vector<48x128xf32>
    %c0_5 = arith.constant 0 : index
    %c0_6 = arith.constant 0 : index
    %4 = vector.load %arg4[%c0_5, %c0_6] : memref<48x1xf32, #tpu.memory_space<vmem>>, vector<48x1xf32>
    %5 = vector.broadcast %4 : vector<48x1xf32> to vector<48x128xf32>
    %6 = arith.mulf %3, %5 : vector<48x128xf32>
    %c0_7 = arith.constant 0 : index
    %c0_8 = arith.constant 0 : index
    %7 = vector.load %arg5[%c0_7, %c0_8] : memref<48x1xf32, #tpu.memory_space<vmem>>, vector<48x1xf32>
    %8 = vector.broadcast %7 : vector<48x1xf32> to vector<48x128xf32>
    %9 = arith.addf %6, %8 : vector<48x128xf32>
    %10 = arith.truncf %9 : vector<48x128xf32> to vector<48x128xbf16>
    %c0_9 = arith.constant 0 : index
    %c0_10 = arith.constant 0 : index
    %c0_11 = arith.constant 0 : index
    %c0_12 = arith.constant 0 : index
    %11 = vector.load %arg6[%c0_9, %c0_10, %c0_11, %c0_12] : memref<1x1x48x128xbf16, #tpu.memory_space<vmem>>, vector<1x1x48x128xbf16>
    %12 = vector.shape_cast %11 : vector<1x1x48x128xbf16> to vector<48x128xbf16>
    %13 = vector.shape_cast %10 : vector<48x128xbf16> to vector<1x1x48x128xbf16>
    tpu.vector_store %arg6[%c0_9, %c0_10, %c0_11, %c0_12], %13 {strides = array<i32>} : memref<1x1x48x128xbf16, #tpu.memory_space<vmem>>, vector<1x1x48x128xbf16>,
    return
  }
  func.func @transform_0(%arg0: i32, %arg1: i32) -> (i32, i32, i32, i32) {
    %c1_i32 = arith.constant 1 : i32
    %0 = arith.muli %arg1, %c1_i32 : i32
    %c0_i32 = arith.constant 0 : i32
    %1 = arith.addi %0, %c0_i32 : i32
    %c0_i32_0 = arith.constant 0 : i32
    %c0_i32_1 = arith.constant 0 : i32
    %c0_i32_2 = arith.constant 0 : i32
    return %arg0, %1, %c0_i32_0, %c0_i32_1 : i32, i32, i32, i32
  }
  func.func @transform_1(%arg0: i32, %arg1: i32) -> (i32, i32) {
    %c0_i32 = arith.constant 0 : i32
    %c0_i32_0 = arith.constant 0 : i32
    %c0_i32_1 = arith.constant 0 : i32
    return %c0_i32, %c0_i32_0 : i32, i32
  }
  func.func @transform_2(%arg0: i32, %arg1: i32) -> (i32, i32) {
    %c0_i32 = arith.constant 0 : i32
    %c0_i32_0 = arith.constant 0 : i32
    %c0_i32_1 = arith.constant 0 : i32
    return %c0_i32, %c0_i32_0 : i32, i32
  }
  func.func @transform_3(%arg0: i32, %arg1: i32) -> (i32, i32) {
    %c0_i32 = arith.constant 0 : i32
    %c0_i32_0 = arith.constant 0 : i32
    %c0_i32_1 = arith.constant 0 : i32
    return %c0_i32, %c0_i32_0 : i32, i32
  }
  func.func @transform_4(%arg0: i32, %arg1: i32) -> (i32, i32, i32, i32) {
    %c0_i32 = arith.constant 0 : i32
    %c0_i32_0 = arith.constant 0 : i32
    %c0_i32_1 = arith.constant 0 : i32
    return %arg0, %arg1, %c0_i32, %c0_i32_0 : i32, i32, i32, i32
  }
}

module attributes {stable_mosaic.version = 11 : i64} {
  func.func @kernel(%arg0: i32, %arg1: i32, %arg2: memref<1x1x160x128xbf16, #tpu.memory_space<vmem>>, %arg3: memref<80x160xbf16, #tpu.memory_space<vmem>>, %arg4: memref<80x1xf32, #tpu.memory_space<vmem>>, %arg5: memref<80x1xf32, #tpu.memory_space<vmem>>, %arg6: memref<1x1x80x128xbf16, #tpu.memory_space<vmem>>) attributes {dimension_semantics = [#tpu.dimension_semantics<parallel>, #tpu.dimension_semantics<parallel>], iteration_bounds = array<i64: 2, 1>, scalar_prefetch = 0 : i64, scratch_operands = 0 : i64, tpu.core_type = #tpu.core_type<tc>, window_params = [{transform_indices = @transform_0, window_bounds = array<i64: 1, 1, 160, 128>}, {pipeline_mode = #tpu.pipeline_mode<synchronous>, transform_indices = @transform_1, window_bounds = array<i64: 80, 160>}, {pipeline_mode = #tpu.pipeline_mode<synchronous>, transform_indices = @transform_2, window_bounds = array<i64: 80, 1>}, {pipeline_mode = #tpu.pipeline_mode<synchronous>, transform_indices = @transform_3, window_bounds = array<i64: 80, 1>}, {transform_indices = @transform_4, window_bounds = array<i64: 1, 1, 80, 128>}]} {
    %c0 = arith.constant 0 : index
    %c0_0 = arith.constant 0 : index
    %c0_1 = arith.constant 0 : index
    %c0_2 = arith.constant 0 : index
    %0 = vector.load %arg2[%c0, %c0_0, %c0_1, %c0_2] : memref<1x1x160x128xbf16, #tpu.memory_space<vmem>>, vector<1x1x160x128xbf16>
    %1 = vector.shape_cast %0 : vector<1x1x160x128xbf16> to vector<160x128xbf16>
    %c0_3 = arith.constant 0 : index
    %c0_4 = arith.constant 0 : index
    %2 = vector.load %arg3[%c0_3, %c0_4] : memref<80x160xbf16, #tpu.memory_space<vmem>>, vector<80x160xbf16>
    %cst = arith.constant dense<0.000000e+00> : vector<80x128xf32>
    %3 = tpu.matmul %2, %1, %cst {dimension_numbers = #tpu.dot_dimension_numbers<[1], [0], [0], [1], [0, 0, 1, 1], [], []>} : vector<80x160xbf16>, vector<160x128xbf16>, vector<80x128xf32> -> vector<80x128xf32>
    %c0_5 = arith.constant 0 : index
    %c0_6 = arith.constant 0 : index
    %4 = vector.load %arg4[%c0_5, %c0_6] : memref<80x1xf32, #tpu.memory_space<vmem>>, vector<80x1xf32>
    %5 = vector.broadcast %4 : vector<80x1xf32> to vector<80x128xf32>
    %6 = arith.mulf %3, %5 : vector<80x128xf32>
    %c0_7 = arith.constant 0 : index
    %c0_8 = arith.constant 0 : index
    %7 = vector.load %arg5[%c0_7, %c0_8] : memref<80x1xf32, #tpu.memory_space<vmem>>, vector<80x1xf32>
    %8 = vector.broadcast %7 : vector<80x1xf32> to vector<80x128xf32>
    %9 = arith.addf %6, %8 : vector<80x128xf32>
    %cst_9 = arith.constant 0.000000e+00 : f32
    %10 = vector.broadcast %cst_9 : f32 to vector<80x128xf32>
    %11 = arith.cmpf oge, %9, %10 : vector<80x128xf32>
    %cst_10 = arith.constant 0.00999999977 : f32
    %12 = vector.broadcast %cst_10 : f32 to vector<80x128xf32>
    %13 = arith.mulf %12, %9 : vector<80x128xf32>
    %14 = arith.select %11, %9, %13 : vector<80x128xi1>, vector<80x128xf32>
    %15 = arith.truncf %14 : vector<80x128xf32> to vector<80x128xbf16>
    %c0_11 = arith.constant 0 : index
    %c0_12 = arith.constant 0 : index
    %c0_13 = arith.constant 0 : index
    %c0_14 = arith.constant 0 : index
    %16 = vector.load %arg6[%c0_11, %c0_12, %c0_13, %c0_14] : memref<1x1x80x128xbf16, #tpu.memory_space<vmem>>, vector<1x1x80x128xbf16>
    %17 = vector.shape_cast %16 : vector<1x1x80x128xbf16> to vector<80x128xbf16>
    %18 = vector.shape_cast %15 : vector<80x128xbf16> to vector<1x1x80x128xbf16>
    tpu.vector_store %arg6[%c0_11, %c0_12, %c0_13, %c0_14], %18 {strides = array<i32>} : memref<1x1x80x128xbf16, #tpu.memory_space<vmem>>, vector<1x1x80x128xbf16>,
    return
  }
  func.func @transform_0(%arg0: i32, %arg1: i32) -> (i32, i32, i32, i32) {
    %c1_i32 = arith.constant 1 : i32
    %0 = arith.muli %arg1, %c1_i32 : i32
    %c0_i32 = arith.constant 0 : i32
    %1 = arith.addi %0, %c0_i32 : i32
    %c0_i32_0 = arith.constant 0 : i32
    %c0_i32_1 = arith.constant 0 : i32
    %c0_i32_2 = arith.constant 0 : i32
    return %arg0, %1, %c0_i32_0, %c0_i32_1 : i32, i32, i32, i32
  }
  func.func @transform_1(%arg0: i32, %arg1: i32) -> (i32, i32) {
    %c0_i32 = arith.constant 0 : i32
    %c0_i32_0 = arith.constant 0 : i32
    %c0_i32_1 = arith.constant 0 : i32
    return %c0_i32, %c0_i32_0 : i32, i32
  }
  func.func @transform_2(%arg0: i32, %arg1: i32) -> (i32, i32) {
    %c0_i32 = arith.constant 0 : i32
    %c0_i32_0 = arith.constant 0 : i32
    %c0_i32_1 = arith.constant 0 : i32
    return %c0_i32, %c0_i32_0 : i32, i32
  }
  func.func @transform_3(%arg0: i32, %arg1: i32) -> (i32, i32) {
    %c0_i32 = arith.constant 0 : i32
    %c0_i32_0 = arith.constant 0 : i32
    %c0_i32_1 = arith.constant 0 : i32
    return %c0_i32, %c0_i32_0 : i32, i32
  }
  func.func @transform_4(%arg0: i32, %arg1: i32) -> (i32, i32, i32, i32) {
    %c0_i32 = arith.constant 0 : i32
    %c0_i32_0 = arith.constant 0 : i32
    %c0_i32_1 = arith.constant 0 : i32
    return %arg0, %arg1, %c0_i32, %c0_i32_0 : i32, i32, i32, i32
  }
}

module attributes {stable_mosaic.version = 11 : i64} {
  func.func @_cgf_add_kernel(%arg0: i32, %arg1: i32, %arg2: memref<1x48x4xbf16, #tpu.memory_space<vmem>>, %arg3: memref<1x1x48x4xbf16, #tpu.memory_space<vmem>>, %arg4: memref<1x1x48x4xbf16, #tpu.memory_space<vmem>>) attributes {dimension_semantics = [#tpu.dimension_semantics<parallel>, #tpu.dimension_semantics<parallel>], iteration_bounds = array<i64: 2, 1>, scalar_prefetch = 0 : i64, scratch_operands = 0 : i64, tpu.core_type = #tpu.core_type<tc>, window_params = [{transform_indices = @transform_0, window_bounds = array<i64: 1, 48, 4>}, {transform_indices = @transform_1, window_bounds = array<i64: 1, 1, 48, 4>}, {transform_indices = @transform_2, window_bounds = array<i64: 1, 1, 48, 4>}]} {
    %c0 = arith.constant 0 : index
    %c0_0 = arith.constant 0 : index
    %c0_1 = arith.constant 0 : index
    %0 = vector.load %arg2[%c0, %c0_0, %c0_1] : memref<1x48x4xbf16, #tpu.memory_space<vmem>>, vector<1x48x4xbf16>
    %1 = vector.shape_cast %0 : vector<1x48x4xbf16> to vector<48x4xbf16>
    %2 = arith.extf %1 : vector<48x4xbf16> to vector<48x4xf32>
    %3 = vector.shape_cast %2 : vector<48x4xf32> to vector<1x48x4xf32>
    %c0_2 = arith.constant 0 : index
    %c0_3 = arith.constant 0 : index
    %c0_4 = arith.constant 0 : index
    %c0_5 = arith.constant 0 : index
    %4 = vector.load %arg3[%c0_2, %c0_3, %c0_4, %c0_5] : memref<1x1x48x4xbf16, #tpu.memory_space<vmem>>, vector<1x1x48x4xbf16>
    %5 = vector.shape_cast %4 : vector<1x1x48x4xbf16> to vector<1x48x4xbf16>
    %6 = arith.extf %5 : vector<1x48x4xbf16> to vector<1x48x4xf32>
    %7 = arith.addf %3, %6 : vector<1x48x4xf32>
    %8 = arith.truncf %7 : vector<1x48x4xf32> to vector<1x48x4xbf16>
    %c0_6 = arith.constant 0 : index
    %c0_7 = arith.constant 0 : index
    %c0_8 = arith.constant 0 : index
    %c0_9 = arith.constant 0 : index
    %9 = vector.load %arg4[%c0_6, %c0_7, %c0_8, %c0_9] : memref<1x1x48x4xbf16, #tpu.memory_space<vmem>>, vector<1x1x48x4xbf16>
    %10 = vector.shape_cast %9 : vector<1x1x48x4xbf16> to vector<1x48x4xbf16>
    %11 = vector.shape_cast %8 : vector<1x48x4xbf16> to vector<1x1x48x4xbf16>
    tpu.vector_store %arg4[%c0_6, %c0_7, %c0_8, %c0_9], %11 {strides = array<i32>} : memref<1x1x48x4xbf16, #tpu.memory_space<vmem>>, vector<1x1x48x4xbf16>,
    return
  }
  func.func @transform_0(%arg0: i32, %arg1: i32) -> (i32, i32, i32) {
    %c0_i32 = arith.constant 0 : i32
    %c0_i32_0 = arith.constant 0 : i32
    %c0_i32_1 = arith.constant 0 : i32
    return %arg0, %c0_i32, %c0_i32_0 : i32, i32, i32
  }
  func.func @transform_1(%arg0: i32, %arg1: i32) -> (i32, i32, i32, i32) {
    %c0_i32 = arith.constant 0 : i32
    %c0_i32_0 = arith.constant 0 : i32
    %c0_i32_1 = arith.constant 0 : i32
    return %arg0, %arg1, %c0_i32, %c0_i32_0 : i32, i32, i32, i32
  }
  func.func @transform_2(%arg0: i32, %arg1: i32) -> (i32, i32, i32, i32) {
    %c0_i32 = arith.constant 0 : i32
    %c0_i32_0 = arith.constant 0 : i32
    %c0_i32_1 = arith.constant 0 : i32
    return %arg0, %arg1, %c0_i32, %c0_i32_0 : i32, i32, i32, i32
  }
}

module attributes {stable_mosaic.version = 11 : i64} {
  func.func @kernel(%arg0: i32, %arg1: i32, %arg2: memref<1x1x48x256xbf16, #tpu.memory_space<vmem>>, %arg3: memref<48x1200xbf16, #tpu.memory_space<vmem>>, %arg4: memref<48x1xf32, #tpu.memory_space<vmem>>, %arg5: memref<48x1xf32, #tpu.memory_space<vmem>>, %arg6: memref<1x1x48x128xbf16, #tpu.memory_space<vmem>>) attributes {dimension_semantics = [#tpu.dimension_semantics<parallel>, #tpu.dimension_semantics<parallel>], iteration_bounds = array<i64: 2, 1>, scalar_prefetch = 0 : i64, scratch_operands = 0 : i64, tpu.core_type = #tpu.core_type<tc>, window_params = [{transform_indices = @transform_0, window_bounds = array<i64: 1, 1, 48, 256>}, {pipeline_mode = #tpu.pipeline_mode<synchronous>, transform_indices = @transform_1, window_bounds = array<i64: 48, 1200>}, {pipeline_mode = #tpu.pipeline_mode<synchronous>, transform_indices = @transform_2, window_bounds = array<i64: 48, 1>}, {pipeline_mode = #tpu.pipeline_mode<synchronous>, transform_indices = @transform_3, window_bounds = array<i64: 48, 1>}, {transform_indices = @transform_4, window_bounds = array<i64: 1, 1, 48, 128>}]} {
    %c0 = arith.constant 0 : index
    %c0_0 = arith.constant 0 : index
    %c0_1 = arith.constant 0 : index
    %c0_2 = arith.constant 0 : index
    %0 = vector.load %arg2[%c0, %c0_0, %c0_1, %c0_2] : memref<1x1x48x256xbf16, #tpu.memory_space<vmem>>, vector<1x1x48x128xbf16>
    %1 = vector.shape_cast %0 : vector<1x1x48x128xbf16> to vector<48x128xbf16>
    %c0_3 = arith.constant 0 : index
    %c0_4 = arith.constant 0 : index
    %c0_5 = arith.constant 0 : index
    %c1 = arith.constant 1 : index
    %2 = vector.load %arg2[%c0_3, %c0_4, %c0_5, %c1] : memref<1x1x48x256xbf16, #tpu.memory_space<vmem>>, vector<1x1x48x128xbf16>
    %3 = vector.shape_cast %2 : vector<1x1x48x128xbf16> to vector<48x128xbf16>
    %c0_6 = arith.constant 0 : index
    %c0_7 = arith.constant 0 : index
    %c0_8 = arith.constant 0 : index
    %c2 = arith.constant 2 : index
    %4 = vector.load %arg2[%c0_6, %c0_7, %c0_8, %c2] : memref<1x1x48x256xbf16, #tpu.memory_space<vmem>>, vector<1x1x48x128xbf16>
    %5 = vector.shape_cast %4 : vector<1x1x48x128xbf16> to vector<48x128xbf16>
    %c0_9 = arith.constant 0 : index
    %c0_10 = arith.constant 0 : index
    %c0_11 = arith.constant 0 : index
    %c3 = arith.constant 3 : index
    %6 = vector.load %arg2[%c0_9, %c0_10, %c0_11, %c3] : memref<1x1x48x256xbf16, #tpu.memory_space<vmem>>, vector<1x1x48x128xbf16>
    %7 = vector.shape_cast %6 : vector<1x1x48x128xbf16> to vector<48x128xbf16>
    %c0_12 = arith.constant 0 : index
    %c0_13 = arith.constant 0 : index
    %c0_14 = arith.constant 0 : index
    %c4 = arith.constant 4 : index
    %8 = vector.load %arg2[%c0_12, %c0_13, %c0_14, %c4] : memref<1x1x48x256xbf16, #tpu.memory_space<vmem>>, vector<1x1x48x128xbf16>
    %9 = vector.shape_cast %8 : vector<1x1x48x128xbf16> to vector<48x128xbf16>
    %c0_15 = arith.constant 0 : index
    %c0_16 = arith.constant 0 : index
    %c0_17 = arith.constant 0 : index
    %c6 = arith.constant 6 : index
    %10 = vector.load %arg2[%c0_15, %c0_16, %c0_17, %c6] : memref<1x1x48x256xbf16, #tpu.memory_space<vmem>>, vector<1x1x48x128xbf16>
    %11 = vector.shape_cast %10 : vector<1x1x48x128xbf16> to vector<48x128xbf16>
    %c0_18 = arith.constant 0 : index
    %c0_19 = arith.constant 0 : index
    %c0_20 = arith.constant 0 : index
    %c7 = arith.constant 7 : index
    %12 = vector.load %arg2[%c0_18, %c0_19, %c0_20, %c7] : memref<1x1x48x256xbf16, #tpu.memory_space<vmem>>, vector<1x1x48x128xbf16>
    %13 = vector.shape_cast %12 : vector<1x1x48x128xbf16> to vector<48x128xbf16>
    %c0_21 = arith.constant 0 : index
    %c0_22 = arith.constant 0 : index
    %c0_23 = arith.constant 0 : index
    %c8 = arith.constant 8 : index
    %14 = vector.load %arg2[%c0_21, %c0_22, %c0_23, %c8] : memref<1x1x48x256xbf16, #tpu.memory_space<vmem>>, vector<1x1x48x128xbf16>
    %15 = vector.shape_cast %14 : vector<1x1x48x128xbf16> to vector<48x128xbf16>
    %c0_24 = arith.constant 0 : index
    %c0_25 = arith.constant 0 : index
    %c0_26 = arith.constant 0 : index
    %c9 = arith.constant 9 : index
    %16 = vector.load %arg2[%c0_24, %c0_25, %c0_26, %c9] : memref<1x1x48x256xbf16, #tpu.memory_space<vmem>>, vector<1x1x48x128xbf16>
    %17 = vector.shape_cast %16 : vector<1x1x48x128xbf16> to vector<48x128xbf16>
    %c0_27 = arith.constant 0 : index
    %c0_28 = arith.constant 0 : index
    %c0_29 = arith.constant 0 : index
    %c10 = arith.constant 10 : index
    %18 = vector.load %arg2[%c0_27, %c0_28, %c0_29, %c10] : memref<1x1x48x256xbf16, #tpu.memory_space<vmem>>, vector<1x1x48x128xbf16>
    %19 = vector.shape_cast %18 : vector<1x1x48x128xbf16> to vector<48x128xbf16>
    %c0_30 = arith.constant 0 : index
    %c0_31 = arith.constant 0 : index
    %c0_32 = arith.constant 0 : index
    %c12 = arith.constant 12 : index
    %20 = vector.load %arg2[%c0_30, %c0_31, %c0_32, %c12] : memref<1x1x48x256xbf16, #tpu.memory_space<vmem>>, vector<1x1x48x128xbf16>
    %21 = vector.shape_cast %20 : vector<1x1x48x128xbf16> to vector<48x128xbf16>
    %c0_33 = arith.constant 0 : index
    %c0_34 = arith.constant 0 : index
    %c0_35 = arith.constant 0 : index
    %c13 = arith.constant 13 : index
    %22 = vector.load %arg2[%c0_33, %c0_34, %c0_35, %c13] : memref<1x1x48x256xbf16, #tpu.memory_space<vmem>>, vector<1x1x48x128xbf16>
    %23 = vector.shape_cast %22 : vector<1x1x48x128xbf16> to vector<48x128xbf16>
    %c0_36 = arith.constant 0 : index
    %c0_37 = arith.constant 0 : index
    %c0_38 = arith.constant 0 : index
    %c14 = arith.constant 14 : index
    %24 = vector.load %arg2[%c0_36, %c0_37, %c0_38, %c14] : memref<1x1x48x256xbf16, #tpu.memory_space<vmem>>, vector<1x1x48x128xbf16>
    %25 = vector.shape_cast %24 : vector<1x1x48x128xbf16> to vector<48x128xbf16>
    %c0_39 = arith.constant 0 : index
    %c0_40 = arith.constant 0 : index
    %c0_41 = arith.constant 0 : index
    %c15 = arith.constant 15 : index
    %26 = vector.load %arg2[%c0_39, %c0_40, %c0_41, %c15] : memref<1x1x48x256xbf16, #tpu.memory_space<vmem>>, vector<1x1x48x128xbf16>
    %27 = vector.shape_cast %26 : vector<1x1x48x128xbf16> to vector<48x128xbf16>
    %c0_42 = arith.constant 0 : index
    %c0_43 = arith.constant 0 : index
    %c0_44 = arith.constant 0 : index
    %c16 = arith.constant 16 : index
    %28 = vector.load %arg2[%c0_42, %c0_43, %c0_44, %c16] : memref<1x1x48x256xbf16, #tpu.memory_space<vmem>>, vector<1x1x48x128xbf16>
    %29 = vector.shape_cast %28 : vector<1x1x48x128xbf16> to vector<48x128xbf16>
    %c0_45 = arith.constant 0 : index
    %c0_46 = arith.constant 0 : index
    %c0_47 = arith.constant 0 : index
    %c18 = arith.constant 18 : index
    %30 = vector.load %arg2[%c0_45, %c0_46, %c0_47, %c18] : memref<1x1x48x256xbf16, #tpu.memory_space<vmem>>, vector<1x1x48x128xbf16>
    %31 = vector.shape_cast %30 : vector<1x1x48x128xbf16> to vector<48x128xbf16>
    %c0_48 = arith.constant 0 : index
    %c0_49 = arith.constant 0 : index
    %c0_50 = arith.constant 0 : index
    %c19 = arith.constant 19 : index
    %32 = vector.load %arg2[%c0_48, %c0_49, %c0_50, %c19] : memref<1x1x48x256xbf16, #tpu.memory_space<vmem>>, vector<1x1x48x128xbf16>
    %33 = vector.shape_cast %32 : vector<1x1x48x128xbf16> to vector<48x128xbf16>
    %c0_51 = arith.constant 0 : index
    %c0_52 = arith.constant 0 : index
    %c0_53 = arith.constant 0 : index
    %c20 = arith.constant 20 : index
    %34 = vector.load %arg2[%c0_51, %c0_52, %c0_53, %c20] : memref<1x1x48x256xbf16, #tpu.memory_space<vmem>>, vector<1x1x48x128xbf16>
    %35 = vector.shape_cast %34 : vector<1x1x48x128xbf16> to vector<48x128xbf16>
    %c0_54 = arith.constant 0 : index
    %c0_55 = arith.constant 0 : index
    %c0_56 = arith.constant 0 : index
    %c21 = arith.constant 21 : index
    %36 = vector.load %arg2[%c0_54, %c0_55, %c0_56, %c21] : memref<1x1x48x256xbf16, #tpu.memory_space<vmem>>, vector<1x1x48x128xbf16>
    %37 = vector.shape_cast %36 : vector<1x1x48x128xbf16> to vector<48x128xbf16>
    %c0_57 = arith.constant 0 : index
    %c0_58 = arith.constant 0 : index
    %c0_59 = arith.constant 0 : index
    %c22 = arith.constant 22 : index
    %38 = vector.load %arg2[%c0_57, %c0_58, %c0_59, %c22] : memref<1x1x48x256xbf16, #tpu.memory_space<vmem>>, vector<1x1x48x128xbf16>
    %39 = vector.shape_cast %38 : vector<1x1x48x128xbf16> to vector<48x128xbf16>
    %c0_60 = arith.constant 0 : index
    %c0_61 = arith.constant 0 : index
    %c0_62 = arith.constant 0 : index
    %c24 = arith.constant 24 : index
    %40 = vector.load %arg2[%c0_60, %c0_61, %c0_62, %c24] : memref<1x1x48x256xbf16, #tpu.memory_space<vmem>>, vector<1x1x48x128xbf16>
    %41 = vector.shape_cast %40 : vector<1x1x48x128xbf16> to vector<48x128xbf16>
    %c0_63 = arith.constant 0 : index
    %c0_64 = arith.constant 0 : index
    %c0_65 = arith.constant 0 : index
    %c25 = arith.constant 25 : index
    %42 = vector.load %arg2[%c0_63, %c0_64, %c0_65, %c25] : memref<1x1x48x256xbf16, #tpu.memory_space<vmem>>, vector<1x1x48x128xbf16>
    %43 = vector.shape_cast %42 : vector<1x1x48x128xbf16> to vector<48x128xbf16>
    %c0_66 = arith.constant 0 : index
    %c0_67 = arith.constant 0 : index
    %c0_68 = arith.constant 0 : index
    %c26 = arith.constant 26 : index
    %44 = vector.load %arg2[%c0_66, %c0_67, %c0_68, %c26] : memref<1x1x48x256xbf16, #tpu.memory_space<vmem>>, vector<1x1x48x128xbf16>
    %45 = vector.shape_cast %44 : vector<1x1x48x128xbf16> to vector<48x128xbf16>
    %c0_69 = arith.constant 0 : index
    %c0_70 = arith.constant 0 : index
    %c0_71 = arith.constant 0 : index
    %c27 = arith.constant 27 : index
    %46 = vector.load %arg2[%c0_69, %c0_70, %c0_71, %c27] : memref<1x1x48x256xbf16, #tpu.memory_space<vmem>>, vector<1x1x48x128xbf16>
    %47 = vector.shape_cast %46 : vector<1x1x48x128xbf16> to vector<48x128xbf16>
    %c0_72 = arith.constant 0 : index
    %c0_73 = arith.constant 0 : index
    %c0_74 = arith.constant 0 : index
    %c28 = arith.constant 28 : index
    %48 = vector.load %arg2[%c0_72, %c0_73, %c0_74, %c28] : memref<1x1x48x256xbf16, #tpu.memory_space<vmem>>, vector<1x1x48x128xbf16>
    %49 = vector.shape_cast %48 : vector<1x1x48x128xbf16> to vector<48x128xbf16>
    %50 = tpu.concatenate %1, %3, %5, %7, %9, %11, %13, %15, %17, %19, %21, %23, %25, %27, %29, %31 in 0 : vector<48x128xbf16>, vector<48x128xbf16>, vector<48x128xbf16>, vector<48x128xbf16>, vector<48x128xbf16>, vector<48x128xbf16>, vector<48x128xbf16>, vector<48x128xbf16>, vector<48x128xbf16>, vector<48x128xbf16>, vector<48x128xbf16>, vector<48x128xbf16>, vector<48x128xbf16>, vector<48x128xbf16>, vector<48x128xbf16>, vector<48x128xbf16> -> vector<768x128xbf16>
    %51 = tpu.concatenate %33, %35, %37, %39, %41, %43, %45, %47, %49 in 0 : vector<48x128xbf16>, vector<48x128xbf16>, vector<48x128xbf16>, vector<48x128xbf16>, vector<48x128xbf16>, vector<48x128xbf16>, vector<48x128xbf16>, vector<48x128xbf16>, vector<48x128xbf16> -> vector<432x128xbf16>
    %52 = tpu.concatenate %50, %51 in 0 : vector<768x128xbf16>, vector<432x128xbf16> -> vector<1200x128xbf16>
    %c0_75 = arith.constant 0 : index
    %c0_76 = arith.constant 0 : index
    %53 = vector.load %arg3[%c0_75, %c0_76] : memref<48x1200xbf16, #tpu.memory_space<vmem>>, vector<48x1200xbf16>
    %cst = arith.constant dense<0.000000e+00> : vector<48x128xf32>
    %54 = tpu.matmul %53, %52, %cst {dimension_numbers = #tpu.dot_dimension_numbers<[1], [0], [0], [1], [0, 0, 1, 1], [], []>} : vector<48x1200xbf16>, vector<1200x128xbf16>, vector<48x128xf32> -> vector<48x128xf32>
    %c0_77 = arith.constant 0 : index
    %c0_78 = arith.constant 0 : index
    %55 = vector.load %arg4[%c0_77, %c0_78] : memref<48x1xf32, #tpu.memory_space<vmem>>, vector<48x1xf32>
    %56 = vector.broadcast %55 : vector<48x1xf32> to vector<48x128xf32>
    %57 = arith.mulf %54, %56 : vector<48x128xf32>
    %c0_79 = arith.constant 0 : index
    %c0_80 = arith.constant 0 : index
    %58 = vector.load %arg5[%c0_79, %c0_80] : memref<48x1xf32, #tpu.memory_space<vmem>>, vector<48x1xf32>
    %59 = vector.broadcast %58 : vector<48x1xf32> to vector<48x128xf32>
    %60 = arith.addf %57, %59 : vector<48x128xf32>
    %cst_81 = arith.constant 0.000000e+00 : f32
    %61 = vector.broadcast %cst_81 : f32 to vector<48x128xf32>
    %62 = arith.cmpf oge, %60, %61 : vector<48x128xf32>
    %cst_82 = arith.constant 0.00999999977 : f32
    %63 = vector.broadcast %cst_82 : f32 to vector<48x128xf32>
    %64 = arith.mulf %63, %60 : vector<48x128xf32>
    %65 = arith.select %62, %60, %64 : vector<48x128xi1>, vector<48x128xf32>
    %66 = arith.truncf %65 : vector<48x128xf32> to vector<48x128xbf16>
    %c0_83 = arith.constant 0 : index
    %c0_84 = arith.constant 0 : index
    %c0_85 = arith.constant 0 : index
    %c0_86 = arith.constant 0 : index
    %67 = vector.load %arg6[%c0_83, %c0_84, %c0_85, %c0_86] : memref<1x1x48x128xbf16, #tpu.memory_space<vmem>>, vector<1x1x48x128xbf16>
    %68 = vector.shape_cast %67 : vector<1x1x48x128xbf16> to vector<48x128xbf16>
    %69 = vector.shape_cast %66 : vector<48x128xbf16> to vector<1x1x48x128xbf16>
    tpu.vector_store %arg6[%c0_83, %c0_84, %c0_85, %c0_86], %69 {strides = array<i32>} : memref<1x1x48x128xbf16, #tpu.memory_space<vmem>>, vector<1x1x48x128xbf16>,
    return
  }
  func.func @transform_0(%arg0: i32, %arg1: i32) -> (i32, i32, i32, i32) {
    %c1_i32 = arith.constant 1 : i32
    %0 = arith.muli %arg1, %c1_i32 : i32
    %c0_i32 = arith.constant 0 : i32
    %1 = arith.addi %0, %c0_i32 : i32
    %c0_i32_0 = arith.constant 0 : i32
    %c0_i32_1 = arith.constant 0 : i32
    %c0_i32_2 = arith.constant 0 : i32
    return %arg0, %1, %c0_i32_0, %c0_i32_1 : i32, i32, i32, i32
  }
  func.func @transform_1(%arg0: i32, %arg1: i32) -> (i32, i32) {
    %c0_i32 = arith.constant 0 : i32
    %c0_i32_0 = arith.constant 0 : i32
    %c0_i32_1 = arith.constant 0 : i32
    return %c0_i32, %c0_i32_0 : i32, i32
  }
  func.func @transform_2(%arg0: i32, %arg1: i32) -> (i32, i32) {
    %c0_i32 = arith.constant 0 : i32
    %c0_i32_0 = arith.constant 0 : i32
    %c0_i32_1 = arith.constant 0 : i32
    return %c0_i32, %c0_i32_0 : i32, i32
  }
  func.func @transform_3(%arg0: i32, %arg1: i32) -> (i32, i32) {
    %c0_i32 = arith.constant 0 : i32
    %c0_i32_0 = arith.constant 0 : i32
    %c0_i32_1 = arith.constant 0 : i32
    return %c0_i32, %c0_i32_0 : i32, i32
  }
  func.func @transform_4(%arg0: i32, %arg1: i32) -> (i32, i32, i32, i32) {
    %c0_i32 = arith.constant 0 : i32
    %c0_i32_0 = arith.constant 0 : i32
    %c0_i32_1 = arith.constant 0 : i32
    return %arg0, %arg1, %c0_i32, %c0_i32_0 : i32, i32, i32, i32
  }
}

module attributes {stable_mosaic.version = 11 : i64} {
  func.func @kernel(%arg0: i32, %arg1: i32, %arg2: memref<1x1x48x128xbf16, #tpu.memory_space<vmem>>, %arg3: memref<48x48xbf16, #tpu.memory_space<vmem>>, %arg4: memref<48x1xf32, #tpu.memory_space<vmem>>, %arg5: memref<48x1xf32, #tpu.memory_space<vmem>>, %arg6: memref<1x1x48x128xbf16, #tpu.memory_space<vmem>>) attributes {dimension_semantics = [#tpu.dimension_semantics<parallel>, #tpu.dimension_semantics<parallel>], iteration_bounds = array<i64: 2, 1>, scalar_prefetch = 0 : i64, scratch_operands = 0 : i64, tpu.core_type = #tpu.core_type<tc>, window_params = [{transform_indices = @transform_0, window_bounds = array<i64: 1, 1, 48, 128>}, {pipeline_mode = #tpu.pipeline_mode<synchronous>, transform_indices = @transform_1, window_bounds = array<i64: 48, 48>}, {pipeline_mode = #tpu.pipeline_mode<synchronous>, transform_indices = @transform_2, window_bounds = array<i64: 48, 1>}, {pipeline_mode = #tpu.pipeline_mode<synchronous>, transform_indices = @transform_3, window_bounds = array<i64: 48, 1>}, {transform_indices = @transform_4, window_bounds = array<i64: 1, 1, 48, 128>}]} {
    %c0 = arith.constant 0 : index
    %c0_0 = arith.constant 0 : index
    %c0_1 = arith.constant 0 : index
    %c0_2 = arith.constant 0 : index
    %0 = vector.load %arg2[%c0, %c0_0, %c0_1, %c0_2] : memref<1x1x48x128xbf16, #tpu.memory_space<vmem>>, vector<1x1x48x128xbf16>
    %1 = vector.shape_cast %0 : vector<1x1x48x128xbf16> to vector<48x128xbf16>
    %c0_3 = arith.constant 0 : index
    %c0_4 = arith.constant 0 : index
    %2 = vector.load %arg3[%c0_3, %c0_4] : memref<48x48xbf16, #tpu.memory_space<vmem>>, vector<48x48xbf16>
    %cst = arith.constant dense<0.000000e+00> : vector<48x128xf32>
    %3 = tpu.matmul %2, %1, %cst {dimension_numbers = #tpu.dot_dimension_numbers<[1], [0], [0], [1], [0, 0, 1, 1], [], []>} : vector<48x48xbf16>, vector<48x128xbf16>, vector<48x128xf32> -> vector<48x128xf32>
    %c0_5 = arith.constant 0 : index
    %c0_6 = arith.constant 0 : index
    %4 = vector.load %arg4[%c0_5, %c0_6] : memref<48x1xf32, #tpu.memory_space<vmem>>, vector<48x1xf32>
    %5 = vector.broadcast %4 : vector<48x1xf32> to vector<48x128xf32>
    %6 = arith.mulf %3, %5 : vector<48x128xf32>
    %c0_7 = arith.constant 0 : index
    %c0_8 = arith.constant 0 : index
    %7 = vector.load %arg5[%c0_7, %c0_8] : memref<48x1xf32, #tpu.memory_space<vmem>>, vector<48x1xf32>
    %8 = vector.broadcast %7 : vector<48x1xf32> to vector<48x128xf32>
    %9 = arith.addf %6, %8 : vector<48x128xf32>
    %10 = arith.truncf %9 : vector<48x128xf32> to vector<48x128xbf16>
    %c0_9 = arith.constant 0 : index
    %c0_10 = arith.constant 0 : index
    %c0_11 = arith.constant 0 : index
    %c0_12 = arith.constant 0 : index
    %11 = vector.load %arg6[%c0_9, %c0_10, %c0_11, %c0_12] : memref<1x1x48x128xbf16, #tpu.memory_space<vmem>>, vector<1x1x48x128xbf16>
    %12 = vector.shape_cast %11 : vector<1x1x48x128xbf16> to vector<48x128xbf16>
    %13 = vector.shape_cast %10 : vector<48x128xbf16> to vector<1x1x48x128xbf16>
    tpu.vector_store %arg6[%c0_9, %c0_10, %c0_11, %c0_12], %13 {strides = array<i32>} : memref<1x1x48x128xbf16, #tpu.memory_space<vmem>>, vector<1x1x48x128xbf16>,
    return
  }
  func.func @transform_0(%arg0: i32, %arg1: i32) -> (i32, i32, i32, i32) {
    %c1_i32 = arith.constant 1 : i32
    %0 = arith.muli %arg1, %c1_i32 : i32
    %c0_i32 = arith.constant 0 : i32
    %1 = arith.addi %0, %c0_i32 : i32
    %c0_i32_0 = arith.constant 0 : i32
    %c0_i32_1 = arith.constant 0 : i32
    %c0_i32_2 = arith.constant 0 : i32
    return %arg0, %1, %c0_i32_0, %c0_i32_1 : i32, i32, i32, i32
  }
  func.func @transform_1(%arg0: i32, %arg1: i32) -> (i32, i32) {
    %c0_i32 = arith.constant 0 : i32
    %c0_i32_0 = arith.constant 0 : i32
    %c0_i32_1 = arith.constant 0 : i32
    return %c0_i32, %c0_i32_0 : i32, i32
  }
  func.func @transform_2(%arg0: i32, %arg1: i32) -> (i32, i32) {
    %c0_i32 = arith.constant 0 : i32
    %c0_i32_0 = arith.constant 0 : i32
    %c0_i32_1 = arith.constant 0 : i32
    return %c0_i32, %c0_i32_0 : i32, i32
  }
  func.func @transform_3(%arg0: i32, %arg1: i32) -> (i32, i32) {
    %c0_i32 = arith.constant 0 : i32
    %c0_i32_0 = arith.constant 0 : i32
    %c0_i32_1 = arith.constant 0 : i32
    return %c0_i32, %c0_i32_0 : i32, i32
  }
  func.func @transform_4(%arg0: i32, %arg1: i32) -> (i32, i32, i32, i32) {
    %c0_i32 = arith.constant 0 : i32
    %c0_i32_0 = arith.constant 0 : i32
    %c0_i32_1 = arith.constant 0 : i32
    return %arg0, %arg1, %c0_i32, %c0_i32_0 : i32, i32, i32, i32
  }
}

module attributes {stable_mosaic.version = 11 : i64} {
  func.func @_cgf_fuse_kernel(%arg0: i32, %arg1: i32, %arg2: memref<1x1x48x4xbf16, #tpu.memory_space<vmem>>, %arg3: memref<1x48x4xbf16, #tpu.memory_space<vmem>>, %arg4: memref<1x1x48x4xbf16, #tpu.memory_space<vmem>>, %arg5: memref<1x1x48x4xbf16, #tpu.memory_space<vmem>>) attributes {dimension_semantics = [#tpu.dimension_semantics<parallel>, #tpu.dimension_semantics<parallel>], iteration_bounds = array<i64: 2, 1>, scalar_prefetch = 0 : i64, scratch_operands = 0 : i64, tpu.core_type = #tpu.core_type<tc>, window_params = [{transform_indices = @transform_0, window_bounds = array<i64: 1, 1, 48, 4>}, {transform_indices = @transform_1, window_bounds = array<i64: 1, 48, 4>}, {transform_indices = @transform_2, window_bounds = array<i64: 1, 1, 48, 4>}, {transform_indices = @transform_3, window_bounds = array<i64: 1, 1, 48, 4>}]} {
    %c0 = arith.constant 0 : index
    %c0_0 = arith.constant 0 : index
    %c0_1 = arith.constant 0 : index
    %0 = vector.load %arg3[%c0, %c0_0, %c0_1] : memref<1x48x4xbf16, #tpu.memory_space<vmem>>, vector<1x48x4xbf16>
    %1 = vector.shape_cast %0 : vector<1x48x4xbf16> to vector<48x4xbf16>
    %2 = arith.extf %1 : vector<48x4xbf16> to vector<48x4xf32>
    %c0_2 = arith.constant 0 : index
    %c0_3 = arith.constant 0 : index
    %c0_4 = arith.constant 0 : index
    %c0_5 = arith.constant 0 : index
    %3 = vector.load %arg2[%c0_2, %c0_3, %c0_4, %c0_5] : memref<1x1x48x4xbf16, #tpu.memory_space<vmem>>, vector<1x1x48x4xbf16>
    %4 = vector.shape_cast %3 : vector<1x1x48x4xbf16> to vector<1x48x4xbf16>
    %5 = arith.extf %4 : vector<1x48x4xbf16> to vector<1x48x4xf32>
    %6 = arith.negf %5 : vector<1x48x4xf32>
    %7 = math.exp %6 : vector<1x48x4xf32>
    %cst = arith.constant 1.000000e+00 : f32
    %8 = vector.broadcast %cst : f32 to vector<1x48x4xf32>
    %9 = arith.addf %8, %7 : vector<1x48x4xf32>
    %10 = arith.divf %8, %9 : vector<1x48x4xf32>
    %11 = vector.shape_cast %2 : vector<48x4xf32> to vector<1x48x4xf32>
    %12 = arith.mulf %10, %11 : vector<1x48x4xf32>
    %c0_6 = arith.constant 0 : index
    %c0_7 = arith.constant 0 : index
    %c0_8 = arith.constant 0 : index
    %c0_9 = arith.constant 0 : index
    %13 = vector.load %arg4[%c0_6, %c0_7, %c0_8, %c0_9] : memref<1x1x48x4xbf16, #tpu.memory_space<vmem>>, vector<1x1x48x4xbf16>
    %14 = vector.shape_cast %13 : vector<1x1x48x4xbf16> to vector<1x48x4xbf16>
    %15 = arith.extf %14 : vector<1x48x4xbf16> to vector<1x48x4xf32>
    %16 = arith.addf %12, %15 : vector<1x48x4xf32>
    %17 = arith.truncf %16 : vector<1x48x4xf32> to vector<1x48x4xbf16>
    %c0_10 = arith.constant 0 : index
    %c0_11 = arith.constant 0 : index
    %c0_12 = arith.constant 0 : index
    %c0_13 = arith.constant 0 : index
    %18 = vector.load %arg5[%c0_10, %c0_11, %c0_12, %c0_13] : memref<1x1x48x4xbf16, #tpu.memory_space<vmem>>, vector<1x1x48x4xbf16>
    %19 = vector.shape_cast %18 : vector<1x1x48x4xbf16> to vector<1x48x4xbf16>
    %20 = vector.shape_cast %17 : vector<1x48x4xbf16> to vector<1x1x48x4xbf16>
    tpu.vector_store %arg5[%c0_10, %c0_11, %c0_12, %c0_13], %20 {strides = array<i32>} : memref<1x1x48x4xbf16, #tpu.memory_space<vmem>>, vector<1x1x48x4xbf16>,
    return
  }
  func.func @transform_0(%arg0: i32, %arg1: i32) -> (i32, i32, i32, i32) {
    %c0_i32 = arith.constant 0 : i32
    %c0_i32_0 = arith.constant 0 : i32
    %c0_i32_1 = arith.constant 0 : i32
    return %arg0, %arg1, %c0_i32, %c0_i32_0 : i32, i32, i32, i32
  }
  func.func @transform_1(%arg0: i32, %arg1: i32) -> (i32, i32, i32) {
    %c0_i32 = arith.constant 0 : i32
    %c0_i32_0 = arith.constant 0 : i32
    %c0_i32_1 = arith.constant 0 : i32
    return %arg0, %c0_i32, %c0_i32_0 : i32, i32, i32
  }
  func.func @transform_2(%arg0: i32, %arg1: i32) -> (i32, i32, i32, i32) {
    %c0_i32 = arith.constant 0 : i32
    %c0_i32_0 = arith.constant 0 : i32
    %c0_i32_1 = arith.constant 0 : i32
    return %arg0, %arg1, %c0_i32, %c0_i32_0 : i32, i32, i32, i32
  }
  func.func @transform_3(%arg0: i32, %arg1: i32) -> (i32, i32, i32, i32) {
    %c0_i32 = arith.constant 0 : i32
    %c0_i32_0 = arith.constant 0 : i32
    %c0_i32_1 = arith.constant 0 : i32
    return %arg0, %arg1, %c0_i32, %c0_i32_0 : i32, i32, i32, i32
  }
}

module attributes {stable_mosaic.version = 11 : i64} {
  func.func @kernel(%arg0: i32, %arg1: i32, %arg2: memref<1x1x48x256xbf16, #tpu.memory_space<vmem>>, %arg3: memref<1x1x48x256xbf16, #tpu.memory_space<vmem>>, %arg4: memref<128x864xbf16, #tpu.memory_space<vmem>>, %arg5: memref<128x1xf32, #tpu.memory_space<vmem>>, %arg6: memref<128x1xf32, #tpu.memory_space<vmem>>, %arg7: memref<1x1x128x128xbf16, #tpu.memory_space<vmem>>) attributes {dimension_semantics = [#tpu.dimension_semantics<parallel>, #tpu.dimension_semantics<parallel>], iteration_bounds = array<i64: 2, 1>, scalar_prefetch = 0 : i64, scratch_operands = 0 : i64, tpu.core_type = #tpu.core_type<tc>, window_params = [{transform_indices = @transform_0, window_bounds = array<i64: 1, 1, 48, 256>}, {transform_indices = @transform_1, window_bounds = array<i64: 1, 1, 48, 256>}, {pipeline_mode = #tpu.pipeline_mode<synchronous>, transform_indices = @transform_2, window_bounds = array<i64: 128, 864>}, {pipeline_mode = #tpu.pipeline_mode<synchronous>, transform_indices = @transform_3, window_bounds = array<i64: 128, 1>}, {pipeline_mode = #tpu.pipeline_mode<synchronous>, transform_indices = @transform_4, window_bounds = array<i64: 128, 1>}, {transform_indices = @transform_5, window_bounds = array<i64: 1, 1, 128, 128>}]} {
    %c0 = arith.constant 0 : index
    %c0_0 = arith.constant 0 : index
    %c0_1 = arith.constant 0 : index
    %c0_2 = arith.constant 0 : index
    %0 = vector.load %arg2[%c0, %c0_0, %c0_1, %c0_2] : memref<1x1x48x256xbf16, #tpu.memory_space<vmem>>, vector<1x1x48x128xbf16>
    %1 = vector.shape_cast %0 : vector<1x1x48x128xbf16> to vector<48x128xbf16>
    %c0_3 = arith.constant 0 : index
    %c0_4 = arith.constant 0 : index
    %c0_5 = arith.constant 0 : index
    %c1 = arith.constant 1 : index
    %2 = vector.load %arg2[%c0_3, %c0_4, %c0_5, %c1] : memref<1x1x48x256xbf16, #tpu.memory_space<vmem>>, vector<1x1x48x128xbf16>
    %3 = vector.shape_cast %2 : vector<1x1x48x128xbf16> to vector<48x128xbf16>
    %c0_6 = arith.constant 0 : index
    %c0_7 = arith.constant 0 : index
    %c0_8 = arith.constant 0 : index
    %c2 = arith.constant 2 : index
    %4 = vector.load %arg2[%c0_6, %c0_7, %c0_8, %c2] : memref<1x1x48x256xbf16, #tpu.memory_space<vmem>>, vector<1x1x48x128xbf16>
    %5 = vector.shape_cast %4 : vector<1x1x48x128xbf16> to vector<48x128xbf16>
    %c0_9 = arith.constant 0 : index
    %c0_10 = arith.constant 0 : index
    %c0_11 = arith.constant 0 : index
    %c4 = arith.constant 4 : index
    %6 = vector.load %arg2[%c0_9, %c0_10, %c0_11, %c4] : memref<1x1x48x256xbf16, #tpu.memory_space<vmem>>, vector<1x1x48x128xbf16>
    %7 = vector.shape_cast %6 : vector<1x1x48x128xbf16> to vector<48x128xbf16>
    %c0_12 = arith.constant 0 : index
    %c0_13 = arith.constant 0 : index
    %c0_14 = arith.constant 0 : index
    %c5 = arith.constant 5 : index
    %8 = vector.load %arg2[%c0_12, %c0_13, %c0_14, %c5] : memref<1x1x48x256xbf16, #tpu.memory_space<vmem>>, vector<1x1x48x128xbf16>
    %9 = vector.shape_cast %8 : vector<1x1x48x128xbf16> to vector<48x128xbf16>
    %c0_15 = arith.constant 0 : index
    %c0_16 = arith.constant 0 : index
    %c0_17 = arith.constant 0 : index
    %c6 = arith.constant 6 : index
    %10 = vector.load %arg2[%c0_15, %c0_16, %c0_17, %c6] : memref<1x1x48x256xbf16, #tpu.memory_space<vmem>>, vector<1x1x48x128xbf16>
    %11 = vector.shape_cast %10 : vector<1x1x48x128xbf16> to vector<48x128xbf16>
    %c0_18 = arith.constant 0 : index
    %c0_19 = arith.constant 0 : index
    %c0_20 = arith.constant 0 : index
    %c8 = arith.constant 8 : index
    %12 = vector.load %arg2[%c0_18, %c0_19, %c0_20, %c8] : memref<1x1x48x256xbf16, #tpu.memory_space<vmem>>, vector<1x1x48x128xbf16>
    %13 = vector.shape_cast %12 : vector<1x1x48x128xbf16> to vector<48x128xbf16>
    %c0_21 = arith.constant 0 : index
    %c0_22 = arith.constant 0 : index
    %c0_23 = arith.constant 0 : index
    %c9 = arith.constant 9 : index
    %14 = vector.load %arg2[%c0_21, %c0_22, %c0_23, %c9] : memref<1x1x48x256xbf16, #tpu.memory_space<vmem>>, vector<1x1x48x128xbf16>
    %15 = vector.shape_cast %14 : vector<1x1x48x128xbf16> to vector<48x128xbf16>
    %c0_24 = arith.constant 0 : index
    %c0_25 = arith.constant 0 : index
    %c0_26 = arith.constant 0 : index
    %c10 = arith.constant 10 : index
    %16 = vector.load %arg2[%c0_24, %c0_25, %c0_26, %c10] : memref<1x1x48x256xbf16, #tpu.memory_space<vmem>>, vector<1x1x48x128xbf16>
    %17 = vector.shape_cast %16 : vector<1x1x48x128xbf16> to vector<48x128xbf16>
    %c0_27 = arith.constant 0 : index
    %c0_28 = arith.constant 0 : index
    %c0_29 = arith.constant 0 : index
    %c0_30 = arith.constant 0 : index
    %18 = vector.load %arg3[%c0_27, %c0_28, %c0_29, %c0_30] : memref<1x1x48x256xbf16, #tpu.memory_space<vmem>>, vector<1x1x48x128xbf16>
    %19 = vector.shape_cast %18 : vector<1x1x48x128xbf16> to vector<48x128xbf16>
    %c0_31 = arith.constant 0 : index
    %c0_32 = arith.constant 0 : index
    %c0_33 = arith.constant 0 : index
    %c1_34 = arith.constant 1 : index
    %20 = vector.load %arg3[%c0_31, %c0_32, %c0_33, %c1_34] : memref<1x1x48x256xbf16, #tpu.memory_space<vmem>>, vector<1x1x48x128xbf16>
    %21 = vector.shape_cast %20 : vector<1x1x48x128xbf16> to vector<48x128xbf16>
    %c0_35 = arith.constant 0 : index
    %c0_36 = arith.constant 0 : index
    %c0_37 = arith.constant 0 : index
    %c2_38 = arith.constant 2 : index
    %22 = vector.load %arg3[%c0_35, %c0_36, %c0_37, %c2_38] : memref<1x1x48x256xbf16, #tpu.memory_space<vmem>>, vector<1x1x48x128xbf16>
    %23 = vector.shape_cast %22 : vector<1x1x48x128xbf16> to vector<48x128xbf16>
    %c0_39 = arith.constant 0 : index
    %c0_40 = arith.constant 0 : index
    %c0_41 = arith.constant 0 : index
    %c4_42 = arith.constant 4 : index
    %24 = vector.load %arg3[%c0_39, %c0_40, %c0_41, %c4_42] : memref<1x1x48x256xbf16, #tpu.memory_space<vmem>>, vector<1x1x48x128xbf16>
    %25 = vector.shape_cast %24 : vector<1x1x48x128xbf16> to vector<48x128xbf16>
    %c0_43 = arith.constant 0 : index
    %c0_44 = arith.constant 0 : index
    %c0_45 = arith.constant 0 : index
    %c5_46 = arith.constant 5 : index
    %26 = vector.load %arg3[%c0_43, %c0_44, %c0_45, %c5_46] : memref<1x1x48x256xbf16, #tpu.memory_space<vmem>>, vector<1x1x48x128xbf16>
    %27 = vector.shape_cast %26 : vector<1x1x48x128xbf16> to vector<48x128xbf16>
    %c0_47 = arith.constant 0 : index
    %c0_48 = arith.constant 0 : index
    %c0_49 = arith.constant 0 : index
    %c6_50 = arith.constant 6 : index
    %28 = vector.load %arg3[%c0_47, %c0_48, %c0_49, %c6_50] : memref<1x1x48x256xbf16, #tpu.memory_space<vmem>>, vector<1x1x48x128xbf16>
    %29 = vector.shape_cast %28 : vector<1x1x48x128xbf16> to vector<48x128xbf16>
    %c0_51 = arith.constant 0 : index
    %c0_52 = arith.constant 0 : index
    %c0_53 = arith.constant 0 : index
    %c8_54 = arith.constant 8 : index
    %30 = vector.load %arg3[%c0_51, %c0_52, %c0_53, %c8_54] : memref<1x1x48x256xbf16, #tpu.memory_space<vmem>>, vector<1x1x48x128xbf16>
    %31 = vector.shape_cast %30 : vector<1x1x48x128xbf16> to vector<48x128xbf16>
    %c0_55 = arith.constant 0 : index
    %c0_56 = arith.constant 0 : index
    %c0_57 = arith.constant 0 : index
    %c9_58 = arith.constant 9 : index
    %32 = vector.load %arg3[%c0_55, %c0_56, %c0_57, %c9_58] : memref<1x1x48x256xbf16, #tpu.memory_space<vmem>>, vector<1x1x48x128xbf16>
    %33 = vector.shape_cast %32 : vector<1x1x48x128xbf16> to vector<48x128xbf16>
    %c0_59 = arith.constant 0 : index
    %c0_60 = arith.constant 0 : index
    %c0_61 = arith.constant 0 : index
    %c10_62 = arith.constant 10 : index
    %34 = vector.load %arg3[%c0_59, %c0_60, %c0_61, %c10_62] : memref<1x1x48x256xbf16, #tpu.memory_space<vmem>>, vector<1x1x48x128xbf16>
    %35 = vector.shape_cast %34 : vector<1x1x48x128xbf16> to vector<48x128xbf16>
    %36 = tpu.concatenate %1, %3, %5, %7, %9, %11, %13, %15, %17, %19, %21, %23, %25, %27, %29, %31 in 0 : vector<48x128xbf16>, vector<48x128xbf16>, vector<48x128xbf16>, vector<48x128xbf16>, vector<48x128xbf16>, vector<48x128xbf16>, vector<48x128xbf16>, vector<48x128xbf16>, vector<48x128xbf16>, vector<48x128xbf16>, vector<48x128xbf16>, vector<48x128xbf16>, vector<48x128xbf16>, vector<48x128xbf16>, vector<48x128xbf16>, vector<48x128xbf16> -> vector<768x128xbf16>
    %37 = tpu.concatenate %33, %35 in 0 : vector<48x128xbf16>, vector<48x128xbf16> -> vector<96x128xbf16>
    %38 = tpu.concatenate %36, %37 in 0 : vector<768x128xbf16>, vector<96x128xbf16> -> vector<864x128xbf16>
    %c0_63 = arith.constant 0 : index
    %c0_64 = arith.constant 0 : index
    %39 = vector.load %arg4[%c0_63, %c0_64] : memref<128x864xbf16, #tpu.memory_space<vmem>>, vector<128x864xbf16>
    %cst = arith.constant dense<0.000000e+00> : vector<128x128xf32>
    %40 = tpu.matmul %39, %38, %cst {dimension_numbers = #tpu.dot_dimension_numbers<[1], [0], [0], [1], [0, 0, 1, 1], [], []>} : vector<128x864xbf16>, vector<864x128xbf16>, vector<128x128xf32> -> vector<128x128xf32>
    %c0_65 = arith.constant 0 : index
    %c0_66 = arith.constant 0 : index
    %41 = vector.load %arg5[%c0_65, %c0_66] : memref<128x1xf32, #tpu.memory_space<vmem>>, vector<128x1xf32>
    %42 = vector.broadcast %41 : vector<128x1xf32> to vector<128x128xf32>
    %43 = arith.mulf %40, %42 : vector<128x128xf32>
    %c0_67 = arith.constant 0 : index
    %c0_68 = arith.constant 0 : index
    %44 = vector.load %arg6[%c0_67, %c0_68] : memref<128x1xf32, #tpu.memory_space<vmem>>, vector<128x1xf32>
    %45 = vector.broadcast %44 : vector<128x1xf32> to vector<128x128xf32>
    %46 = arith.addf %43, %45 : vector<128x128xf32>
    %cst_69 = arith.constant 0.000000e+00 : f32
    %47 = vector.broadcast %cst_69 : f32 to vector<128x128xf32>
    %48 = arith.cmpf oge, %46, %47 : vector<128x128xf32>
    %cst_70 = arith.constant 0.00999999977 : f32
    %49 = vector.broadcast %cst_70 : f32 to vector<128x128xf32>
    %50 = arith.mulf %49, %46 : vector<128x128xf32>
    %51 = arith.select %48, %46, %50 : vector<128x128xi1>, vector<128x128xf32>
    %52 = arith.truncf %51 : vector<128x128xf32> to vector<128x128xbf16>
    %c0_71 = arith.constant 0 : index
    %c0_72 = arith.constant 0 : index
    %c0_73 = arith.constant 0 : index
    %c0_74 = arith.constant 0 : index
    %53 = vector.load %arg7[%c0_71, %c0_72, %c0_73, %c0_74] : memref<1x1x128x128xbf16, #tpu.memory_space<vmem>>, vector<1x1x128x128xbf16>
    %54 = vector.shape_cast %53 : vector<1x1x128x128xbf16> to vector<128x128xbf16>
    %55 = vector.shape_cast %52 : vector<128x128xbf16> to vector<1x1x128x128xbf16>
    tpu.vector_store %arg7[%c0_71, %c0_72, %c0_73, %c0_74], %55 {strides = array<i32>} : memref<1x1x128x128xbf16, #tpu.memory_space<vmem>>, vector<1x1x128x128xbf16>,
    return
  }
  func.func @transform_0(%arg0: i32, %arg1: i32) -> (i32, i32, i32, i32) {
    %c1_i32 = arith.constant 1 : i32
    %0 = arith.muli %arg1, %c1_i32 : i32
    %c0_i32 = arith.constant 0 : i32
    %1 = arith.addi %0, %c0_i32 : i32
    %c0_i32_0 = arith.constant 0 : i32
    %c0_i32_1 = arith.constant 0 : i32
    %c0_i32_2 = arith.constant 0 : i32
    return %arg0, %1, %c0_i32_0, %c0_i32_1 : i32, i32, i32, i32
  }
  func.func @transform_1(%arg0: i32, %arg1: i32) -> (i32, i32, i32, i32) {
    %c1_i32 = arith.constant 1 : i32
    %0 = arith.muli %arg1, %c1_i32 : i32
    %c1_i32_0 = arith.constant 1 : i32
    %1 = arith.addi %0, %c1_i32_0 : i32
    %c0_i32 = arith.constant 0 : i32
    %c0_i32_1 = arith.constant 0 : i32
    %c0_i32_2 = arith.constant 0 : i32
    return %arg0, %1, %c0_i32, %c0_i32_1 : i32, i32, i32, i32
  }
  func.func @transform_2(%arg0: i32, %arg1: i32) -> (i32, i32) {
    %c0_i32 = arith.constant 0 : i32
    %c0_i32_0 = arith.constant 0 : i32
    %c0_i32_1 = arith.constant 0 : i32
    return %c0_i32, %c0_i32_0 : i32, i32
  }
  func.func @transform_3(%arg0: i32, %arg1: i32) -> (i32, i32) {
    %c0_i32 = arith.constant 0 : i32
    %c0_i32_0 = arith.constant 0 : i32
    %c0_i32_1 = arith.constant 0 : i32
    return %c0_i32, %c0_i32_0 : i32, i32
  }
  func.func @transform_4(%arg0: i32, %arg1: i32) -> (i32, i32) {
    %c0_i32 = arith.constant 0 : i32
    %c0_i32_0 = arith.constant 0 : i32
    %c0_i32_1 = arith.constant 0 : i32
    return %c0_i32, %c0_i32_0 : i32, i32
  }
  func.func @transform_5(%arg0: i32, %arg1: i32) -> (i32, i32, i32, i32) {
    %c0_i32 = arith.constant 0 : i32
    %c0_i32_0 = arith.constant 0 : i32
    %c0_i32_1 = arith.constant 0 : i32
    return %arg0, %arg1, %c0_i32, %c0_i32_0 : i32, i32, i32, i32
  }
}

module attributes {stable_mosaic.version = 11 : i64} {
  func.func @kernel(%arg0: i32, %arg1: i32, %arg2: memref<1x1x64x128xbf16, #tpu.memory_space<vmem>>, %arg3: memref<32x64xbf16, #tpu.memory_space<vmem>>, %arg4: memref<32x1xf32, #tpu.memory_space<vmem>>, %arg5: memref<32x1xf32, #tpu.memory_space<vmem>>, %arg6: memref<1x1x32x128xbf16, #tpu.memory_space<vmem>>) attributes {dimension_semantics = [#tpu.dimension_semantics<parallel>, #tpu.dimension_semantics<parallel>], iteration_bounds = array<i64: 2, 2>, scalar_prefetch = 0 : i64, scratch_operands = 0 : i64, tpu.core_type = #tpu.core_type<tc>, window_params = [{transform_indices = @transform_0, window_bounds = array<i64: 1, 1, 64, 128>}, {pipeline_mode = #tpu.pipeline_mode<synchronous>, transform_indices = @transform_1, window_bounds = array<i64: 32, 64>}, {pipeline_mode = #tpu.pipeline_mode<synchronous>, transform_indices = @transform_2, window_bounds = array<i64: 32, 1>}, {pipeline_mode = #tpu.pipeline_mode<synchronous>, transform_indices = @transform_3, window_bounds = array<i64: 32, 1>}, {transform_indices = @transform_4, window_bounds = array<i64: 1, 1, 32, 128>}]} {
    %c0 = arith.constant 0 : index
    %c0_0 = arith.constant 0 : index
    %c0_1 = arith.constant 0 : index
    %c0_2 = arith.constant 0 : index
    %0 = vector.load %arg2[%c0, %c0_0, %c0_1, %c0_2] : memref<1x1x64x128xbf16, #tpu.memory_space<vmem>>, vector<1x1x64x128xbf16>
    %1 = vector.shape_cast %0 : vector<1x1x64x128xbf16> to vector<64x128xbf16>
    %c0_3 = arith.constant 0 : index
    %c0_4 = arith.constant 0 : index
    %2 = vector.load %arg3[%c0_3, %c0_4] : memref<32x64xbf16, #tpu.memory_space<vmem>>, vector<32x64xbf16>
    %cst = arith.constant dense<0.000000e+00> : vector<32x128xf32>
    %3 = tpu.matmul %2, %1, %cst {dimension_numbers = #tpu.dot_dimension_numbers<[1], [0], [0], [1], [0, 0, 1, 1], [], []>} : vector<32x64xbf16>, vector<64x128xbf16>, vector<32x128xf32> -> vector<32x128xf32>
    %c0_5 = arith.constant 0 : index
    %c0_6 = arith.constant 0 : index
    %4 = vector.load %arg4[%c0_5, %c0_6] : memref<32x1xf32, #tpu.memory_space<vmem>>, vector<32x1xf32>
    %5 = vector.broadcast %4 : vector<32x1xf32> to vector<32x128xf32>
    %6 = arith.mulf %3, %5 : vector<32x128xf32>
    %c0_7 = arith.constant 0 : index
    %c0_8 = arith.constant 0 : index
    %7 = vector.load %arg5[%c0_7, %c0_8] : memref<32x1xf32, #tpu.memory_space<vmem>>, vector<32x1xf32>
    %8 = vector.broadcast %7 : vector<32x1xf32> to vector<32x128xf32>
    %9 = arith.addf %6, %8 : vector<32x128xf32>
    %cst_9 = arith.constant 0.000000e+00 : f32
    %10 = vector.broadcast %cst_9 : f32 to vector<32x128xf32>
    %11 = arith.cmpf oge, %9, %10 : vector<32x128xf32>
    %cst_10 = arith.constant 0.00999999977 : f32
    %12 = vector.broadcast %cst_10 : f32 to vector<32x128xf32>
    %13 = arith.mulf %12, %9 : vector<32x128xf32>
    %14 = arith.select %11, %9, %13 : vector<32x128xi1>, vector<32x128xf32>
    %15 = arith.truncf %14 : vector<32x128xf32> to vector<32x128xbf16>
    %c0_11 = arith.constant 0 : index
    %c0_12 = arith.constant 0 : index
    %c0_13 = arith.constant 0 : index
    %c0_14 = arith.constant 0 : index
    %16 = vector.load %arg6[%c0_11, %c0_12, %c0_13, %c0_14] : memref<1x1x32x128xbf16, #tpu.memory_space<vmem>>, vector<1x1x32x128xbf16>
    %17 = vector.shape_cast %16 : vector<1x1x32x128xbf16> to vector<32x128xbf16>
    %18 = vector.shape_cast %15 : vector<32x128xbf16> to vector<1x1x32x128xbf16>
    tpu.vector_store %arg6[%c0_11, %c0_12, %c0_13, %c0_14], %18 {strides = array<i32>} : memref<1x1x32x128xbf16, #tpu.memory_space<vmem>>, vector<1x1x32x128xbf16>,
    return
  }
  func.func @transform_0(%arg0: i32, %arg1: i32) -> (i32, i32, i32, i32) {
    %c1_i32 = arith.constant 1 : i32
    %0 = arith.muli %arg1, %c1_i32 : i32
    %c0_i32 = arith.constant 0 : i32
    %1 = arith.addi %0, %c0_i32 : i32
    %c0_i32_0 = arith.constant 0 : i32
    %c0_i32_1 = arith.constant 0 : i32
    %c0_i32_2 = arith.constant 0 : i32
    return %arg0, %1, %c0_i32_0, %c0_i32_1 : i32, i32, i32, i32
  }
  func.func @transform_1(%arg0: i32, %arg1: i32) -> (i32, i32) {
    %c0_i32 = arith.constant 0 : i32
    %c0_i32_0 = arith.constant 0 : i32
    %c0_i32_1 = arith.constant 0 : i32
    return %c0_i32, %c0_i32_0 : i32, i32
  }
  func.func @transform_2(%arg0: i32, %arg1: i32) -> (i32, i32) {
    %c0_i32 = arith.constant 0 : i32
    %c0_i32_0 = arith.constant 0 : i32
    %c0_i32_1 = arith.constant 0 : i32
    return %c0_i32, %c0_i32_0 : i32, i32
  }
  func.func @transform_3(%arg0: i32, %arg1: i32) -> (i32, i32) {
    %c0_i32 = arith.constant 0 : i32
    %c0_i32_0 = arith.constant 0 : i32
    %c0_i32_1 = arith.constant 0 : i32
    return %c0_i32, %c0_i32_0 : i32, i32
  }
  func.func @transform_4(%arg0: i32, %arg1: i32) -> (i32, i32, i32, i32) {
    %c0_i32 = arith.constant 0 : i32
    %c0_i32_0 = arith.constant 0 : i32
    %c0_i32_1 = arith.constant 0 : i32
    return %arg0, %arg1, %c0_i32, %c0_i32_0 : i32, i32, i32, i32
  }
}

module attributes {stable_mosaic.version = 11 : i64} {
  func.func @kernel(%arg0: i32, %arg1: i32, %arg2: memref<1x1x192x128xbf16, #tpu.memory_space<vmem>>, %arg3: memref<96x192xbf16, #tpu.memory_space<vmem>>, %arg4: memref<96x1xf32, #tpu.memory_space<vmem>>, %arg5: memref<96x1xf32, #tpu.memory_space<vmem>>, %arg6: memref<1x1x96x128xbf16, #tpu.memory_space<vmem>>) attributes {dimension_semantics = [#tpu.dimension_semantics<parallel>, #tpu.dimension_semantics<parallel>], iteration_bounds = array<i64: 2, 1>, scalar_prefetch = 0 : i64, scratch_operands = 0 : i64, tpu.core_type = #tpu.core_type<tc>, window_params = [{transform_indices = @transform_0, window_bounds = array<i64: 1, 1, 192, 128>}, {pipeline_mode = #tpu.pipeline_mode<synchronous>, transform_indices = @transform_1, window_bounds = array<i64: 96, 192>}, {pipeline_mode = #tpu.pipeline_mode<synchronous>, transform_indices = @transform_2, window_bounds = array<i64: 96, 1>}, {pipeline_mode = #tpu.pipeline_mode<synchronous>, transform_indices = @transform_3, window_bounds = array<i64: 96, 1>}, {transform_indices = @transform_4, window_bounds = array<i64: 1, 1, 96, 128>}]} {
    %c0 = arith.constant 0 : index
    %c0_0 = arith.constant 0 : index
    %c0_1 = arith.constant 0 : index
    %c0_2 = arith.constant 0 : index
    %0 = vector.load %arg2[%c0, %c0_0, %c0_1, %c0_2] : memref<1x1x192x128xbf16, #tpu.memory_space<vmem>>, vector<1x1x192x128xbf16>
    %1 = vector.shape_cast %0 : vector<1x1x192x128xbf16> to vector<192x128xbf16>
    %c0_3 = arith.constant 0 : index
    %c0_4 = arith.constant 0 : index
    %2 = vector.load %arg3[%c0_3, %c0_4] : memref<96x192xbf16, #tpu.memory_space<vmem>>, vector<96x192xbf16>
    %cst = arith.constant dense<0.000000e+00> : vector<96x128xf32>
    %3 = tpu.matmul %2, %1, %cst {dimension_numbers = #tpu.dot_dimension_numbers<[1], [0], [0], [1], [0, 0, 1, 1], [], []>} : vector<96x192xbf16>, vector<192x128xbf16>, vector<96x128xf32> -> vector<96x128xf32>
    %c0_5 = arith.constant 0 : index
    %c0_6 = arith.constant 0 : index
    %4 = vector.load %arg4[%c0_5, %c0_6] : memref<96x1xf32, #tpu.memory_space<vmem>>, vector<96x1xf32>
    %5 = vector.broadcast %4 : vector<96x1xf32> to vector<96x128xf32>
    %6 = arith.mulf %3, %5 : vector<96x128xf32>
    %c0_7 = arith.constant 0 : index
    %c0_8 = arith.constant 0 : index
    %7 = vector.load %arg5[%c0_7, %c0_8] : memref<96x1xf32, #tpu.memory_space<vmem>>, vector<96x1xf32>
    %8 = vector.broadcast %7 : vector<96x1xf32> to vector<96x128xf32>
    %9 = arith.addf %6, %8 : vector<96x128xf32>
    %cst_9 = arith.constant 0.000000e+00 : f32
    %10 = vector.broadcast %cst_9 : f32 to vector<96x128xf32>
    %11 = arith.cmpf oge, %9, %10 : vector<96x128xf32>
    %cst_10 = arith.constant 0.00999999977 : f32
    %12 = vector.broadcast %cst_10 : f32 to vector<96x128xf32>
    %13 = arith.mulf %12, %9 : vector<96x128xf32>
    %14 = arith.select %11, %9, %13 : vector<96x128xi1>, vector<96x128xf32>
    %15 = arith.truncf %14 : vector<96x128xf32> to vector<96x128xbf16>
    %c0_11 = arith.constant 0 : index
    %c0_12 = arith.constant 0 : index
    %c0_13 = arith.constant 0 : index
    %c0_14 = arith.constant 0 : index
    %16 = vector.load %arg6[%c0_11, %c0_12, %c0_13, %c0_14] : memref<1x1x96x128xbf16, #tpu.memory_space<vmem>>, vector<1x1x96x128xbf16>
    %17 = vector.shape_cast %16 : vector<1x1x96x128xbf16> to vector<96x128xbf16>
    %18 = vector.shape_cast %15 : vector<96x128xbf16> to vector<1x1x96x128xbf16>
    tpu.vector_store %arg6[%c0_11, %c0_12, %c0_13, %c0_14], %18 {strides = array<i32>} : memref<1x1x96x128xbf16, #tpu.memory_space<vmem>>, vector<1x1x96x128xbf16>,
    return
  }
  func.func @transform_0(%arg0: i32, %arg1: i32) -> (i32, i32, i32, i32) {
    %c1_i32 = arith.constant 1 : i32
    %0 = arith.muli %arg1, %c1_i32 : i32
    %c0_i32 = arith.constant 0 : i32
    %1 = arith.addi %0, %c0_i32 : i32
    %c0_i32_0 = arith.constant 0 : i32
    %c0_i32_1 = arith.constant 0 : i32
    %c0_i32_2 = arith.constant 0 : i32
    return %arg0, %1, %c0_i32_0, %c0_i32_1 : i32, i32, i32, i32
  }
  func.func @transform_1(%arg0: i32, %arg1: i32) -> (i32, i32) {
    %c0_i32 = arith.constant 0 : i32
    %c0_i32_0 = arith.constant 0 : i32
    %c0_i32_1 = arith.constant 0 : i32
    return %c0_i32, %c0_i32_0 : i32, i32
  }
  func.func @transform_2(%arg0: i32, %arg1: i32) -> (i32, i32) {
    %c0_i32 = arith.constant 0 : i32
    %c0_i32_0 = arith.constant 0 : i32
    %c0_i32_1 = arith.constant 0 : i32
    return %c0_i32, %c0_i32_0 : i32, i32
  }
  func.func @transform_3(%arg0: i32, %arg1: i32) -> (i32, i32) {
    %c0_i32 = arith.constant 0 : i32
    %c0_i32_0 = arith.constant 0 : i32
    %c0_i32_1 = arith.constant 0 : i32
    return %c0_i32, %c0_i32_0 : i32, i32
  }
  func.func @transform_4(%arg0: i32, %arg1: i32) -> (i32, i32, i32, i32) {
    %c0_i32 = arith.constant 0 : i32
    %c0_i32_0 = arith.constant 0 : i32
    %c0_i32_1 = arith.constant 0 : i32
    return %arg0, %arg1, %c0_i32, %c0_i32_0 : i32, i32, i32, i32
  }
}

module attributes {stable_mosaic.version = 11 : i64} {
  func.func @kernel(%arg0: i32, %arg1: i32, %arg2: memref<1x1x96x128xbf16, #tpu.memory_space<vmem>>, %arg3: memref<32x96xbf16, #tpu.memory_space<vmem>>, %arg4: memref<32x1xf32, #tpu.memory_space<vmem>>, %arg5: memref<32x1xf32, #tpu.memory_space<vmem>>, %arg6: memref<1x1x32x128xbf16, #tpu.memory_space<vmem>>) attributes {dimension_semantics = [#tpu.dimension_semantics<parallel>, #tpu.dimension_semantics<parallel>], iteration_bounds = array<i64: 2, 1>, scalar_prefetch = 0 : i64, scratch_operands = 0 : i64, tpu.core_type = #tpu.core_type<tc>, window_params = [{transform_indices = @transform_0, window_bounds = array<i64: 1, 1, 96, 128>}, {pipeline_mode = #tpu.pipeline_mode<synchronous>, transform_indices = @transform_1, window_bounds = array<i64: 32, 96>}, {pipeline_mode = #tpu.pipeline_mode<synchronous>, transform_indices = @transform_2, window_bounds = array<i64: 32, 1>}, {pipeline_mode = #tpu.pipeline_mode<synchronous>, transform_indices = @transform_3, window_bounds = array<i64: 32, 1>}, {transform_indices = @transform_4, window_bounds = array<i64: 1, 1, 32, 128>}]} {
    %c0 = arith.constant 0 : index
    %c0_0 = arith.constant 0 : index
    %c0_1 = arith.constant 0 : index
    %c0_2 = arith.constant 0 : index
    %0 = vector.load %arg2[%c0, %c0_0, %c0_1, %c0_2] : memref<1x1x96x128xbf16, #tpu.memory_space<vmem>>, vector<1x1x96x128xbf16>
    %1 = vector.shape_cast %0 : vector<1x1x96x128xbf16> to vector<96x128xbf16>
    %c0_3 = arith.constant 0 : index
    %c0_4 = arith.constant 0 : index
    %2 = vector.load %arg3[%c0_3, %c0_4] : memref<32x96xbf16, #tpu.memory_space<vmem>>, vector<32x96xbf16>
    %cst = arith.constant dense<0.000000e+00> : vector<32x128xf32>
    %3 = tpu.matmul %2, %1, %cst {dimension_numbers = #tpu.dot_dimension_numbers<[1], [0], [0], [1], [0, 0, 1, 1], [], []>} : vector<32x96xbf16>, vector<96x128xbf16>, vector<32x128xf32> -> vector<32x128xf32>
    %c0_5 = arith.constant 0 : index
    %c0_6 = arith.constant 0 : index
    %4 = vector.load %arg4[%c0_5, %c0_6] : memref<32x1xf32, #tpu.memory_space<vmem>>, vector<32x1xf32>
    %5 = vector.broadcast %4 : vector<32x1xf32> to vector<32x128xf32>
    %6 = arith.mulf %3, %5 : vector<32x128xf32>
    %c0_7 = arith.constant 0 : index
    %c0_8 = arith.constant 0 : index
    %7 = vector.load %arg5[%c0_7, %c0_8] : memref<32x1xf32, #tpu.memory_space<vmem>>, vector<32x1xf32>
    %8 = vector.broadcast %7 : vector<32x1xf32> to vector<32x128xf32>
    %9 = arith.addf %6, %8 : vector<32x128xf32>
    %10 = arith.truncf %9 : vector<32x128xf32> to vector<32x128xbf16>
    %c0_9 = arith.constant 0 : index
    %c0_10 = arith.constant 0 : index
    %c0_11 = arith.constant 0 : index
    %c0_12 = arith.constant 0 : index
    %11 = vector.load %arg6[%c0_9, %c0_10, %c0_11, %c0_12] : memref<1x1x32x128xbf16, #tpu.memory_space<vmem>>, vector<1x1x32x128xbf16>
    %12 = vector.shape_cast %11 : vector<1x1x32x128xbf16> to vector<32x128xbf16>
    %13 = vector.shape_cast %10 : vector<32x128xbf16> to vector<1x1x32x128xbf16>
    tpu.vector_store %arg6[%c0_9, %c0_10, %c0_11, %c0_12], %13 {strides = array<i32>} : memref<1x1x32x128xbf16, #tpu.memory_space<vmem>>, vector<1x1x32x128xbf16>,
    return
  }
  func.func @transform_0(%arg0: i32, %arg1: i32) -> (i32, i32, i32, i32) {
    %c1_i32 = arith.constant 1 : i32
    %0 = arith.muli %arg1, %c1_i32 : i32
    %c0_i32 = arith.constant 0 : i32
    %1 = arith.addi %0, %c0_i32 : i32
    %c0_i32_0 = arith.constant 0 : i32
    %c0_i32_1 = arith.constant 0 : i32
    %c0_i32_2 = arith.constant 0 : i32
    return %arg0, %1, %c0_i32_0, %c0_i32_1 : i32, i32, i32, i32
  }
  func.func @transform_1(%arg0: i32, %arg1: i32) -> (i32, i32) {
    %c0_i32 = arith.constant 0 : i32
    %c0_i32_0 = arith.constant 0 : i32
    %c0_i32_1 = arith.constant 0 : i32
    return %c0_i32, %c0_i32_0 : i32, i32
  }
  func.func @transform_2(%arg0: i32, %arg1: i32) -> (i32, i32) {
    %c0_i32 = arith.constant 0 : i32
    %c0_i32_0 = arith.constant 0 : i32
    %c0_i32_1 = arith.constant 0 : i32
    return %c0_i32, %c0_i32_0 : i32, i32
  }
  func.func @transform_3(%arg0: i32, %arg1: i32) -> (i32, i32) {
    %c0_i32 = arith.constant 0 : i32
    %c0_i32_0 = arith.constant 0 : i32
    %c0_i32_1 = arith.constant 0 : i32
    return %c0_i32, %c0_i32_0 : i32, i32
  }
  func.func @transform_4(%arg0: i32, %arg1: i32) -> (i32, i32, i32, i32) {
    %c0_i32 = arith.constant 0 : i32
    %c0_i32_0 = arith.constant 0 : i32
    %c0_i32_1 = arith.constant 0 : i32
    return %arg0, %arg1, %c0_i32, %c0_i32_0 : i32, i32, i32, i32
  }
}

module attributes {stable_mosaic.version = 11 : i64} {
  func.func @_cgf_add_kernel(%arg0: i32, %arg1: i32, %arg2: memref<1x32x16xbf16, #tpu.memory_space<vmem>>, %arg3: memref<1x2x32x16xbf16, #tpu.memory_space<vmem>>, %arg4: memref<1x2x32x16xbf16, #tpu.memory_space<vmem>>) attributes {dimension_semantics = [#tpu.dimension_semantics<parallel>, #tpu.dimension_semantics<parallel>], iteration_bounds = array<i64: 2, 1>, scalar_prefetch = 0 : i64, scratch_operands = 0 : i64, tpu.core_type = #tpu.core_type<tc>, window_params = [{transform_indices = @transform_0, window_bounds = array<i64: 1, 32, 16>}, {transform_indices = @transform_1, window_bounds = array<i64: 1, 2, 32, 16>}, {transform_indices = @transform_2, window_bounds = array<i64: 1, 2, 32, 16>}]} {
    %c0 = arith.constant 0 : index
    %c0_0 = arith.constant 0 : index
    %c0_1 = arith.constant 0 : index
    %0 = vector.load %arg2[%c0, %c0_0, %c0_1] : memref<1x32x16xbf16, #tpu.memory_space<vmem>>, vector<1x32x16xbf16>
    %1 = vector.shape_cast %0 : vector<1x32x16xbf16> to vector<32x16xbf16>
    %2 = arith.extf %1 : vector<32x16xbf16> to vector<32x16xf32>
    %3 = vector.shape_cast %2 : vector<32x16xf32> to vector<1x32x16xf32>
    %c0_2 = arith.constant 0 : index
    %c0_3 = arith.constant 0 : index
    %c0_4 = arith.constant 0 : index
    %c0_5 = arith.constant 0 : index
    %4 = vector.load %arg3[%c0_2, %c0_3, %c0_4, %c0_5] : memref<1x2x32x16xbf16, #tpu.memory_space<vmem>>, vector<1x2x32x16xbf16>
    %5 = vector.shape_cast %4 : vector<1x2x32x16xbf16> to vector<2x32x16xbf16>
    %6 = arith.extf %5 : vector<2x32x16xbf16> to vector<2x32x16xf32>
    %7 = vector.broadcast %3 : vector<1x32x16xf32> to vector<2x32x16xf32>
    %8 = arith.addf %7, %6 : vector<2x32x16xf32>
    %9 = arith.truncf %8 : vector<2x32x16xf32> to vector<2x32x16xbf16>
    %c0_6 = arith.constant 0 : index
    %c0_7 = arith.constant 0 : index
    %c0_8 = arith.constant 0 : index
    %c0_9 = arith.constant 0 : index
    %10 = vector.load %arg4[%c0_6, %c0_7, %c0_8, %c0_9] : memref<1x2x32x16xbf16, #tpu.memory_space<vmem>>, vector<1x2x32x16xbf16>
    %11 = vector.shape_cast %10 : vector<1x2x32x16xbf16> to vector<2x32x16xbf16>
    %12 = vector.shape_cast %9 : vector<2x32x16xbf16> to vector<1x2x32x16xbf16>
    tpu.vector_store %arg4[%c0_6, %c0_7, %c0_8, %c0_9], %12 {strides = array<i32>} : memref<1x2x32x16xbf16, #tpu.memory_space<vmem>>, vector<1x2x32x16xbf16>,
    return
  }
  func.func @transform_0(%arg0: i32, %arg1: i32) -> (i32, i32, i32) {
    %c0_i32 = arith.constant 0 : i32
    %c0_i32_0 = arith.constant 0 : i32
    %c0_i32_1 = arith.constant 0 : i32
    return %arg0, %c0_i32, %c0_i32_0 : i32, i32, i32
  }
  func.func @transform_1(%arg0: i32, %arg1: i32) -> (i32, i32, i32, i32) {
    %c0_i32 = arith.constant 0 : i32
    %c0_i32_0 = arith.constant 0 : i32
    %c0_i32_1 = arith.constant 0 : i32
    return %arg0, %arg1, %c0_i32, %c0_i32_0 : i32, i32, i32, i32
  }
  func.func @transform_2(%arg0: i32, %arg1: i32) -> (i32, i32, i32, i32) {
    %c0_i32 = arith.constant 0 : i32
    %c0_i32_0 = arith.constant 0 : i32
    %c0_i32_1 = arith.constant 0 : i32
    return %arg0, %arg1, %c0_i32, %c0_i32_0 : i32, i32, i32, i32
  }
}

module attributes {stable_mosaic.version = 11 : i64} {
  func.func @kernel(%arg0: i32, %arg1: i32, %arg2: memref<1x1x32x256xbf16, #tpu.memory_space<vmem>>, %arg3: memref<32x800xbf16, #tpu.memory_space<vmem>>, %arg4: memref<32x1xf32, #tpu.memory_space<vmem>>, %arg5: memref<32x1xf32, #tpu.memory_space<vmem>>, %arg6: memref<1x1x32x128xbf16, #tpu.memory_space<vmem>>) attributes {dimension_semantics = [#tpu.dimension_semantics<parallel>, #tpu.dimension_semantics<parallel>], iteration_bounds = array<i64: 2, 2>, scalar_prefetch = 0 : i64, scratch_operands = 0 : i64, tpu.core_type = #tpu.core_type<tc>, window_params = [{transform_indices = @transform_0, window_bounds = array<i64: 1, 1, 32, 256>}, {pipeline_mode = #tpu.pipeline_mode<synchronous>, transform_indices = @transform_1, window_bounds = array<i64: 32, 800>}, {pipeline_mode = #tpu.pipeline_mode<synchronous>, transform_indices = @transform_2, window_bounds = array<i64: 32, 1>}, {pipeline_mode = #tpu.pipeline_mode<synchronous>, transform_indices = @transform_3, window_bounds = array<i64: 32, 1>}, {transform_indices = @transform_4, window_bounds = array<i64: 1, 1, 32, 128>}]} {
    %c0 = arith.constant 0 : index
    %c0_0 = arith.constant 0 : index
    %c0_1 = arith.constant 0 : index
    %c0_2 = arith.constant 0 : index
    %0 = vector.load %arg2[%c0, %c0_0, %c0_1, %c0_2] : memref<1x1x32x256xbf16, #tpu.memory_space<vmem>>, vector<1x1x32x128xbf16>
    %1 = vector.shape_cast %0 : vector<1x1x32x128xbf16> to vector<32x128xbf16>
    %c0_3 = arith.constant 0 : index
    %c0_4 = arith.constant 0 : index
    %c0_5 = arith.constant 0 : index
    %c1 = arith.constant 1 : index
    %2 = vector.load %arg2[%c0_3, %c0_4, %c0_5, %c1] : memref<1x1x32x256xbf16, #tpu.memory_space<vmem>>, vector<1x1x32x128xbf16>
    %3 = vector.shape_cast %2 : vector<1x1x32x128xbf16> to vector<32x128xbf16>
    %c0_6 = arith.constant 0 : index
    %c0_7 = arith.constant 0 : index
    %c0_8 = arith.constant 0 : index
    %c2 = arith.constant 2 : index
    %4 = vector.load %arg2[%c0_6, %c0_7, %c0_8, %c2] : memref<1x1x32x256xbf16, #tpu.memory_space<vmem>>, vector<1x1x32x128xbf16>
    %5 = vector.shape_cast %4 : vector<1x1x32x128xbf16> to vector<32x128xbf16>
    %c0_9 = arith.constant 0 : index
    %c0_10 = arith.constant 0 : index
    %c0_11 = arith.constant 0 : index
    %c3 = arith.constant 3 : index
    %6 = vector.load %arg2[%c0_9, %c0_10, %c0_11, %c3] : memref<1x1x32x256xbf16, #tpu.memory_space<vmem>>, vector<1x1x32x128xbf16>
    %7 = vector.shape_cast %6 : vector<1x1x32x128xbf16> to vector<32x128xbf16>
    %c0_12 = arith.constant 0 : index
    %c0_13 = arith.constant 0 : index
    %c0_14 = arith.constant 0 : index
    %c4 = arith.constant 4 : index
    %8 = vector.load %arg2[%c0_12, %c0_13, %c0_14, %c4] : memref<1x1x32x256xbf16, #tpu.memory_space<vmem>>, vector<1x1x32x128xbf16>
    %9 = vector.shape_cast %8 : vector<1x1x32x128xbf16> to vector<32x128xbf16>
    %c0_15 = arith.constant 0 : index
    %c0_16 = arith.constant 0 : index
    %c0_17 = arith.constant 0 : index
    %c8 = arith.constant 8 : index
    %10 = vector.load %arg2[%c0_15, %c0_16, %c0_17, %c8] : memref<1x1x32x256xbf16, #tpu.memory_space<vmem>>, vector<1x1x32x128xbf16>
    %11 = vector.shape_cast %10 : vector<1x1x32x128xbf16> to vector<32x128xbf16>
    %c0_18 = arith.constant 0 : index
    %c0_19 = arith.constant 0 : index
    %c0_20 = arith.constant 0 : index
    %c9 = arith.constant 9 : index
    %12 = vector.load %arg2[%c0_18, %c0_19, %c0_20, %c9] : memref<1x1x32x256xbf16, #tpu.memory_space<vmem>>, vector<1x1x32x128xbf16>
    %13 = vector.shape_cast %12 : vector<1x1x32x128xbf16> to vector<32x128xbf16>
    %c0_21 = arith.constant 0 : index
    %c0_22 = arith.constant 0 : index
    %c0_23 = arith.constant 0 : index
    %c10 = arith.constant 10 : index
    %14 = vector.load %arg2[%c0_21, %c0_22, %c0_23, %c10] : memref<1x1x32x256xbf16, #tpu.memory_space<vmem>>, vector<1x1x32x128xbf16>
    %15 = vector.shape_cast %14 : vector<1x1x32x128xbf16> to vector<32x128xbf16>
    %c0_24 = arith.constant 0 : index
    %c0_25 = arith.constant 0 : index
    %c0_26 = arith.constant 0 : index
    %c11 = arith.constant 11 : index
    %16 = vector.load %arg2[%c0_24, %c0_25, %c0_26, %c11] : memref<1x1x32x256xbf16, #tpu.memory_space<vmem>>, vector<1x1x32x128xbf16>
    %17 = vector.shape_cast %16 : vector<1x1x32x128xbf16> to vector<32x128xbf16>
    %c0_27 = arith.constant 0 : index
    %c0_28 = arith.constant 0 : index
    %c0_29 = arith.constant 0 : index
    %c12 = arith.constant 12 : index
    %18 = vector.load %arg2[%c0_27, %c0_28, %c0_29, %c12] : memref<1x1x32x256xbf16, #tpu.memory_space<vmem>>, vector<1x1x32x128xbf16>
    %19 = vector.shape_cast %18 : vector<1x1x32x128xbf16> to vector<32x128xbf16>
    %c0_30 = arith.constant 0 : index
    %c0_31 = arith.constant 0 : index
    %c0_32 = arith.constant 0 : index
    %c16 = arith.constant 16 : index
    %20 = vector.load %arg2[%c0_30, %c0_31, %c0_32, %c16] : memref<1x1x32x256xbf16, #tpu.memory_space<vmem>>, vector<1x1x32x128xbf16>
    %21 = vector.shape_cast %20 : vector<1x1x32x128xbf16> to vector<32x128xbf16>
    %c0_33 = arith.constant 0 : index
    %c0_34 = arith.constant 0 : index
    %c0_35 = arith.constant 0 : index
    %c17 = arith.constant 17 : index
    %22 = vector.load %arg2[%c0_33, %c0_34, %c0_35, %c17] : memref<1x1x32x256xbf16, #tpu.memory_space<vmem>>, vector<1x1x32x128xbf16>
    %23 = vector.shape_cast %22 : vector<1x1x32x128xbf16> to vector<32x128xbf16>
    %c0_36 = arith.constant 0 : index
    %c0_37 = arith.constant 0 : index
    %c0_38 = arith.constant 0 : index
    %c18 = arith.constant 18 : index
    %24 = vector.load %arg2[%c0_36, %c0_37, %c0_38, %c18] : memref<1x1x32x256xbf16, #tpu.memory_space<vmem>>, vector<1x1x32x128xbf16>
    %25 = vector.shape_cast %24 : vector<1x1x32x128xbf16> to vector<32x128xbf16>
    %c0_39 = arith.constant 0 : index
    %c0_40 = arith.constant 0 : index
    %c0_41 = arith.constant 0 : index
    %c19 = arith.constant 19 : index
    %26 = vector.load %arg2[%c0_39, %c0_40, %c0_41, %c19] : memref<1x1x32x256xbf16, #tpu.memory_space<vmem>>, vector<1x1x32x128xbf16>
    %27 = vector.shape_cast %26 : vector<1x1x32x128xbf16> to vector<32x128xbf16>
    %c0_42 = arith.constant 0 : index
    %c0_43 = arith.constant 0 : index
    %c0_44 = arith.constant 0 : index
    %c20 = arith.constant 20 : index
    %28 = vector.load %arg2[%c0_42, %c0_43, %c0_44, %c20] : memref<1x1x32x256xbf16, #tpu.memory_space<vmem>>, vector<1x1x32x128xbf16>
    %29 = vector.shape_cast %28 : vector<1x1x32x128xbf16> to vector<32x128xbf16>
    %c0_45 = arith.constant 0 : index
    %c0_46 = arith.constant 0 : index
    %c0_47 = arith.constant 0 : index
    %c24 = arith.constant 24 : index
    %30 = vector.load %arg2[%c0_45, %c0_46, %c0_47, %c24] : memref<1x1x32x256xbf16, #tpu.memory_space<vmem>>, vector<1x1x32x128xbf16>
    %31 = vector.shape_cast %30 : vector<1x1x32x128xbf16> to vector<32x128xbf16>
    %c0_48 = arith.constant 0 : index
    %c0_49 = arith.constant 0 : index
    %c0_50 = arith.constant 0 : index
    %c25 = arith.constant 25 : index
    %32 = vector.load %arg2[%c0_48, %c0_49, %c0_50, %c25] : memref<1x1x32x256xbf16, #tpu.memory_space<vmem>>, vector<1x1x32x128xbf16>
    %33 = vector.shape_cast %32 : vector<1x1x32x128xbf16> to vector<32x128xbf16>
    %c0_51 = arith.constant 0 : index
    %c0_52 = arith.constant 0 : index
    %c0_53 = arith.constant 0 : index
    %c26 = arith.constant 26 : index
    %34 = vector.load %arg2[%c0_51, %c0_52, %c0_53, %c26] : memref<1x1x32x256xbf16, #tpu.memory_space<vmem>>, vector<1x1x32x128xbf16>
    %35 = vector.shape_cast %34 : vector<1x1x32x128xbf16> to vector<32x128xbf16>
    %c0_54 = arith.constant 0 : index
    %c0_55 = arith.constant 0 : index
    %c0_56 = arith.constant 0 : index
    %c27 = arith.constant 27 : index
    %36 = vector.load %arg2[%c0_54, %c0_55, %c0_56, %c27] : memref<1x1x32x256xbf16, #tpu.memory_space<vmem>>, vector<1x1x32x128xbf16>
    %37 = vector.shape_cast %36 : vector<1x1x32x128xbf16> to vector<32x128xbf16>
    %c0_57 = arith.constant 0 : index
    %c0_58 = arith.constant 0 : index
    %c0_59 = arith.constant 0 : index
    %c28 = arith.constant 28 : index
    %38 = vector.load %arg2[%c0_57, %c0_58, %c0_59, %c28] : memref<1x1x32x256xbf16, #tpu.memory_space<vmem>>, vector<1x1x32x128xbf16>
    %39 = vector.shape_cast %38 : vector<1x1x32x128xbf16> to vector<32x128xbf16>
    %c0_60 = arith.constant 0 : index
    %c0_61 = arith.constant 0 : index
    %c0_62 = arith.constant 0 : index
    %c32 = arith.constant 32 : index
    %40 = vector.load %arg2[%c0_60, %c0_61, %c0_62, %c32] : memref<1x1x32x256xbf16, #tpu.memory_space<vmem>>, vector<1x1x32x128xbf16>
    %41 = vector.shape_cast %40 : vector<1x1x32x128xbf16> to vector<32x128xbf16>
    %c0_63 = arith.constant 0 : index
    %c0_64 = arith.constant 0 : index
    %c0_65 = arith.constant 0 : index
    %c33 = arith.constant 33 : index
    %42 = vector.load %arg2[%c0_63, %c0_64, %c0_65, %c33] : memref<1x1x32x256xbf16, #tpu.memory_space<vmem>>, vector<1x1x32x128xbf16>
    %43 = vector.shape_cast %42 : vector<1x1x32x128xbf16> to vector<32x128xbf16>
    %c0_66 = arith.constant 0 : index
    %c0_67 = arith.constant 0 : index
    %c0_68 = arith.constant 0 : index
    %c34 = arith.constant 34 : index
    %44 = vector.load %arg2[%c0_66, %c0_67, %c0_68, %c34] : memref<1x1x32x256xbf16, #tpu.memory_space<vmem>>, vector<1x1x32x128xbf16>
    %45 = vector.shape_cast %44 : vector<1x1x32x128xbf16> to vector<32x128xbf16>
    %c0_69 = arith.constant 0 : index
    %c0_70 = arith.constant 0 : index
    %c0_71 = arith.constant 0 : index
    %c35 = arith.constant 35 : index
    %46 = vector.load %arg2[%c0_69, %c0_70, %c0_71, %c35] : memref<1x1x32x256xbf16, #tpu.memory_space<vmem>>, vector<1x1x32x128xbf16>
    %47 = vector.shape_cast %46 : vector<1x1x32x128xbf16> to vector<32x128xbf16>
    %c0_72 = arith.constant 0 : index
    %c0_73 = arith.constant 0 : index
    %c0_74 = arith.constant 0 : index
    %c36 = arith.constant 36 : index
    %48 = vector.load %arg2[%c0_72, %c0_73, %c0_74, %c36] : memref<1x1x32x256xbf16, #tpu.memory_space<vmem>>, vector<1x1x32x128xbf16>
    %49 = vector.shape_cast %48 : vector<1x1x32x128xbf16> to vector<32x128xbf16>
    %50 = tpu.concatenate %1, %3, %5, %7, %9, %11, %13, %15, %17, %19, %21, %23, %25, %27, %29, %31 in 0 : vector<32x128xbf16>, vector<32x128xbf16>, vector<32x128xbf16>, vector<32x128xbf16>, vector<32x128xbf16>, vector<32x128xbf16>, vector<32x128xbf16>, vector<32x128xbf16>, vector<32x128xbf16>, vector<32x128xbf16>, vector<32x128xbf16>, vector<32x128xbf16>, vector<32x128xbf16>, vector<32x128xbf16>, vector<32x128xbf16>, vector<32x128xbf16> -> vector<512x128xbf16>
    %51 = tpu.concatenate %33, %35, %37, %39, %41, %43, %45, %47, %49 in 0 : vector<32x128xbf16>, vector<32x128xbf16>, vector<32x128xbf16>, vector<32x128xbf16>, vector<32x128xbf16>, vector<32x128xbf16>, vector<32x128xbf16>, vector<32x128xbf16>, vector<32x128xbf16> -> vector<288x128xbf16>
    %52 = tpu.concatenate %50, %51 in 0 : vector<512x128xbf16>, vector<288x128xbf16> -> vector<800x128xbf16>
    %c0_75 = arith.constant 0 : index
    %c0_76 = arith.constant 0 : index
    %53 = vector.load %arg3[%c0_75, %c0_76] : memref<32x800xbf16, #tpu.memory_space<vmem>>, vector<32x800xbf16>
    %cst = arith.constant dense<0.000000e+00> : vector<32x128xf32>
    %54 = tpu.matmul %53, %52, %cst {dimension_numbers = #tpu.dot_dimension_numbers<[1], [0], [0], [1], [0, 0, 1, 1], [], []>} : vector<32x800xbf16>, vector<800x128xbf16>, vector<32x128xf32> -> vector<32x128xf32>
    %c0_77 = arith.constant 0 : index
    %c0_78 = arith.constant 0 : index
    %55 = vector.load %arg4[%c0_77, %c0_78] : memref<32x1xf32, #tpu.memory_space<vmem>>, vector<32x1xf32>
    %56 = vector.broadcast %55 : vector<32x1xf32> to vector<32x128xf32>
    %57 = arith.mulf %54, %56 : vector<32x128xf32>
    %c0_79 = arith.constant 0 : index
    %c0_80 = arith.constant 0 : index
    %58 = vector.load %arg5[%c0_79, %c0_80] : memref<32x1xf32, #tpu.memory_space<vmem>>, vector<32x1xf32>
    %59 = vector.broadcast %58 : vector<32x1xf32> to vector<32x128xf32>
    %60 = arith.addf %57, %59 : vector<32x128xf32>
    %cst_81 = arith.constant 0.000000e+00 : f32
    %61 = vector.broadcast %cst_81 : f32 to vector<32x128xf32>
    %62 = arith.cmpf oge, %60, %61 : vector<32x128xf32>
    %cst_82 = arith.constant 0.00999999977 : f32
    %63 = vector.broadcast %cst_82 : f32 to vector<32x128xf32>
    %64 = arith.mulf %63, %60 : vector<32x128xf32>
    %65 = arith.select %62, %60, %64 : vector<32x128xi1>, vector<32x128xf32>
    %66 = arith.truncf %65 : vector<32x128xf32> to vector<32x128xbf16>
    %c0_83 = arith.constant 0 : index
    %c0_84 = arith.constant 0 : index
    %c0_85 = arith.constant 0 : index
    %c0_86 = arith.constant 0 : index
    %67 = vector.load %arg6[%c0_83, %c0_84, %c0_85, %c0_86] : memref<1x1x32x128xbf16, #tpu.memory_space<vmem>>, vector<1x1x32x128xbf16>
    %68 = vector.shape_cast %67 : vector<1x1x32x128xbf16> to vector<32x128xbf16>
    %69 = vector.shape_cast %66 : vector<32x128xbf16> to vector<1x1x32x128xbf16>
    tpu.vector_store %arg6[%c0_83, %c0_84, %c0_85, %c0_86], %69 {strides = array<i32>} : memref<1x1x32x128xbf16, #tpu.memory_space<vmem>>, vector<1x1x32x128xbf16>,
    return
  }
  func.func @transform_0(%arg0: i32, %arg1: i32) -> (i32, i32, i32, i32) {
    %c1_i32 = arith.constant 1 : i32
    %0 = arith.muli %arg1, %c1_i32 : i32
    %c0_i32 = arith.constant 0 : i32
    %1 = arith.addi %0, %c0_i32 : i32
    %c0_i32_0 = arith.constant 0 : i32
    %c0_i32_1 = arith.constant 0 : i32
    %c0_i32_2 = arith.constant 0 : i32
    return %arg0, %1, %c0_i32_0, %c0_i32_1 : i32, i32, i32, i32
  }
  func.func @transform_1(%arg0: i32, %arg1: i32) -> (i32, i32) {
    %c0_i32 = arith.constant 0 : i32
    %c0_i32_0 = arith.constant 0 : i32
    %c0_i32_1 = arith.constant 0 : i32
    return %c0_i32, %c0_i32_0 : i32, i32
  }
  func.func @transform_2(%arg0: i32, %arg1: i32) -> (i32, i32) {
    %c0_i32 = arith.constant 0 : i32
    %c0_i32_0 = arith.constant 0 : i32
    %c0_i32_1 = arith.constant 0 : i32
    return %c0_i32, %c0_i32_0 : i32, i32
  }
  func.func @transform_3(%arg0: i32, %arg1: i32) -> (i32, i32) {
    %c0_i32 = arith.constant 0 : i32
    %c0_i32_0 = arith.constant 0 : i32
    %c0_i32_1 = arith.constant 0 : i32
    return %c0_i32, %c0_i32_0 : i32, i32
  }
  func.func @transform_4(%arg0: i32, %arg1: i32) -> (i32, i32, i32, i32) {
    %c0_i32 = arith.constant 0 : i32
    %c0_i32_0 = arith.constant 0 : i32
    %c0_i32_1 = arith.constant 0 : i32
    return %arg0, %arg1, %c0_i32, %c0_i32_0 : i32, i32, i32, i32
  }
}

module attributes {stable_mosaic.version = 11 : i64} {
  func.func @kernel(%arg0: i32, %arg1: i32, %arg2: memref<1x1x32x128xbf16, #tpu.memory_space<vmem>>, %arg3: memref<32x32xbf16, #tpu.memory_space<vmem>>, %arg4: memref<32x1xf32, #tpu.memory_space<vmem>>, %arg5: memref<32x1xf32, #tpu.memory_space<vmem>>, %arg6: memref<1x1x32x128xbf16, #tpu.memory_space<vmem>>) attributes {dimension_semantics = [#tpu.dimension_semantics<parallel>, #tpu.dimension_semantics<parallel>], iteration_bounds = array<i64: 2, 2>, scalar_prefetch = 0 : i64, scratch_operands = 0 : i64, tpu.core_type = #tpu.core_type<tc>, window_params = [{transform_indices = @transform_0, window_bounds = array<i64: 1, 1, 32, 128>}, {pipeline_mode = #tpu.pipeline_mode<synchronous>, transform_indices = @transform_1, window_bounds = array<i64: 32, 32>}, {pipeline_mode = #tpu.pipeline_mode<synchronous>, transform_indices = @transform_2, window_bounds = array<i64: 32, 1>}, {pipeline_mode = #tpu.pipeline_mode<synchronous>, transform_indices = @transform_3, window_bounds = array<i64: 32, 1>}, {transform_indices = @transform_4, window_bounds = array<i64: 1, 1, 32, 128>}]} {
    %c0 = arith.constant 0 : index
    %c0_0 = arith.constant 0 : index
    %c0_1 = arith.constant 0 : index
    %c0_2 = arith.constant 0 : index
    %0 = vector.load %arg2[%c0, %c0_0, %c0_1, %c0_2] : memref<1x1x32x128xbf16, #tpu.memory_space<vmem>>, vector<1x1x32x128xbf16>
    %1 = vector.shape_cast %0 : vector<1x1x32x128xbf16> to vector<32x128xbf16>
    %c0_3 = arith.constant 0 : index
    %c0_4 = arith.constant 0 : index
    %2 = vector.load %arg3[%c0_3, %c0_4] : memref<32x32xbf16, #tpu.memory_space<vmem>>, vector<32x32xbf16>
    %cst = arith.constant dense<0.000000e+00> : vector<32x128xf32>
    %3 = tpu.matmul %2, %1, %cst {dimension_numbers = #tpu.dot_dimension_numbers<[1], [0], [0], [1], [0, 0, 1, 1], [], []>} : vector<32x32xbf16>, vector<32x128xbf16>, vector<32x128xf32> -> vector<32x128xf32>
    %c0_5 = arith.constant 0 : index
    %c0_6 = arith.constant 0 : index
    %4 = vector.load %arg4[%c0_5, %c0_6] : memref<32x1xf32, #tpu.memory_space<vmem>>, vector<32x1xf32>
    %5 = vector.broadcast %4 : vector<32x1xf32> to vector<32x128xf32>
    %6 = arith.mulf %3, %5 : vector<32x128xf32>
    %c0_7 = arith.constant 0 : index
    %c0_8 = arith.constant 0 : index
    %7 = vector.load %arg5[%c0_7, %c0_8] : memref<32x1xf32, #tpu.memory_space<vmem>>, vector<32x1xf32>
    %8 = vector.broadcast %7 : vector<32x1xf32> to vector<32x128xf32>
    %9 = arith.addf %6, %8 : vector<32x128xf32>
    %10 = arith.truncf %9 : vector<32x128xf32> to vector<32x128xbf16>
    %c0_9 = arith.constant 0 : index
    %c0_10 = arith.constant 0 : index
    %c0_11 = arith.constant 0 : index
    %c0_12 = arith.constant 0 : index
    %11 = vector.load %arg6[%c0_9, %c0_10, %c0_11, %c0_12] : memref<1x1x32x128xbf16, #tpu.memory_space<vmem>>, vector<1x1x32x128xbf16>
    %12 = vector.shape_cast %11 : vector<1x1x32x128xbf16> to vector<32x128xbf16>
    %13 = vector.shape_cast %10 : vector<32x128xbf16> to vector<1x1x32x128xbf16>
    tpu.vector_store %arg6[%c0_9, %c0_10, %c0_11, %c0_12], %13 {strides = array<i32>} : memref<1x1x32x128xbf16, #tpu.memory_space<vmem>>, vector<1x1x32x128xbf16>,
    return
  }
  func.func @transform_0(%arg0: i32, %arg1: i32) -> (i32, i32, i32, i32) {
    %c1_i32 = arith.constant 1 : i32
    %0 = arith.muli %arg1, %c1_i32 : i32
    %c0_i32 = arith.constant 0 : i32
    %1 = arith.addi %0, %c0_i32 : i32
    %c0_i32_0 = arith.constant 0 : i32
    %c0_i32_1 = arith.constant 0 : i32
    %c0_i32_2 = arith.constant 0 : i32
    return %arg0, %1, %c0_i32_0, %c0_i32_1 : i32, i32, i32, i32
  }
  func.func @transform_1(%arg0: i32, %arg1: i32) -> (i32, i32) {
    %c0_i32 = arith.constant 0 : i32
    %c0_i32_0 = arith.constant 0 : i32
    %c0_i32_1 = arith.constant 0 : i32
    return %c0_i32, %c0_i32_0 : i32, i32
  }
  func.func @transform_2(%arg0: i32, %arg1: i32) -> (i32, i32) {
    %c0_i32 = arith.constant 0 : i32
    %c0_i32_0 = arith.constant 0 : i32
    %c0_i32_1 = arith.constant 0 : i32
    return %c0_i32, %c0_i32_0 : i32, i32
  }
  func.func @transform_3(%arg0: i32, %arg1: i32) -> (i32, i32) {
    %c0_i32 = arith.constant 0 : i32
    %c0_i32_0 = arith.constant 0 : i32
    %c0_i32_1 = arith.constant 0 : i32
    return %c0_i32, %c0_i32_0 : i32, i32
  }
  func.func @transform_4(%arg0: i32, %arg1: i32) -> (i32, i32, i32, i32) {
    %c0_i32 = arith.constant 0 : i32
    %c0_i32_0 = arith.constant 0 : i32
    %c0_i32_1 = arith.constant 0 : i32
    return %arg0, %arg1, %c0_i32, %c0_i32_0 : i32, i32, i32, i32
  }
}

module attributes {stable_mosaic.version = 11 : i64} {
  func.func @_cgf_fuse_kernel(%arg0: i32, %arg1: i32, %arg2: memref<1x2x32x16xbf16, #tpu.memory_space<vmem>>, %arg3: memref<1x32x16xbf16, #tpu.memory_space<vmem>>, %arg4: memref<1x2x32x16xbf16, #tpu.memory_space<vmem>>, %arg5: memref<1x2x32x16xbf16, #tpu.memory_space<vmem>>) attributes {dimension_semantics = [#tpu.dimension_semantics<parallel>, #tpu.dimension_semantics<parallel>], iteration_bounds = array<i64: 2, 1>, scalar_prefetch = 0 : i64, scratch_operands = 0 : i64, tpu.core_type = #tpu.core_type<tc>, window_params = [{transform_indices = @transform_0, window_bounds = array<i64: 1, 2, 32, 16>}, {transform_indices = @transform_1, window_bounds = array<i64: 1, 32, 16>}, {transform_indices = @transform_2, window_bounds = array<i64: 1, 2, 32, 16>}, {transform_indices = @transform_3, window_bounds = array<i64: 1, 2, 32, 16>}]} {
    %c0 = arith.constant 0 : index
    %c0_0 = arith.constant 0 : index
    %c0_1 = arith.constant 0 : index
    %0 = vector.load %arg3[%c0, %c0_0, %c0_1] : memref<1x32x16xbf16, #tpu.memory_space<vmem>>, vector<1x32x16xbf16>
    %1 = vector.shape_cast %0 : vector<1x32x16xbf16> to vector<32x16xbf16>
    %2 = arith.extf %1 : vector<32x16xbf16> to vector<32x16xf32>
    %c0_2 = arith.constant 0 : index
    %c0_3 = arith.constant 0 : index
    %c0_4 = arith.constant 0 : index
    %c0_5 = arith.constant 0 : index
    %3 = vector.load %arg2[%c0_2, %c0_3, %c0_4, %c0_5] : memref<1x2x32x16xbf16, #tpu.memory_space<vmem>>, vector<1x2x32x16xbf16>
    %4 = vector.shape_cast %3 : vector<1x2x32x16xbf16> to vector<2x32x16xbf16>
    %5 = arith.extf %4 : vector<2x32x16xbf16> to vector<2x32x16xf32>
    %6 = arith.negf %5 : vector<2x32x16xf32>
    %7 = math.exp %6 : vector<2x32x16xf32>
    %cst = arith.constant 1.000000e+00 : f32
    %8 = vector.broadcast %cst : f32 to vector<2x32x16xf32>
    %9 = arith.addf %8, %7 : vector<2x32x16xf32>
    %10 = arith.divf %8, %9 : vector<2x32x16xf32>
    %11 = vector.shape_cast %2 : vector<32x16xf32> to vector<1x32x16xf32>
    %12 = vector.broadcast %11 : vector<1x32x16xf32> to vector<2x32x16xf32>
    %13 = arith.mulf %10, %12 : vector<2x32x16xf32>
    %c0_6 = arith.constant 0 : index
    %c0_7 = arith.constant 0 : index
    %c0_8 = arith.constant 0 : index
    %c0_9 = arith.constant 0 : index
    %14 = vector.load %arg4[%c0_6, %c0_7, %c0_8, %c0_9] : memref<1x2x32x16xbf16, #tpu.memory_space<vmem>>, vector<1x2x32x16xbf16>
    %15 = vector.shape_cast %14 : vector<1x2x32x16xbf16> to vector<2x32x16xbf16>
    %16 = arith.extf %15 : vector<2x32x16xbf16> to vector<2x32x16xf32>
    %17 = arith.addf %13, %16 : vector<2x32x16xf32>
    %18 = arith.truncf %17 : vector<2x32x16xf32> to vector<2x32x16xbf16>
    %c0_10 = arith.constant 0 : index
    %c0_11 = arith.constant 0 : index
    %c0_12 = arith.constant 0 : index
    %c0_13 = arith.constant 0 : index
    %19 = vector.load %arg5[%c0_10, %c0_11, %c0_12, %c0_13] : memref<1x2x32x16xbf16, #tpu.memory_space<vmem>>, vector<1x2x32x16xbf16>
    %20 = vector.shape_cast %19 : vector<1x2x32x16xbf16> to vector<2x32x16xbf16>
    %21 = vector.shape_cast %18 : vector<2x32x16xbf16> to vector<1x2x32x16xbf16>
    tpu.vector_store %arg5[%c0_10, %c0_11, %c0_12, %c0_13], %21 {strides = array<i32>} : memref<1x2x32x16xbf16, #tpu.memory_space<vmem>>, vector<1x2x32x16xbf16>,
    return
  }
  func.func @transform_0(%arg0: i32, %arg1: i32) -> (i32, i32, i32, i32) {
    %c0_i32 = arith.constant 0 : i32
    %c0_i32_0 = arith.constant 0 : i32
    %c0_i32_1 = arith.constant 0 : i32
    return %arg0, %arg1, %c0_i32, %c0_i32_0 : i32, i32, i32, i32
  }
  func.func @transform_1(%arg0: i32, %arg1: i32) -> (i32, i32, i32) {
    %c0_i32 = arith.constant 0 : i32
    %c0_i32_0 = arith.constant 0 : i32
    %c0_i32_1 = arith.constant 0 : i32
    return %arg0, %c0_i32, %c0_i32_0 : i32, i32, i32
  }
  func.func @transform_2(%arg0: i32, %arg1: i32) -> (i32, i32, i32, i32) {
    %c0_i32 = arith.constant 0 : i32
    %c0_i32_0 = arith.constant 0 : i32
    %c0_i32_1 = arith.constant 0 : i32
    return %arg0, %arg1, %c0_i32, %c0_i32_0 : i32, i32, i32, i32
  }
  func.func @transform_3(%arg0: i32, %arg1: i32) -> (i32, i32, i32, i32) {
    %c0_i32 = arith.constant 0 : i32
    %c0_i32_0 = arith.constant 0 : i32
    %c0_i32_1 = arith.constant 0 : i32
    return %arg0, %arg1, %c0_i32, %c0_i32_0 : i32, i32, i32, i32
  }
}

module attributes {stable_mosaic.version = 11 : i64} {
  func.func @kernel(%arg0: i32, %arg1: i32, %arg2: memref<1x1x32x256xbf16, #tpu.memory_space<vmem>>, %arg3: memref<1x1x32x256xbf16, #tpu.memory_space<vmem>>, %arg4: memref<64x576xbf16, #tpu.memory_space<vmem>>, %arg5: memref<64x1xf32, #tpu.memory_space<vmem>>, %arg6: memref<64x1xf32, #tpu.memory_space<vmem>>, %arg7: memref<1x1x64x128xbf16, #tpu.memory_space<vmem>>) attributes {dimension_semantics = [#tpu.dimension_semantics<parallel>, #tpu.dimension_semantics<parallel>], iteration_bounds = array<i64: 2, 2>, scalar_prefetch = 0 : i64, scratch_operands = 0 : i64, tpu.core_type = #tpu.core_type<tc>, window_params = [{transform_indices = @transform_0, window_bounds = array<i64: 1, 1, 32, 256>}, {transform_indices = @transform_1, window_bounds = array<i64: 1, 1, 32, 256>}, {pipeline_mode = #tpu.pipeline_mode<synchronous>, transform_indices = @transform_2, window_bounds = array<i64: 64, 576>}, {pipeline_mode = #tpu.pipeline_mode<synchronous>, transform_indices = @transform_3, window_bounds = array<i64: 64, 1>}, {pipeline_mode = #tpu.pipeline_mode<synchronous>, transform_indices = @transform_4, window_bounds = array<i64: 64, 1>}, {transform_indices = @transform_5, window_bounds = array<i64: 1, 1, 64, 128>}]} {
    %c0 = arith.constant 0 : index
    %c0_0 = arith.constant 0 : index
    %c0_1 = arith.constant 0 : index
    %c0_2 = arith.constant 0 : index
    %0 = vector.load %arg2[%c0, %c0_0, %c0_1, %c0_2] : memref<1x1x32x256xbf16, #tpu.memory_space<vmem>>, vector<1x1x32x128xbf16>
    %1 = vector.shape_cast %0 : vector<1x1x32x128xbf16> to vector<32x128xbf16>
    %c0_3 = arith.constant 0 : index
    %c0_4 = arith.constant 0 : index
    %c0_5 = arith.constant 0 : index
    %c1 = arith.constant 1 : index
    %2 = vector.load %arg2[%c0_3, %c0_4, %c0_5, %c1] : memref<1x1x32x256xbf16, #tpu.memory_space<vmem>>, vector<1x1x32x128xbf16>
    %3 = vector.shape_cast %2 : vector<1x1x32x128xbf16> to vector<32x128xbf16>
    %c0_6 = arith.constant 0 : index
    %c0_7 = arith.constant 0 : index
    %c0_8 = arith.constant 0 : index
    %c2 = arith.constant 2 : index
    %4 = vector.load %arg2[%c0_6, %c0_7, %c0_8, %c2] : memref<1x1x32x256xbf16, #tpu.memory_space<vmem>>, vector<1x1x32x128xbf16>
    %5 = vector.shape_cast %4 : vector<1x1x32x128xbf16> to vector<32x128xbf16>
    %c0_9 = arith.constant 0 : index
    %c0_10 = arith.constant 0 : index
    %c0_11 = arith.constant 0 : index
    %c6 = arith.constant 6 : index
    %6 = vector.load %arg2[%c0_9, %c0_10, %c0_11, %c6] : memref<1x1x32x256xbf16, #tpu.memory_space<vmem>>, vector<1x1x32x128xbf16>
    %7 = vector.shape_cast %6 : vector<1x1x32x128xbf16> to vector<32x128xbf16>
    %c0_12 = arith.constant 0 : index
    %c0_13 = arith.constant 0 : index
    %c0_14 = arith.constant 0 : index
    %c7 = arith.constant 7 : index
    %8 = vector.load %arg2[%c0_12, %c0_13, %c0_14, %c7] : memref<1x1x32x256xbf16, #tpu.memory_space<vmem>>, vector<1x1x32x128xbf16>
    %9 = vector.shape_cast %8 : vector<1x1x32x128xbf16> to vector<32x128xbf16>
    %c0_15 = arith.constant 0 : index
    %c0_16 = arith.constant 0 : index
    %c0_17 = arith.constant 0 : index
    %c8 = arith.constant 8 : index
    %10 = vector.load %arg2[%c0_15, %c0_16, %c0_17, %c8] : memref<1x1x32x256xbf16, #tpu.memory_space<vmem>>, vector<1x1x32x128xbf16>
    %11 = vector.shape_cast %10 : vector<1x1x32x128xbf16> to vector<32x128xbf16>
    %c0_18 = arith.constant 0 : index
    %c0_19 = arith.constant 0 : index
    %c0_20 = arith.constant 0 : index
    %c12 = arith.constant 12 : index
    %12 = vector.load %arg2[%c0_18, %c0_19, %c0_20, %c12] : memref<1x1x32x256xbf16, #tpu.memory_space<vmem>>, vector<1x1x32x128xbf16>
    %13 = vector.shape_cast %12 : vector<1x1x32x128xbf16> to vector<32x128xbf16>
    %c0_21 = arith.constant 0 : index
    %c0_22 = arith.constant 0 : index
    %c0_23 = arith.constant 0 : index
    %c13 = arith.constant 13 : index
    %14 = vector.load %arg2[%c0_21, %c0_22, %c0_23, %c13] : memref<1x1x32x256xbf16, #tpu.memory_space<vmem>>, vector<1x1x32x128xbf16>
    %15 = vector.shape_cast %14 : vector<1x1x32x128xbf16> to vector<32x128xbf16>
    %c0_24 = arith.constant 0 : index
    %c0_25 = arith.constant 0 : index
    %c0_26 = arith.constant 0 : index
    %c14 = arith.constant 14 : index
    %16 = vector.load %arg2[%c0_24, %c0_25, %c0_26, %c14] : memref<1x1x32x256xbf16, #tpu.memory_space<vmem>>, vector<1x1x32x128xbf16>
    %17 = vector.shape_cast %16 : vector<1x1x32x128xbf16> to vector<32x128xbf16>
    %c0_27 = arith.constant 0 : index
    %c0_28 = arith.constant 0 : index
    %c0_29 = arith.constant 0 : index
    %c0_30 = arith.constant 0 : index
    %18 = vector.load %arg3[%c0_27, %c0_28, %c0_29, %c0_30] : memref<1x1x32x256xbf16, #tpu.memory_space<vmem>>, vector<1x1x32x128xbf16>
    %19 = vector.shape_cast %18 : vector<1x1x32x128xbf16> to vector<32x128xbf16>
    %c0_31 = arith.constant 0 : index
    %c0_32 = arith.constant 0 : index
    %c0_33 = arith.constant 0 : index
    %c1_34 = arith.constant 1 : index
    %20 = vector.load %arg3[%c0_31, %c0_32, %c0_33, %c1_34] : memref<1x1x32x256xbf16, #tpu.memory_space<vmem>>, vector<1x1x32x128xbf16>
    %21 = vector.shape_cast %20 : vector<1x1x32x128xbf16> to vector<32x128xbf16>
    %c0_35 = arith.constant 0 : index
    %c0_36 = arith.constant 0 : index
    %c0_37 = arith.constant 0 : index
    %c2_38 = arith.constant 2 : index
    %22 = vector.load %arg3[%c0_35, %c0_36, %c0_37, %c2_38] : memref<1x1x32x256xbf16, #tpu.memory_space<vmem>>, vector<1x1x32x128xbf16>
    %23 = vector.shape_cast %22 : vector<1x1x32x128xbf16> to vector<32x128xbf16>
    %c0_39 = arith.constant 0 : index
    %c0_40 = arith.constant 0 : index
    %c0_41 = arith.constant 0 : index
    %c6_42 = arith.constant 6 : index
    %24 = vector.load %arg3[%c0_39, %c0_40, %c0_41, %c6_42] : memref<1x1x32x256xbf16, #tpu.memory_space<vmem>>, vector<1x1x32x128xbf16>
    %25 = vector.shape_cast %24 : vector<1x1x32x128xbf16> to vector<32x128xbf16>
    %c0_43 = arith.constant 0 : index
    %c0_44 = arith.constant 0 : index
    %c0_45 = arith.constant 0 : index
    %c7_46 = arith.constant 7 : index
    %26 = vector.load %arg3[%c0_43, %c0_44, %c0_45, %c7_46] : memref<1x1x32x256xbf16, #tpu.memory_space<vmem>>, vector<1x1x32x128xbf16>
    %27 = vector.shape_cast %26 : vector<1x1x32x128xbf16> to vector<32x128xbf16>
    %c0_47 = arith.constant 0 : index
    %c0_48 = arith.constant 0 : index
    %c0_49 = arith.constant 0 : index
    %c8_50 = arith.constant 8 : index
    %28 = vector.load %arg3[%c0_47, %c0_48, %c0_49, %c8_50] : memref<1x1x32x256xbf16, #tpu.memory_space<vmem>>, vector<1x1x32x128xbf16>
    %29 = vector.shape_cast %28 : vector<1x1x32x128xbf16> to vector<32x128xbf16>
    %c0_51 = arith.constant 0 : index
    %c0_52 = arith.constant 0 : index
    %c0_53 = arith.constant 0 : index
    %c12_54 = arith.constant 12 : index
    %30 = vector.load %arg3[%c0_51, %c0_52, %c0_53, %c12_54] : memref<1x1x32x256xbf16, #tpu.memory_space<vmem>>, vector<1x1x32x128xbf16>
    %31 = vector.shape_cast %30 : vector<1x1x32x128xbf16> to vector<32x128xbf16>
    %c0_55 = arith.constant 0 : index
    %c0_56 = arith.constant 0 : index
    %c0_57 = arith.constant 0 : index
    %c13_58 = arith.constant 13 : index
    %32 = vector.load %arg3[%c0_55, %c0_56, %c0_57, %c13_58] : memref<1x1x32x256xbf16, #tpu.memory_space<vmem>>, vector<1x1x32x128xbf16>
    %33 = vector.shape_cast %32 : vector<1x1x32x128xbf16> to vector<32x128xbf16>
    %c0_59 = arith.constant 0 : index
    %c0_60 = arith.constant 0 : index
    %c0_61 = arith.constant 0 : index
    %c14_62 = arith.constant 14 : index
    %34 = vector.load %arg3[%c0_59, %c0_60, %c0_61, %c14_62] : memref<1x1x32x256xbf16, #tpu.memory_space<vmem>>, vector<1x1x32x128xbf16>
    %35 = vector.shape_cast %34 : vector<1x1x32x128xbf16> to vector<32x128xbf16>
    %36 = tpu.concatenate %1, %3, %5, %7, %9, %11, %13, %15, %17, %19, %21, %23, %25, %27, %29, %31 in 0 : vector<32x128xbf16>, vector<32x128xbf16>, vector<32x128xbf16>, vector<32x128xbf16>, vector<32x128xbf16>, vector<32x128xbf16>, vector<32x128xbf16>, vector<32x128xbf16>, vector<32x128xbf16>, vector<32x128xbf16>, vector<32x128xbf16>, vector<32x128xbf16>, vector<32x128xbf16>, vector<32x128xbf16>, vector<32x128xbf16>, vector<32x128xbf16> -> vector<512x128xbf16>
    %37 = tpu.concatenate %33, %35 in 0 : vector<32x128xbf16>, vector<32x128xbf16> -> vector<64x128xbf16>
    %38 = tpu.concatenate %36, %37 in 0 : vector<512x128xbf16>, vector<64x128xbf16> -> vector<576x128xbf16>
    %c0_63 = arith.constant 0 : index
    %c0_64 = arith.constant 0 : index
    %39 = vector.load %arg4[%c0_63, %c0_64] : memref<64x576xbf16, #tpu.memory_space<vmem>>, vector<64x576xbf16>
    %cst = arith.constant dense<0.000000e+00> : vector<64x128xf32>
    %40 = tpu.matmul %39, %38, %cst {dimension_numbers = #tpu.dot_dimension_numbers<[1], [0], [0], [1], [0, 0, 1, 1], [], []>} : vector<64x576xbf16>, vector<576x128xbf16>, vector<64x128xf32> -> vector<64x128xf32>
    %c0_65 = arith.constant 0 : index
    %c0_66 = arith.constant 0 : index
    %41 = vector.load %arg5[%c0_65, %c0_66] : memref<64x1xf32, #tpu.memory_space<vmem>>, vector<64x1xf32>
    %42 = vector.broadcast %41 : vector<64x1xf32> to vector<64x128xf32>
    %43 = arith.mulf %40, %42 : vector<64x128xf32>
    %c0_67 = arith.constant 0 : index
    %c0_68 = arith.constant 0 : index
    %44 = vector.load %arg6[%c0_67, %c0_68] : memref<64x1xf32, #tpu.memory_space<vmem>>, vector<64x1xf32>
    %45 = vector.broadcast %44 : vector<64x1xf32> to vector<64x128xf32>
    %46 = arith.addf %43, %45 : vector<64x128xf32>
    %cst_69 = arith.constant 0.000000e+00 : f32
    %47 = vector.broadcast %cst_69 : f32 to vector<64x128xf32>
    %48 = arith.cmpf oge, %46, %47 : vector<64x128xf32>
    %cst_70 = arith.constant 0.00999999977 : f32
    %49 = vector.broadcast %cst_70 : f32 to vector<64x128xf32>
    %50 = arith.mulf %49, %46 : vector<64x128xf32>
    %51 = arith.select %48, %46, %50 : vector<64x128xi1>, vector<64x128xf32>
    %52 = arith.truncf %51 : vector<64x128xf32> to vector<64x128xbf16>
    %c0_71 = arith.constant 0 : index
    %c0_72 = arith.constant 0 : index
    %c0_73 = arith.constant 0 : index
    %c0_74 = arith.constant 0 : index
    %53 = vector.load %arg7[%c0_71, %c0_72, %c0_73, %c0_74] : memref<1x1x64x128xbf16, #tpu.memory_space<vmem>>, vector<1x1x64x128xbf16>
    %54 = vector.shape_cast %53 : vector<1x1x64x128xbf16> to vector<64x128xbf16>
    %55 = vector.shape_cast %52 : vector<64x128xbf16> to vector<1x1x64x128xbf16>
    tpu.vector_store %arg7[%c0_71, %c0_72, %c0_73, %c0_74], %55 {strides = array<i32>} : memref<1x1x64x128xbf16, #tpu.memory_space<vmem>>, vector<1x1x64x128xbf16>,
    return
  }
  func.func @transform_0(%arg0: i32, %arg1: i32) -> (i32, i32, i32, i32) {
    %c1_i32 = arith.constant 1 : i32
    %0 = arith.muli %arg1, %c1_i32 : i32
    %c0_i32 = arith.constant 0 : i32
    %1 = arith.addi %0, %c0_i32 : i32
    %c0_i32_0 = arith.constant 0 : i32
    %c0_i32_1 = arith.constant 0 : i32
    %c0_i32_2 = arith.constant 0 : i32
    return %arg0, %1, %c0_i32_0, %c0_i32_1 : i32, i32, i32, i32
  }
  func.func @transform_1(%arg0: i32, %arg1: i32) -> (i32, i32, i32, i32) {
    %c1_i32 = arith.constant 1 : i32
    %0 = arith.muli %arg1, %c1_i32 : i32
    %c1_i32_0 = arith.constant 1 : i32
    %1 = arith.addi %0, %c1_i32_0 : i32
    %c0_i32 = arith.constant 0 : i32
    %c0_i32_1 = arith.constant 0 : i32
    %c0_i32_2 = arith.constant 0 : i32
    return %arg0, %1, %c0_i32, %c0_i32_1 : i32, i32, i32, i32
  }
  func.func @transform_2(%arg0: i32, %arg1: i32) -> (i32, i32) {
    %c0_i32 = arith.constant 0 : i32
    %c0_i32_0 = arith.constant 0 : i32
    %c0_i32_1 = arith.constant 0 : i32
    return %c0_i32, %c0_i32_0 : i32, i32
  }
  func.func @transform_3(%arg0: i32, %arg1: i32) -> (i32, i32) {
    %c0_i32 = arith.constant 0 : i32
    %c0_i32_0 = arith.constant 0 : i32
    %c0_i32_1 = arith.constant 0 : i32
    return %c0_i32, %c0_i32_0 : i32, i32
  }
  func.func @transform_4(%arg0: i32, %arg1: i32) -> (i32, i32) {
    %c0_i32 = arith.constant 0 : i32
    %c0_i32_0 = arith.constant 0 : i32
    %c0_i32_1 = arith.constant 0 : i32
    return %c0_i32, %c0_i32_0 : i32, i32
  }
  func.func @transform_5(%arg0: i32, %arg1: i32) -> (i32, i32, i32, i32) {
    %c0_i32 = arith.constant 0 : i32
    %c0_i32_0 = arith.constant 0 : i32
    %c0_i32_1 = arith.constant 0 : i32
    return %arg0, %arg1, %c0_i32, %c0_i32_0 : i32, i32, i32, i32
  }
}

module attributes {stable_mosaic.version = 11 : i64} {
  func.func @kernel(%arg0: i32, %arg1: i32, %arg2: memref<1x1x32x128xbf16, #tpu.memory_space<vmem>>, %arg3: memref<16x32xbf16, #tpu.memory_space<vmem>>, %arg4: memref<16x1xf32, #tpu.memory_space<vmem>>, %arg5: memref<16x1xf32, #tpu.memory_space<vmem>>, %arg6: memref<1x1x16x128xbf16, #tpu.memory_space<vmem>>) attributes {dimension_semantics = [#tpu.dimension_semantics<parallel>, #tpu.dimension_semantics<parallel>], iteration_bounds = array<i64: 2, 4>, scalar_prefetch = 0 : i64, scratch_operands = 0 : i64, tpu.core_type = #tpu.core_type<tc>, window_params = [{transform_indices = @transform_0, window_bounds = array<i64: 1, 1, 32, 128>}, {pipeline_mode = #tpu.pipeline_mode<synchronous>, transform_indices = @transform_1, window_bounds = array<i64: 16, 32>}, {pipeline_mode = #tpu.pipeline_mode<synchronous>, transform_indices = @transform_2, window_bounds = array<i64: 16, 1>}, {pipeline_mode = #tpu.pipeline_mode<synchronous>, transform_indices = @transform_3, window_bounds = array<i64: 16, 1>}, {transform_indices = @transform_4, window_bounds = array<i64: 1, 1, 16, 128>}]} {
    %c0 = arith.constant 0 : index
    %c0_0 = arith.constant 0 : index
    %c0_1 = arith.constant 0 : index
    %c0_2 = arith.constant 0 : index
    %0 = vector.load %arg2[%c0, %c0_0, %c0_1, %c0_2] : memref<1x1x32x128xbf16, #tpu.memory_space<vmem>>, vector<1x1x32x128xbf16>
    %1 = vector.shape_cast %0 : vector<1x1x32x128xbf16> to vector<32x128xbf16>
    %c0_3 = arith.constant 0 : index
    %c0_4 = arith.constant 0 : index
    %2 = vector.load %arg3[%c0_3, %c0_4] : memref<16x32xbf16, #tpu.memory_space<vmem>>, vector<16x32xbf16>
    %cst = arith.constant dense<0.000000e+00> : vector<16x128xf32>
    %3 = tpu.matmul %2, %1, %cst {dimension_numbers = #tpu.dot_dimension_numbers<[1], [0], [0], [1], [0, 0, 1, 1], [], []>} : vector<16x32xbf16>, vector<32x128xbf16>, vector<16x128xf32> -> vector<16x128xf32>
    %c0_5 = arith.constant 0 : index
    %c0_6 = arith.constant 0 : index
    %4 = vector.load %arg4[%c0_5, %c0_6] : memref<16x1xf32, #tpu.memory_space<vmem>>, vector<16x1xf32>
    %5 = vector.broadcast %4 : vector<16x1xf32> to vector<16x128xf32>
    %6 = arith.mulf %3, %5 : vector<16x128xf32>
    %c0_7 = arith.constant 0 : index
    %c0_8 = arith.constant 0 : index
    %7 = vector.load %arg5[%c0_7, %c0_8] : memref<16x1xf32, #tpu.memory_space<vmem>>, vector<16x1xf32>
    %8 = vector.broadcast %7 : vector<16x1xf32> to vector<16x128xf32>
    %9 = arith.addf %6, %8 : vector<16x128xf32>
    %cst_9 = arith.constant 0.000000e+00 : f32
    %10 = vector.broadcast %cst_9 : f32 to vector<16x128xf32>
    %11 = arith.cmpf oge, %9, %10 : vector<16x128xf32>
    %cst_10 = arith.constant 0.00999999977 : f32
    %12 = vector.broadcast %cst_10 : f32 to vector<16x128xf32>
    %13 = arith.mulf %12, %9 : vector<16x128xf32>
    %14 = arith.select %11, %9, %13 : vector<16x128xi1>, vector<16x128xf32>
    %15 = arith.truncf %14 : vector<16x128xf32> to vector<16x128xbf16>
    %c0_11 = arith.constant 0 : index
    %c0_12 = arith.constant 0 : index
    %c0_13 = arith.constant 0 : index
    %c0_14 = arith.constant 0 : index
    %16 = vector.load %arg6[%c0_11, %c0_12, %c0_13, %c0_14] : memref<1x1x16x128xbf16, #tpu.memory_space<vmem>>, vector<1x1x16x128xbf16>
    %17 = vector.shape_cast %16 : vector<1x1x16x128xbf16> to vector<16x128xbf16>
    %18 = vector.shape_cast %15 : vector<16x128xbf16> to vector<1x1x16x128xbf16>
    tpu.vector_store %arg6[%c0_11, %c0_12, %c0_13, %c0_14], %18 {strides = array<i32>} : memref<1x1x16x128xbf16, #tpu.memory_space<vmem>>, vector<1x1x16x128xbf16>,
    return
  }
  func.func @transform_0(%arg0: i32, %arg1: i32) -> (i32, i32, i32, i32) {
    %c1_i32 = arith.constant 1 : i32
    %0 = arith.muli %arg1, %c1_i32 : i32
    %c0_i32 = arith.constant 0 : i32
    %1 = arith.addi %0, %c0_i32 : i32
    %c0_i32_0 = arith.constant 0 : i32
    %c0_i32_1 = arith.constant 0 : i32
    %c0_i32_2 = arith.constant 0 : i32
    return %arg0, %1, %c0_i32_0, %c0_i32_1 : i32, i32, i32, i32
  }
  func.func @transform_1(%arg0: i32, %arg1: i32) -> (i32, i32) {
    %c0_i32 = arith.constant 0 : i32
    %c0_i32_0 = arith.constant 0 : i32
    %c0_i32_1 = arith.constant 0 : i32
    return %c0_i32, %c0_i32_0 : i32, i32
  }
  func.func @transform_2(%arg0: i32, %arg1: i32) -> (i32, i32) {
    %c0_i32 = arith.constant 0 : i32
    %c0_i32_0 = arith.constant 0 : i32
    %c0_i32_1 = arith.constant 0 : i32
    return %c0_i32, %c0_i32_0 : i32, i32
  }
  func.func @transform_3(%arg0: i32, %arg1: i32) -> (i32, i32) {
    %c0_i32 = arith.constant 0 : i32
    %c0_i32_0 = arith.constant 0 : i32
    %c0_i32_1 = arith.constant 0 : i32
    return %c0_i32, %c0_i32_0 : i32, i32
  }
  func.func @transform_4(%arg0: i32, %arg1: i32) -> (i32, i32, i32, i32) {
    %c0_i32 = arith.constant 0 : i32
    %c0_i32_0 = arith.constant 0 : i32
    %c0_i32_1 = arith.constant 0 : i32
    return %arg0, %arg1, %c0_i32, %c0_i32_0 : i32, i32, i32, i32
  }
}

module attributes {stable_mosaic.version = 11 : i64} {
  func.func @kernel(%arg0: i32, %arg1: i32, %arg2: memref<1x1x64x128xbf16, #tpu.memory_space<vmem>>, %arg3: memref<32x64xbf16, #tpu.memory_space<vmem>>, %arg4: memref<32x1xf32, #tpu.memory_space<vmem>>, %arg5: memref<32x1xf32, #tpu.memory_space<vmem>>, %arg6: memref<1x1x32x128xbf16, #tpu.memory_space<vmem>>) attributes {dimension_semantics = [#tpu.dimension_semantics<parallel>, #tpu.dimension_semantics<parallel>], iteration_bounds = array<i64: 2, 1>, scalar_prefetch = 0 : i64, scratch_operands = 0 : i64, tpu.core_type = #tpu.core_type<tc>, window_params = [{transform_indices = @transform_0, window_bounds = array<i64: 1, 1, 64, 128>}, {pipeline_mode = #tpu.pipeline_mode<synchronous>, transform_indices = @transform_1, window_bounds = array<i64: 32, 64>}, {pipeline_mode = #tpu.pipeline_mode<synchronous>, transform_indices = @transform_2, window_bounds = array<i64: 32, 1>}, {pipeline_mode = #tpu.pipeline_mode<synchronous>, transform_indices = @transform_3, window_bounds = array<i64: 32, 1>}, {transform_indices = @transform_4, window_bounds = array<i64: 1, 1, 32, 128>}]} {
    %c0 = arith.constant 0 : index
    %c0_0 = arith.constant 0 : index
    %c0_1 = arith.constant 0 : index
    %c0_2 = arith.constant 0 : index
    %0 = vector.load %arg2[%c0, %c0_0, %c0_1, %c0_2] : memref<1x1x64x128xbf16, #tpu.memory_space<vmem>>, vector<1x1x64x128xbf16>
    %1 = vector.shape_cast %0 : vector<1x1x64x128xbf16> to vector<64x128xbf16>
    %c0_3 = arith.constant 0 : index
    %c0_4 = arith.constant 0 : index
    %2 = vector.load %arg3[%c0_3, %c0_4] : memref<32x64xbf16, #tpu.memory_space<vmem>>, vector<32x64xbf16>
    %cst = arith.constant dense<0.000000e+00> : vector<32x128xf32>
    %3 = tpu.matmul %2, %1, %cst {dimension_numbers = #tpu.dot_dimension_numbers<[1], [0], [0], [1], [0, 0, 1, 1], [], []>} : vector<32x64xbf16>, vector<64x128xbf16>, vector<32x128xf32> -> vector<32x128xf32>
    %c0_5 = arith.constant 0 : index
    %c0_6 = arith.constant 0 : index
    %4 = vector.load %arg4[%c0_5, %c0_6] : memref<32x1xf32, #tpu.memory_space<vmem>>, vector<32x1xf32>
    %5 = vector.broadcast %4 : vector<32x1xf32> to vector<32x128xf32>
    %6 = arith.mulf %3, %5 : vector<32x128xf32>
    %c0_7 = arith.constant 0 : index
    %c0_8 = arith.constant 0 : index
    %7 = vector.load %arg5[%c0_7, %c0_8] : memref<32x1xf32, #tpu.memory_space<vmem>>, vector<32x1xf32>
    %8 = vector.broadcast %7 : vector<32x1xf32> to vector<32x128xf32>
    %9 = arith.addf %6, %8 : vector<32x128xf32>
    %cst_9 = arith.constant 0.000000e+00 : f32
    %10 = vector.broadcast %cst_9 : f32 to vector<32x128xf32>
    %11 = arith.cmpf oge, %9, %10 : vector<32x128xf32>
    %cst_10 = arith.constant 0.00999999977 : f32
    %12 = vector.broadcast %cst_10 : f32 to vector<32x128xf32>
    %13 = arith.mulf %12, %9 : vector<32x128xf32>
    %14 = arith.select %11, %9, %13 : vector<32x128xi1>, vector<32x128xf32>
    %15 = arith.truncf %14 : vector<32x128xf32> to vector<32x128xbf16>
    %c0_11 = arith.constant 0 : index
    %c0_12 = arith.constant 0 : index
    %c0_13 = arith.constant 0 : index
    %c0_14 = arith.constant 0 : index
    %16 = vector.load %arg6[%c0_11, %c0_12, %c0_13, %c0_14] : memref<1x1x32x128xbf16, #tpu.memory_space<vmem>>, vector<1x1x32x128xbf16>
    %17 = vector.shape_cast %16 : vector<1x1x32x128xbf16> to vector<32x128xbf16>
    %18 = vector.shape_cast %15 : vector<32x128xbf16> to vector<1x1x32x128xbf16>
    tpu.vector_store %arg6[%c0_11, %c0_12, %c0_13, %c0_14], %18 {strides = array<i32>} : memref<1x1x32x128xbf16, #tpu.memory_space<vmem>>, vector<1x1x32x128xbf16>,
    return
  }
  func.func @transform_0(%arg0: i32, %arg1: i32) -> (i32, i32, i32, i32) {
    %c1_i32 = arith.constant 1 : i32
    %0 = arith.muli %arg1, %c1_i32 : i32
    %c0_i32 = arith.constant 0 : i32
    %1 = arith.addi %0, %c0_i32 : i32
    %c0_i32_0 = arith.constant 0 : i32
    %c0_i32_1 = arith.constant 0 : i32
    %c0_i32_2 = arith.constant 0 : i32
    return %arg0, %1, %c0_i32_0, %c0_i32_1 : i32, i32, i32, i32
  }
  func.func @transform_1(%arg0: i32, %arg1: i32) -> (i32, i32) {
    %c0_i32 = arith.constant 0 : i32
    %c0_i32_0 = arith.constant 0 : i32
    %c0_i32_1 = arith.constant 0 : i32
    return %c0_i32, %c0_i32_0 : i32, i32
  }
  func.func @transform_2(%arg0: i32, %arg1: i32) -> (i32, i32) {
    %c0_i32 = arith.constant 0 : i32
    %c0_i32_0 = arith.constant 0 : i32
    %c0_i32_1 = arith.constant 0 : i32
    return %c0_i32, %c0_i32_0 : i32, i32
  }
  func.func @transform_3(%arg0: i32, %arg1: i32) -> (i32, i32) {
    %c0_i32 = arith.constant 0 : i32
    %c0_i32_0 = arith.constant 0 : i32
    %c0_i32_1 = arith.constant 0 : i32
    return %c0_i32, %c0_i32_0 : i32, i32
  }
  func.func @transform_4(%arg0: i32, %arg1: i32) -> (i32, i32, i32, i32) {
    %c0_i32 = arith.constant 0 : i32
    %c0_i32_0 = arith.constant 0 : i32
    %c0_i32_1 = arith.constant 0 : i32
    return %arg0, %arg1, %c0_i32, %c0_i32_0 : i32, i32, i32, i32
  }
}

module attributes {stable_mosaic.version = 11 : i64} {
  func.func @kernel(%arg0: i32, %arg1: i32, %arg2: memref<1x1x32x128xbf16, #tpu.memory_space<vmem>>, %arg3: memref<16x32xbf16, #tpu.memory_space<vmem>>, %arg4: memref<16x1xf32, #tpu.memory_space<vmem>>, %arg5: memref<16x1xf32, #tpu.memory_space<vmem>>, %arg6: memref<1x1x16x128xbf16, #tpu.memory_space<vmem>>) attributes {dimension_semantics = [#tpu.dimension_semantics<parallel>, #tpu.dimension_semantics<parallel>], iteration_bounds = array<i64: 2, 1>, scalar_prefetch = 0 : i64, scratch_operands = 0 : i64, tpu.core_type = #tpu.core_type<tc>, window_params = [{transform_indices = @transform_0, window_bounds = array<i64: 1, 1, 32, 128>}, {pipeline_mode = #tpu.pipeline_mode<synchronous>, transform_indices = @transform_1, window_bounds = array<i64: 16, 32>}, {pipeline_mode = #tpu.pipeline_mode<synchronous>, transform_indices = @transform_2, window_bounds = array<i64: 16, 1>}, {pipeline_mode = #tpu.pipeline_mode<synchronous>, transform_indices = @transform_3, window_bounds = array<i64: 16, 1>}, {transform_indices = @transform_4, window_bounds = array<i64: 1, 1, 16, 128>}]} {
    %c0 = arith.constant 0 : index
    %c0_0 = arith.constant 0 : index
    %c0_1 = arith.constant 0 : index
    %c0_2 = arith.constant 0 : index
    %0 = vector.load %arg2[%c0, %c0_0, %c0_1, %c0_2] : memref<1x1x32x128xbf16, #tpu.memory_space<vmem>>, vector<1x1x32x128xbf16>
    %1 = vector.shape_cast %0 : vector<1x1x32x128xbf16> to vector<32x128xbf16>
    %c0_3 = arith.constant 0 : index
    %c0_4 = arith.constant 0 : index
    %2 = vector.load %arg3[%c0_3, %c0_4] : memref<16x32xbf16, #tpu.memory_space<vmem>>, vector<16x32xbf16>
    %cst = arith.constant dense<0.000000e+00> : vector<16x128xf32>
    %3 = tpu.matmul %2, %1, %cst {dimension_numbers = #tpu.dot_dimension_numbers<[1], [0], [0], [1], [0, 0, 1, 1], [], []>} : vector<16x32xbf16>, vector<32x128xbf16>, vector<16x128xf32> -> vector<16x128xf32>
    %c0_5 = arith.constant 0 : index
    %c0_6 = arith.constant 0 : index
    %4 = vector.load %arg4[%c0_5, %c0_6] : memref<16x1xf32, #tpu.memory_space<vmem>>, vector<16x1xf32>
    %5 = vector.broadcast %4 : vector<16x1xf32> to vector<16x128xf32>
    %6 = arith.mulf %3, %5 : vector<16x128xf32>
    %c0_7 = arith.constant 0 : index
    %c0_8 = arith.constant 0 : index
    %7 = vector.load %arg5[%c0_7, %c0_8] : memref<16x1xf32, #tpu.memory_space<vmem>>, vector<16x1xf32>
    %8 = vector.broadcast %7 : vector<16x1xf32> to vector<16x128xf32>
    %9 = arith.addf %6, %8 : vector<16x128xf32>
    %10 = arith.truncf %9 : vector<16x128xf32> to vector<16x128xbf16>
    %c0_9 = arith.constant 0 : index
    %c0_10 = arith.constant 0 : index
    %c0_11 = arith.constant 0 : index
    %c0_12 = arith.constant 0 : index
    %11 = vector.load %arg6[%c0_9, %c0_10, %c0_11, %c0_12] : memref<1x1x16x128xbf16, #tpu.memory_space<vmem>>, vector<1x1x16x128xbf16>
    %12 = vector.shape_cast %11 : vector<1x1x16x128xbf16> to vector<16x128xbf16>
    %13 = vector.shape_cast %10 : vector<16x128xbf16> to vector<1x1x16x128xbf16>
    tpu.vector_store %arg6[%c0_9, %c0_10, %c0_11, %c0_12], %13 {strides = array<i32>} : memref<1x1x16x128xbf16, #tpu.memory_space<vmem>>, vector<1x1x16x128xbf16>,
    return
  }
  func.func @transform_0(%arg0: i32, %arg1: i32) -> (i32, i32, i32, i32) {
    %c1_i32 = arith.constant 1 : i32
    %0 = arith.muli %arg1, %c1_i32 : i32
    %c0_i32 = arith.constant 0 : i32
    %1 = arith.addi %0, %c0_i32 : i32
    %c0_i32_0 = arith.constant 0 : i32
    %c0_i32_1 = arith.constant 0 : i32
    %c0_i32_2 = arith.constant 0 : i32
    return %arg0, %1, %c0_i32_0, %c0_i32_1 : i32, i32, i32, i32
  }
  func.func @transform_1(%arg0: i32, %arg1: i32) -> (i32, i32) {
    %c0_i32 = arith.constant 0 : i32
    %c0_i32_0 = arith.constant 0 : i32
    %c0_i32_1 = arith.constant 0 : i32
    return %c0_i32, %c0_i32_0 : i32, i32
  }
  func.func @transform_2(%arg0: i32, %arg1: i32) -> (i32, i32) {
    %c0_i32 = arith.constant 0 : i32
    %c0_i32_0 = arith.constant 0 : i32
    %c0_i32_1 = arith.constant 0 : i32
    return %c0_i32, %c0_i32_0 : i32, i32
  }
  func.func @transform_3(%arg0: i32, %arg1: i32) -> (i32, i32) {
    %c0_i32 = arith.constant 0 : i32
    %c0_i32_0 = arith.constant 0 : i32
    %c0_i32_1 = arith.constant 0 : i32
    return %c0_i32, %c0_i32_0 : i32, i32
  }
  func.func @transform_4(%arg0: i32, %arg1: i32) -> (i32, i32, i32, i32) {
    %c0_i32 = arith.constant 0 : i32
    %c0_i32_0 = arith.constant 0 : i32
    %c0_i32_1 = arith.constant 0 : i32
    return %arg0, %arg1, %c0_i32, %c0_i32_0 : i32, i32, i32, i32
  }
}

module attributes {stable_mosaic.version = 11 : i64} {
  func.func @_cgf_add_kernel(%arg0: i32, %arg1: i32, %arg2: memref<1x16x64xbf16, #tpu.memory_space<vmem>>, %arg3: memref<1x4x16x64xbf16, #tpu.memory_space<vmem>>, %arg4: memref<1x4x16x64xbf16, #tpu.memory_space<vmem>>) attributes {dimension_semantics = [#tpu.dimension_semantics<parallel>, #tpu.dimension_semantics<parallel>], iteration_bounds = array<i64: 2, 1>, scalar_prefetch = 0 : i64, scratch_operands = 0 : i64, tpu.core_type = #tpu.core_type<tc>, window_params = [{transform_indices = @transform_0, window_bounds = array<i64: 1, 16, 64>}, {transform_indices = @transform_1, window_bounds = array<i64: 1, 4, 16, 64>}, {transform_indices = @transform_2, window_bounds = array<i64: 1, 4, 16, 64>}]} {
    %c0 = arith.constant 0 : index
    %c0_0 = arith.constant 0 : index
    %c0_1 = arith.constant 0 : index
    %0 = vector.load %arg2[%c0, %c0_0, %c0_1] : memref<1x16x64xbf16, #tpu.memory_space<vmem>>, vector<1x16x64xbf16>
    %1 = vector.shape_cast %0 : vector<1x16x64xbf16> to vector<16x64xbf16>
    %2 = arith.extf %1 : vector<16x64xbf16> to vector<16x64xf32>
    %3 = vector.shape_cast %2 : vector<16x64xf32> to vector<1x16x64xf32>
    %c0_2 = arith.constant 0 : index
    %c0_3 = arith.constant 0 : index
    %c0_4 = arith.constant 0 : index
    %c0_5 = arith.constant 0 : index
    %4 = vector.load %arg3[%c0_2, %c0_3, %c0_4, %c0_5] : memref<1x4x16x64xbf16, #tpu.memory_space<vmem>>, vector<1x4x16x64xbf16>
    %5 = vector.shape_cast %4 : vector<1x4x16x64xbf16> to vector<4x16x64xbf16>
    %6 = arith.extf %5 : vector<4x16x64xbf16> to vector<4x16x64xf32>
    %7 = vector.broadcast %3 : vector<1x16x64xf32> to vector<4x16x64xf32>
    %8 = arith.addf %7, %6 : vector<4x16x64xf32>
    %9 = arith.truncf %8 : vector<4x16x64xf32> to vector<4x16x64xbf16>
    %c0_6 = arith.constant 0 : index
    %c0_7 = arith.constant 0 : index
    %c0_8 = arith.constant 0 : index
    %c0_9 = arith.constant 0 : index
    %10 = vector.load %arg4[%c0_6, %c0_7, %c0_8, %c0_9] : memref<1x4x16x64xbf16, #tpu.memory_space<vmem>>, vector<1x4x16x64xbf16>
    %11 = vector.shape_cast %10 : vector<1x4x16x64xbf16> to vector<4x16x64xbf16>
    %12 = vector.shape_cast %9 : vector<4x16x64xbf16> to vector<1x4x16x64xbf16>
    tpu.vector_store %arg4[%c0_6, %c0_7, %c0_8, %c0_9], %12 {strides = array<i32>} : memref<1x4x16x64xbf16, #tpu.memory_space<vmem>>, vector<1x4x16x64xbf16>,
    return
  }
  func.func @transform_0(%arg0: i32, %arg1: i32) -> (i32, i32, i32) {
    %c0_i32 = arith.constant 0 : i32
    %c0_i32_0 = arith.constant 0 : i32
    %c0_i32_1 = arith.constant 0 : i32
    return %arg0, %c0_i32, %c0_i32_0 : i32, i32, i32
  }
  func.func @transform_1(%arg0: i32, %arg1: i32) -> (i32, i32, i32, i32) {
    %c0_i32 = arith.constant 0 : i32
    %c0_i32_0 = arith.constant 0 : i32
    %c0_i32_1 = arith.constant 0 : i32
    return %arg0, %arg1, %c0_i32, %c0_i32_0 : i32, i32, i32, i32
  }
  func.func @transform_2(%arg0: i32, %arg1: i32) -> (i32, i32, i32, i32) {
    %c0_i32 = arith.constant 0 : i32
    %c0_i32_0 = arith.constant 0 : i32
    %c0_i32_1 = arith.constant 0 : i32
    return %arg0, %arg1, %c0_i32, %c0_i32_0 : i32, i32, i32, i32
  }
}

module attributes {stable_mosaic.version = 11 : i64} {
  func.func @kernel(%arg0: i32, %arg1: i32, %arg2: memref<1x1x16x256xbf16, #tpu.memory_space<vmem>>, %arg3: memref<16x400xbf16, #tpu.memory_space<vmem>>, %arg4: memref<16x1xf32, #tpu.memory_space<vmem>>, %arg5: memref<16x1xf32, #tpu.memory_space<vmem>>, %arg6: memref<1x1x16x128xbf16, #tpu.memory_space<vmem>>) attributes {dimension_semantics = [#tpu.dimension_semantics<parallel>, #tpu.dimension_semantics<parallel>], iteration_bounds = array<i64: 2, 4>, scalar_prefetch = 0 : i64, scratch_operands = 0 : i64, tpu.core_type = #tpu.core_type<tc>, window_params = [{transform_indices = @transform_0, window_bounds = array<i64: 1, 1, 16, 256>}, {pipeline_mode = #tpu.pipeline_mode<synchronous>, transform_indices = @transform_1, window_bounds = array<i64: 16, 400>}, {pipeline_mode = #tpu.pipeline_mode<synchronous>, transform_indices = @transform_2, window_bounds = array<i64: 16, 1>}, {pipeline_mode = #tpu.pipeline_mode<synchronous>, transform_indices = @transform_3, window_bounds = array<i64: 16, 1>}, {transform_indices = @transform_4, window_bounds = array<i64: 1, 1, 16, 128>}]} {
    %c0 = arith.constant 0 : index
    %c0_0 = arith.constant 0 : index
    %c0_1 = arith.constant 0 : index
    %c0_2 = arith.constant 0 : index
    %0 = vector.load %arg2[%c0, %c0_0, %c0_1, %c0_2] : memref<1x1x16x256xbf16, #tpu.memory_space<vmem>>, vector<1x1x16x128xbf16>
    %1 = vector.shape_cast %0 : vector<1x1x16x128xbf16> to vector<16x128xbf16>
    %c0_3 = arith.constant 0 : index
    %c0_4 = arith.constant 0 : index
    %c0_5 = arith.constant 0 : index
    %c1 = arith.constant 1 : index
    %2 = vector.load %arg2[%c0_3, %c0_4, %c0_5, %c1] : memref<1x1x16x256xbf16, #tpu.memory_space<vmem>>, vector<1x1x16x128xbf16>
    %3 = vector.shape_cast %2 : vector<1x1x16x128xbf16> to vector<16x128xbf16>
    %c0_6 = arith.constant 0 : index
    %c0_7 = arith.constant 0 : index
    %c0_8 = arith.constant 0 : index
    %c2 = arith.constant 2 : index
    %4 = vector.load %arg2[%c0_6, %c0_7, %c0_8, %c2] : memref<1x1x16x256xbf16, #tpu.memory_space<vmem>>, vector<1x1x16x128xbf16>
    %5 = vector.shape_cast %4 : vector<1x1x16x128xbf16> to vector<16x128xbf16>
    %c0_9 = arith.constant 0 : index
    %c0_10 = arith.constant 0 : index
    %c0_11 = arith.constant 0 : index
    %c3 = arith.constant 3 : index
    %6 = vector.load %arg2[%c0_9, %c0_10, %c0_11, %c3] : memref<1x1x16x256xbf16, #tpu.memory_space<vmem>>, vector<1x1x16x128xbf16>
    %7 = vector.shape_cast %6 : vector<1x1x16x128xbf16> to vector<16x128xbf16>
    %c0_12 = arith.constant 0 : index
    %c0_13 = arith.constant 0 : index
    %c0_14 = arith.constant 0 : index
    %c4 = arith.constant 4 : index
    %8 = vector.load %arg2[%c0_12, %c0_13, %c0_14, %c4] : memref<1x1x16x256xbf16, #tpu.memory_space<vmem>>, vector<1x1x16x128xbf16>
    %9 = vector.shape_cast %8 : vector<1x1x16x128xbf16> to vector<16x128xbf16>
    %c0_15 = arith.constant 0 : index
    %c0_16 = arith.constant 0 : index
    %c0_17 = arith.constant 0 : index
    %c12 = arith.constant 12 : index
    %10 = vector.load %arg2[%c0_15, %c0_16, %c0_17, %c12] : memref<1x1x16x256xbf16, #tpu.memory_space<vmem>>, vector<1x1x16x128xbf16>
    %11 = vector.shape_cast %10 : vector<1x1x16x128xbf16> to vector<16x128xbf16>
    %c0_18 = arith.constant 0 : index
    %c0_19 = arith.constant 0 : index
    %c0_20 = arith.constant 0 : index
    %c13 = arith.constant 13 : index
    %12 = vector.load %arg2[%c0_18, %c0_19, %c0_20, %c13] : memref<1x1x16x256xbf16, #tpu.memory_space<vmem>>, vector<1x1x16x128xbf16>
    %13 = vector.shape_cast %12 : vector<1x1x16x128xbf16> to vector<16x128xbf16>
    %c0_21 = arith.constant 0 : index
    %c0_22 = arith.constant 0 : index
    %c0_23 = arith.constant 0 : index
    %c14 = arith.constant 14 : index
    %14 = vector.load %arg2[%c0_21, %c0_22, %c0_23, %c14] : memref<1x1x16x256xbf16, #tpu.memory_space<vmem>>, vector<1x1x16x128xbf16>
    %15 = vector.shape_cast %14 : vector<1x1x16x128xbf16> to vector<16x128xbf16>
    %c0_24 = arith.constant 0 : index
    %c0_25 = arith.constant 0 : index
    %c0_26 = arith.constant 0 : index
    %c15 = arith.constant 15 : index
    %16 = vector.load %arg2[%c0_24, %c0_25, %c0_26, %c15] : memref<1x1x16x256xbf16, #tpu.memory_space<vmem>>, vector<1x1x16x128xbf16>
    %17 = vector.shape_cast %16 : vector<1x1x16x128xbf16> to vector<16x128xbf16>
    %c0_27 = arith.constant 0 : index
    %c0_28 = arith.constant 0 : index
    %c0_29 = arith.constant 0 : index
    %c16 = arith.constant 16 : index
    %18 = vector.load %arg2[%c0_27, %c0_28, %c0_29, %c16] : memref<1x1x16x256xbf16, #tpu.memory_space<vmem>>, vector<1x1x16x128xbf16>
    %19 = vector.shape_cast %18 : vector<1x1x16x128xbf16> to vector<16x128xbf16>
    %c0_30 = arith.constant 0 : index
    %c0_31 = arith.constant 0 : index
    %c0_32 = arith.constant 0 : index
    %c24 = arith.constant 24 : index
    %20 = vector.load %arg2[%c0_30, %c0_31, %c0_32, %c24] : memref<1x1x16x256xbf16, #tpu.memory_space<vmem>>, vector<1x1x16x128xbf16>
    %21 = vector.shape_cast %20 : vector<1x1x16x128xbf16> to vector<16x128xbf16>
    %c0_33 = arith.constant 0 : index
    %c0_34 = arith.constant 0 : index
    %c0_35 = arith.constant 0 : index
    %c25 = arith.constant 25 : index
    %22 = vector.load %arg2[%c0_33, %c0_34, %c0_35, %c25] : memref<1x1x16x256xbf16, #tpu.memory_space<vmem>>, vector<1x1x16x128xbf16>
    %23 = vector.shape_cast %22 : vector<1x1x16x128xbf16> to vector<16x128xbf16>
    %c0_36 = arith.constant 0 : index
    %c0_37 = arith.constant 0 : index
    %c0_38 = arith.constant 0 : index
    %c26 = arith.constant 26 : index
    %24 = vector.load %arg2[%c0_36, %c0_37, %c0_38, %c26] : memref<1x1x16x256xbf16, #tpu.memory_space<vmem>>, vector<1x1x16x128xbf16>
    %25 = vector.shape_cast %24 : vector<1x1x16x128xbf16> to vector<16x128xbf16>
    %c0_39 = arith.constant 0 : index
    %c0_40 = arith.constant 0 : index
    %c0_41 = arith.constant 0 : index
    %c27 = arith.constant 27 : index
    %26 = vector.load %arg2[%c0_39, %c0_40, %c0_41, %c27] : memref<1x1x16x256xbf16, #tpu.memory_space<vmem>>, vector<1x1x16x128xbf16>
    %27 = vector.shape_cast %26 : vector<1x1x16x128xbf16> to vector<16x128xbf16>
    %c0_42 = arith.constant 0 : index
    %c0_43 = arith.constant 0 : index
    %c0_44 = arith.constant 0 : index
    %c28 = arith.constant 28 : index
    %28 = vector.load %arg2[%c0_42, %c0_43, %c0_44, %c28] : memref<1x1x16x256xbf16, #tpu.memory_space<vmem>>, vector<1x1x16x128xbf16>
    %29 = vector.shape_cast %28 : vector<1x1x16x128xbf16> to vector<16x128xbf16>
    %c0_45 = arith.constant 0 : index
    %c0_46 = arith.constant 0 : index
    %c0_47 = arith.constant 0 : index
    %c36 = arith.constant 36 : index
    %30 = vector.load %arg2[%c0_45, %c0_46, %c0_47, %c36] : memref<1x1x16x256xbf16, #tpu.memory_space<vmem>>, vector<1x1x16x128xbf16>
    %31 = vector.shape_cast %30 : vector<1x1x16x128xbf16> to vector<16x128xbf16>
    %c0_48 = arith.constant 0 : index
    %c0_49 = arith.constant 0 : index
    %c0_50 = arith.constant 0 : index
    %c37 = arith.constant 37 : index
    %32 = vector.load %arg2[%c0_48, %c0_49, %c0_50, %c37] : memref<1x1x16x256xbf16, #tpu.memory_space<vmem>>, vector<1x1x16x128xbf16>
    %33 = vector.shape_cast %32 : vector<1x1x16x128xbf16> to vector<16x128xbf16>
    %c0_51 = arith.constant 0 : index
    %c0_52 = arith.constant 0 : index
    %c0_53 = arith.constant 0 : index
    %c38 = arith.constant 38 : index
    %34 = vector.load %arg2[%c0_51, %c0_52, %c0_53, %c38] : memref<1x1x16x256xbf16, #tpu.memory_space<vmem>>, vector<1x1x16x128xbf16>
    %35 = vector.shape_cast %34 : vector<1x1x16x128xbf16> to vector<16x128xbf16>
    %c0_54 = arith.constant 0 : index
    %c0_55 = arith.constant 0 : index
    %c0_56 = arith.constant 0 : index
    %c39 = arith.constant 39 : index
    %36 = vector.load %arg2[%c0_54, %c0_55, %c0_56, %c39] : memref<1x1x16x256xbf16, #tpu.memory_space<vmem>>, vector<1x1x16x128xbf16>
    %37 = vector.shape_cast %36 : vector<1x1x16x128xbf16> to vector<16x128xbf16>
    %c0_57 = arith.constant 0 : index
    %c0_58 = arith.constant 0 : index
    %c0_59 = arith.constant 0 : index
    %c40 = arith.constant 40 : index
    %38 = vector.load %arg2[%c0_57, %c0_58, %c0_59, %c40] : memref<1x1x16x256xbf16, #tpu.memory_space<vmem>>, vector<1x1x16x128xbf16>
    %39 = vector.shape_cast %38 : vector<1x1x16x128xbf16> to vector<16x128xbf16>
    %c0_60 = arith.constant 0 : index
    %c0_61 = arith.constant 0 : index
    %c0_62 = arith.constant 0 : index
    %c48 = arith.constant 48 : index
    %40 = vector.load %arg2[%c0_60, %c0_61, %c0_62, %c48] : memref<1x1x16x256xbf16, #tpu.memory_space<vmem>>, vector<1x1x16x128xbf16>
    %41 = vector.shape_cast %40 : vector<1x1x16x128xbf16> to vector<16x128xbf16>
    %c0_63 = arith.constant 0 : index
    %c0_64 = arith.constant 0 : index
    %c0_65 = arith.constant 0 : index
    %c49 = arith.constant 49 : index
    %42 = vector.load %arg2[%c0_63, %c0_64, %c0_65, %c49] : memref<1x1x16x256xbf16, #tpu.memory_space<vmem>>, vector<1x1x16x128xbf16>
    %43 = vector.shape_cast %42 : vector<1x1x16x128xbf16> to vector<16x128xbf16>
    %c0_66 = arith.constant 0 : index
    %c0_67 = arith.constant 0 : index
    %c0_68 = arith.constant 0 : index
    %c50 = arith.constant 50 : index
    %44 = vector.load %arg2[%c0_66, %c0_67, %c0_68, %c50] : memref<1x1x16x256xbf16, #tpu.memory_space<vmem>>, vector<1x1x16x128xbf16>
    %45 = vector.shape_cast %44 : vector<1x1x16x128xbf16> to vector<16x128xbf16>
    %c0_69 = arith.constant 0 : index
    %c0_70 = arith.constant 0 : index
    %c0_71 = arith.constant 0 : index
    %c51 = arith.constant 51 : index
    %46 = vector.load %arg2[%c0_69, %c0_70, %c0_71, %c51] : memref<1x1x16x256xbf16, #tpu.memory_space<vmem>>, vector<1x1x16x128xbf16>
    %47 = vector.shape_cast %46 : vector<1x1x16x128xbf16> to vector<16x128xbf16>
    %c0_72 = arith.constant 0 : index
    %c0_73 = arith.constant 0 : index
    %c0_74 = arith.constant 0 : index
    %c52 = arith.constant 52 : index
    %48 = vector.load %arg2[%c0_72, %c0_73, %c0_74, %c52] : memref<1x1x16x256xbf16, #tpu.memory_space<vmem>>, vector<1x1x16x128xbf16>
    %49 = vector.shape_cast %48 : vector<1x1x16x128xbf16> to vector<16x128xbf16>
    %50 = tpu.concatenate %1, %3, %5, %7, %9, %11, %13, %15, %17, %19, %21, %23, %25, %27, %29, %31 in 0 : vector<16x128xbf16>, vector<16x128xbf16>, vector<16x128xbf16>, vector<16x128xbf16>, vector<16x128xbf16>, vector<16x128xbf16>, vector<16x128xbf16>, vector<16x128xbf16>, vector<16x128xbf16>, vector<16x128xbf16>, vector<16x128xbf16>, vector<16x128xbf16>, vector<16x128xbf16>, vector<16x128xbf16>, vector<16x128xbf16>, vector<16x128xbf16> -> vector<256x128xbf16>
    %51 = tpu.concatenate %33, %35, %37, %39, %41, %43, %45, %47, %49 in 0 : vector<16x128xbf16>, vector<16x128xbf16>, vector<16x128xbf16>, vector<16x128xbf16>, vector<16x128xbf16>, vector<16x128xbf16>, vector<16x128xbf16>, vector<16x128xbf16>, vector<16x128xbf16> -> vector<144x128xbf16>
    %52 = tpu.concatenate %50, %51 in 0 : vector<256x128xbf16>, vector<144x128xbf16> -> vector<400x128xbf16>
    %c0_75 = arith.constant 0 : index
    %c0_76 = arith.constant 0 : index
    %53 = vector.load %arg3[%c0_75, %c0_76] : memref<16x400xbf16, #tpu.memory_space<vmem>>, vector<16x400xbf16>
    %cst = arith.constant dense<0.000000e+00> : vector<16x128xf32>
    %54 = tpu.matmul %53, %52, %cst {dimension_numbers = #tpu.dot_dimension_numbers<[1], [0], [0], [1], [0, 0, 1, 1], [], []>} : vector<16x400xbf16>, vector<400x128xbf16>, vector<16x128xf32> -> vector<16x128xf32>
    %c0_77 = arith.constant 0 : index
    %c0_78 = arith.constant 0 : index
    %55 = vector.load %arg4[%c0_77, %c0_78] : memref<16x1xf32, #tpu.memory_space<vmem>>, vector<16x1xf32>
    %56 = vector.broadcast %55 : vector<16x1xf32> to vector<16x128xf32>
    %57 = arith.mulf %54, %56 : vector<16x128xf32>
    %c0_79 = arith.constant 0 : index
    %c0_80 = arith.constant 0 : index
    %58 = vector.load %arg5[%c0_79, %c0_80] : memref<16x1xf32, #tpu.memory_space<vmem>>, vector<16x1xf32>
    %59 = vector.broadcast %58 : vector<16x1xf32> to vector<16x128xf32>
    %60 = arith.addf %57, %59 : vector<16x128xf32>
    %cst_81 = arith.constant 0.000000e+00 : f32
    %61 = vector.broadcast %cst_81 : f32 to vector<16x128xf32>
    %62 = arith.cmpf oge, %60, %61 : vector<16x128xf32>
    %cst_82 = arith.constant 0.00999999977 : f32
    %63 = vector.broadcast %cst_82 : f32 to vector<16x128xf32>
    %64 = arith.mulf %63, %60 : vector<16x128xf32>
    %65 = arith.select %62, %60, %64 : vector<16x128xi1>, vector<16x128xf32>
    %66 = arith.truncf %65 : vector<16x128xf32> to vector<16x128xbf16>
    %c0_83 = arith.constant 0 : index
    %c0_84 = arith.constant 0 : index
    %c0_85 = arith.constant 0 : index
    %c0_86 = arith.constant 0 : index
    %67 = vector.load %arg6[%c0_83, %c0_84, %c0_85, %c0_86] : memref<1x1x16x128xbf16, #tpu.memory_space<vmem>>, vector<1x1x16x128xbf16>
    %68 = vector.shape_cast %67 : vector<1x1x16x128xbf16> to vector<16x128xbf16>
    %69 = vector.shape_cast %66 : vector<16x128xbf16> to vector<1x1x16x128xbf16>
    tpu.vector_store %arg6[%c0_83, %c0_84, %c0_85, %c0_86], %69 {strides = array<i32>} : memref<1x1x16x128xbf16, #tpu.memory_space<vmem>>, vector<1x1x16x128xbf16>,
    return
  }
  func.func @transform_0(%arg0: i32, %arg1: i32) -> (i32, i32, i32, i32) {
    %c1_i32 = arith.constant 1 : i32
    %0 = arith.muli %arg1, %c1_i32 : i32
    %c0_i32 = arith.constant 0 : i32
    %1 = arith.addi %0, %c0_i32 : i32
    %c0_i32_0 = arith.constant 0 : i32
    %c0_i32_1 = arith.constant 0 : i32
    %c0_i32_2 = arith.constant 0 : i32
    return %arg0, %1, %c0_i32_0, %c0_i32_1 : i32, i32, i32, i32
  }
  func.func @transform_1(%arg0: i32, %arg1: i32) -> (i32, i32) {
    %c0_i32 = arith.constant 0 : i32
    %c0_i32_0 = arith.constant 0 : i32
    %c0_i32_1 = arith.constant 0 : i32
    return %c0_i32, %c0_i32_0 : i32, i32
  }
  func.func @transform_2(%arg0: i32, %arg1: i32) -> (i32, i32) {
    %c0_i32 = arith.constant 0 : i32
    %c0_i32_0 = arith.constant 0 : i32
    %c0_i32_1 = arith.constant 0 : i32
    return %c0_i32, %c0_i32_0 : i32, i32
  }
  func.func @transform_3(%arg0: i32, %arg1: i32) -> (i32, i32) {
    %c0_i32 = arith.constant 0 : i32
    %c0_i32_0 = arith.constant 0 : i32
    %c0_i32_1 = arith.constant 0 : i32
    return %c0_i32, %c0_i32_0 : i32, i32
  }
  func.func @transform_4(%arg0: i32, %arg1: i32) -> (i32, i32, i32, i32) {
    %c0_i32 = arith.constant 0 : i32
    %c0_i32_0 = arith.constant 0 : i32
    %c0_i32_1 = arith.constant 0 : i32
    return %arg0, %arg1, %c0_i32, %c0_i32_0 : i32, i32, i32, i32
  }
}

module attributes {stable_mosaic.version = 11 : i64} {
  func.func @kernel(%arg0: i32, %arg1: i32, %arg2: memref<1x1x16x128xbf16, #tpu.memory_space<vmem>>, %arg3: memref<16x16xbf16, #tpu.memory_space<vmem>>, %arg4: memref<16x1xf32, #tpu.memory_space<vmem>>, %arg5: memref<16x1xf32, #tpu.memory_space<vmem>>, %arg6: memref<1x1x16x128xbf16, #tpu.memory_space<vmem>>) attributes {dimension_semantics = [#tpu.dimension_semantics<parallel>, #tpu.dimension_semantics<parallel>], iteration_bounds = array<i64: 2, 4>, scalar_prefetch = 0 : i64, scratch_operands = 0 : i64, tpu.core_type = #tpu.core_type<tc>, window_params = [{transform_indices = @transform_0, window_bounds = array<i64: 1, 1, 16, 128>}, {pipeline_mode = #tpu.pipeline_mode<synchronous>, transform_indices = @transform_1, window_bounds = array<i64: 16, 16>}, {pipeline_mode = #tpu.pipeline_mode<synchronous>, transform_indices = @transform_2, window_bounds = array<i64: 16, 1>}, {pipeline_mode = #tpu.pipeline_mode<synchronous>, transform_indices = @transform_3, window_bounds = array<i64: 16, 1>}, {transform_indices = @transform_4, window_bounds = array<i64: 1, 1, 16, 128>}]} {
    %c0 = arith.constant 0 : index
    %c0_0 = arith.constant 0 : index
    %c0_1 = arith.constant 0 : index
    %c0_2 = arith.constant 0 : index
    %0 = vector.load %arg2[%c0, %c0_0, %c0_1, %c0_2] : memref<1x1x16x128xbf16, #tpu.memory_space<vmem>>, vector<1x1x16x128xbf16>
    %1 = vector.shape_cast %0 : vector<1x1x16x128xbf16> to vector<16x128xbf16>
    %c0_3 = arith.constant 0 : index
    %c0_4 = arith.constant 0 : index
    %2 = vector.load %arg3[%c0_3, %c0_4] : memref<16x16xbf16, #tpu.memory_space<vmem>>, vector<16x16xbf16>
    %cst = arith.constant dense<0.000000e+00> : vector<16x128xf32>
    %3 = tpu.matmul %2, %1, %cst {dimension_numbers = #tpu.dot_dimension_numbers<[1], [0], [0], [1], [0, 0, 1, 1], [], []>} : vector<16x16xbf16>, vector<16x128xbf16>, vector<16x128xf32> -> vector<16x128xf32>
    %c0_5 = arith.constant 0 : index
    %c0_6 = arith.constant 0 : index
    %4 = vector.load %arg4[%c0_5, %c0_6] : memref<16x1xf32, #tpu.memory_space<vmem>>, vector<16x1xf32>
    %5 = vector.broadcast %4 : vector<16x1xf32> to vector<16x128xf32>
    %6 = arith.mulf %3, %5 : vector<16x128xf32>
    %c0_7 = arith.constant 0 : index
    %c0_8 = arith.constant 0 : index
    %7 = vector.load %arg5[%c0_7, %c0_8] : memref<16x1xf32, #tpu.memory_space<vmem>>, vector<16x1xf32>
    %8 = vector.broadcast %7 : vector<16x1xf32> to vector<16x128xf32>
    %9 = arith.addf %6, %8 : vector<16x128xf32>
    %10 = arith.truncf %9 : vector<16x128xf32> to vector<16x128xbf16>
    %c0_9 = arith.constant 0 : index
    %c0_10 = arith.constant 0 : index
    %c0_11 = arith.constant 0 : index
    %c0_12 = arith.constant 0 : index
    %11 = vector.load %arg6[%c0_9, %c0_10, %c0_11, %c0_12] : memref<1x1x16x128xbf16, #tpu.memory_space<vmem>>, vector<1x1x16x128xbf16>
    %12 = vector.shape_cast %11 : vector<1x1x16x128xbf16> to vector<16x128xbf16>
    %13 = vector.shape_cast %10 : vector<16x128xbf16> to vector<1x1x16x128xbf16>
    tpu.vector_store %arg6[%c0_9, %c0_10, %c0_11, %c0_12], %13 {strides = array<i32>} : memref<1x1x16x128xbf16, #tpu.memory_space<vmem>>, vector<1x1x16x128xbf16>,
    return
  }
  func.func @transform_0(%arg0: i32, %arg1: i32) -> (i32, i32, i32, i32) {
    %c1_i32 = arith.constant 1 : i32
    %0 = arith.muli %arg1, %c1_i32 : i32
    %c0_i32 = arith.constant 0 : i32
    %1 = arith.addi %0, %c0_i32 : i32
    %c0_i32_0 = arith.constant 0 : i32
    %c0_i32_1 = arith.constant 0 : i32
    %c0_i32_2 = arith.constant 0 : i32
    return %arg0, %1, %c0_i32_0, %c0_i32_1 : i32, i32, i32, i32
  }
  func.func @transform_1(%arg0: i32, %arg1: i32) -> (i32, i32) {
    %c0_i32 = arith.constant 0 : i32
    %c0_i32_0 = arith.constant 0 : i32
    %c0_i32_1 = arith.constant 0 : i32
    return %c0_i32, %c0_i32_0 : i32, i32
  }
  func.func @transform_2(%arg0: i32, %arg1: i32) -> (i32, i32) {
    %c0_i32 = arith.constant 0 : i32
    %c0_i32_0 = arith.constant 0 : i32
    %c0_i32_1 = arith.constant 0 : i32
    return %c0_i32, %c0_i32_0 : i32, i32
  }
  func.func @transform_3(%arg0: i32, %arg1: i32) -> (i32, i32) {
    %c0_i32 = arith.constant 0 : i32
    %c0_i32_0 = arith.constant 0 : i32
    %c0_i32_1 = arith.constant 0 : i32
    return %c0_i32, %c0_i32_0 : i32, i32
  }
  func.func @transform_4(%arg0: i32, %arg1: i32) -> (i32, i32, i32, i32) {
    %c0_i32 = arith.constant 0 : i32
    %c0_i32_0 = arith.constant 0 : i32
    %c0_i32_1 = arith.constant 0 : i32
    return %arg0, %arg1, %c0_i32, %c0_i32_0 : i32, i32, i32, i32
  }
}

module attributes {stable_mosaic.version = 11 : i64} {
  func.func @_cgf_fuse_kernel(%arg0: i32, %arg1: i32, %arg2: memref<1x4x16x64xbf16, #tpu.memory_space<vmem>>, %arg3: memref<1x16x64xbf16, #tpu.memory_space<vmem>>, %arg4: memref<1x4x16x64xbf16, #tpu.memory_space<vmem>>, %arg5: memref<1x4x16x64xbf16, #tpu.memory_space<vmem>>) attributes {dimension_semantics = [#tpu.dimension_semantics<parallel>, #tpu.dimension_semantics<parallel>], iteration_bounds = array<i64: 2, 1>, scalar_prefetch = 0 : i64, scratch_operands = 0 : i64, tpu.core_type = #tpu.core_type<tc>, window_params = [{transform_indices = @transform_0, window_bounds = array<i64: 1, 4, 16, 64>}, {transform_indices = @transform_1, window_bounds = array<i64: 1, 16, 64>}, {transform_indices = @transform_2, window_bounds = array<i64: 1, 4, 16, 64>}, {transform_indices = @transform_3, window_bounds = array<i64: 1, 4, 16, 64>}]} {
    %c0 = arith.constant 0 : index
    %c0_0 = arith.constant 0 : index
    %c0_1 = arith.constant 0 : index
    %0 = vector.load %arg3[%c0, %c0_0, %c0_1] : memref<1x16x64xbf16, #tpu.memory_space<vmem>>, vector<1x16x64xbf16>
    %1 = vector.shape_cast %0 : vector<1x16x64xbf16> to vector<16x64xbf16>
    %2 = arith.extf %1 : vector<16x64xbf16> to vector<16x64xf32>
    %c0_2 = arith.constant 0 : index
    %c0_3 = arith.constant 0 : index
    %c0_4 = arith.constant 0 : index
    %c0_5 = arith.constant 0 : index
    %3 = vector.load %arg2[%c0_2, %c0_3, %c0_4, %c0_5] : memref<1x4x16x64xbf16, #tpu.memory_space<vmem>>, vector<1x4x16x64xbf16>
    %4 = vector.shape_cast %3 : vector<1x4x16x64xbf16> to vector<4x16x64xbf16>
    %5 = arith.extf %4 : vector<4x16x64xbf16> to vector<4x16x64xf32>
    %6 = arith.negf %5 : vector<4x16x64xf32>
    %7 = math.exp %6 : vector<4x16x64xf32>
    %cst = arith.constant 1.000000e+00 : f32
    %8 = vector.broadcast %cst : f32 to vector<4x16x64xf32>
    %9 = arith.addf %8, %7 : vector<4x16x64xf32>
    %10 = arith.divf %8, %9 : vector<4x16x64xf32>
    %11 = vector.shape_cast %2 : vector<16x64xf32> to vector<1x16x64xf32>
    %12 = vector.broadcast %11 : vector<1x16x64xf32> to vector<4x16x64xf32>
    %13 = arith.mulf %10, %12 : vector<4x16x64xf32>
    %c0_6 = arith.constant 0 : index
    %c0_7 = arith.constant 0 : index
    %c0_8 = arith.constant 0 : index
    %c0_9 = arith.constant 0 : index
    %14 = vector.load %arg4[%c0_6, %c0_7, %c0_8, %c0_9] : memref<1x4x16x64xbf16, #tpu.memory_space<vmem>>, vector<1x4x16x64xbf16>
    %15 = vector.shape_cast %14 : vector<1x4x16x64xbf16> to vector<4x16x64xbf16>
    %16 = arith.extf %15 : vector<4x16x64xbf16> to vector<4x16x64xf32>
    %17 = arith.addf %13, %16 : vector<4x16x64xf32>
    %18 = arith.truncf %17 : vector<4x16x64xf32> to vector<4x16x64xbf16>
    %c0_10 = arith.constant 0 : index
    %c0_11 = arith.constant 0 : index
    %c0_12 = arith.constant 0 : index
    %c0_13 = arith.constant 0 : index
    %19 = vector.load %arg5[%c0_10, %c0_11, %c0_12, %c0_13] : memref<1x4x16x64xbf16, #tpu.memory_space<vmem>>, vector<1x4x16x64xbf16>
    %20 = vector.shape_cast %19 : vector<1x4x16x64xbf16> to vector<4x16x64xbf16>
    %21 = vector.shape_cast %18 : vector<4x16x64xbf16> to vector<1x4x16x64xbf16>
    tpu.vector_store %arg5[%c0_10, %c0_11, %c0_12, %c0_13], %21 {strides = array<i32>} : memref<1x4x16x64xbf16, #tpu.memory_space<vmem>>, vector<1x4x16x64xbf16>,
    return
  }
  func.func @transform_0(%arg0: i32, %arg1: i32) -> (i32, i32, i32, i32) {
    %c0_i32 = arith.constant 0 : i32
    %c0_i32_0 = arith.constant 0 : i32
    %c0_i32_1 = arith.constant 0 : i32
    return %arg0, %arg1, %c0_i32, %c0_i32_0 : i32, i32, i32, i32
  }
  func.func @transform_1(%arg0: i32, %arg1: i32) -> (i32, i32, i32) {
    %c0_i32 = arith.constant 0 : i32
    %c0_i32_0 = arith.constant 0 : i32
    %c0_i32_1 = arith.constant 0 : i32
    return %arg0, %c0_i32, %c0_i32_0 : i32, i32, i32
  }
  func.func @transform_2(%arg0: i32, %arg1: i32) -> (i32, i32, i32, i32) {
    %c0_i32 = arith.constant 0 : i32
    %c0_i32_0 = arith.constant 0 : i32
    %c0_i32_1 = arith.constant 0 : i32
    return %arg0, %arg1, %c0_i32, %c0_i32_0 : i32, i32, i32, i32
  }
  func.func @transform_3(%arg0: i32, %arg1: i32) -> (i32, i32, i32, i32) {
    %c0_i32 = arith.constant 0 : i32
    %c0_i32_0 = arith.constant 0 : i32
    %c0_i32_1 = arith.constant 0 : i32
    return %arg0, %arg1, %c0_i32, %c0_i32_0 : i32, i32, i32, i32
  }
}

module attributes {stable_mosaic.version = 11 : i64} {
  func.func @kernel(%arg0: i32, %arg1: i32, %arg2: memref<1x1x16x256xbf16, #tpu.memory_space<vmem>>, %arg3: memref<1x1x16x256xbf16, #tpu.memory_space<vmem>>, %arg4: memref<4x288xbf16, #tpu.memory_space<vmem>>, %arg5: memref<4x1xf32, #tpu.memory_space<vmem>>, %arg6: memref<4x1xf32, #tpu.memory_space<vmem>>, %arg7: memref<1x1x4x128xf32, #tpu.memory_space<vmem>>) attributes {dimension_semantics = [#tpu.dimension_semantics<parallel>, #tpu.dimension_semantics<parallel>], iteration_bounds = array<i64: 2, 4>, scalar_prefetch = 0 : i64, scratch_operands = 0 : i64, tpu.core_type = #tpu.core_type<tc>, window_params = [{transform_indices = @transform_0, window_bounds = array<i64: 1, 1, 16, 256>}, {transform_indices = @transform_1, window_bounds = array<i64: 1, 1, 16, 256>}, {pipeline_mode = #tpu.pipeline_mode<synchronous>, transform_indices = @transform_2, window_bounds = array<i64: 4, 288>}, {pipeline_mode = #tpu.pipeline_mode<synchronous>, transform_indices = @transform_3, window_bounds = array<i64: 4, 1>}, {pipeline_mode = #tpu.pipeline_mode<synchronous>, transform_indices = @transform_4, window_bounds = array<i64: 4, 1>}, {transform_indices = @transform_5, window_bounds = array<i64: 1, 1, 4, 128>}]} {
    %c0 = arith.constant 0 : index
    %c0_0 = arith.constant 0 : index
    %c0_1 = arith.constant 0 : index
    %c0_2 = arith.constant 0 : index
    %0 = vector.load %arg2[%c0, %c0_0, %c0_1, %c0_2] : memref<1x1x16x256xbf16, #tpu.memory_space<vmem>>, vector<1x1x16x128xbf16>
    %1 = vector.shape_cast %0 : vector<1x1x16x128xbf16> to vector<16x128xbf16>
    %c0_3 = arith.constant 0 : index
    %c0_4 = arith.constant 0 : index
    %c0_5 = arith.constant 0 : index
    %c1 = arith.constant 1 : index
    %2 = vector.load %arg2[%c0_3, %c0_4, %c0_5, %c1] : memref<1x1x16x256xbf16, #tpu.memory_space<vmem>>, vector<1x1x16x128xbf16>
    %3 = vector.shape_cast %2 : vector<1x1x16x128xbf16> to vector<16x128xbf16>
    %c0_6 = arith.constant 0 : index
    %c0_7 = arith.constant 0 : index
    %c0_8 = arith.constant 0 : index
    %c2 = arith.constant 2 : index
    %4 = vector.load %arg2[%c0_6, %c0_7, %c0_8, %c2] : memref<1x1x16x256xbf16, #tpu.memory_space<vmem>>, vector<1x1x16x128xbf16>
    %5 = vector.shape_cast %4 : vector<1x1x16x128xbf16> to vector<16x128xbf16>
    %c0_9 = arith.constant 0 : index
    %c0_10 = arith.constant 0 : index
    %c0_11 = arith.constant 0 : index
    %c10 = arith.constant 10 : index
    %6 = vector.load %arg2[%c0_9, %c0_10, %c0_11, %c10] : memref<1x1x16x256xbf16, #tpu.memory_space<vmem>>, vector<1x1x16x128xbf16>
    %7 = vector.shape_cast %6 : vector<1x1x16x128xbf16> to vector<16x128xbf16>
    %c0_12 = arith.constant 0 : index
    %c0_13 = arith.constant 0 : index
    %c0_14 = arith.constant 0 : index
    %c11 = arith.constant 11 : index
    %8 = vector.load %arg2[%c0_12, %c0_13, %c0_14, %c11] : memref<1x1x16x256xbf16, #tpu.memory_space<vmem>>, vector<1x1x16x128xbf16>
    %9 = vector.shape_cast %8 : vector<1x1x16x128xbf16> to vector<16x128xbf16>
    %c0_15 = arith.constant 0 : index
    %c0_16 = arith.constant 0 : index
    %c0_17 = arith.constant 0 : index
    %c12 = arith.constant 12 : index
    %10 = vector.load %arg2[%c0_15, %c0_16, %c0_17, %c12] : memref<1x1x16x256xbf16, #tpu.memory_space<vmem>>, vector<1x1x16x128xbf16>
    %11 = vector.shape_cast %10 : vector<1x1x16x128xbf16> to vector<16x128xbf16>
    %c0_18 = arith.constant 0 : index
    %c0_19 = arith.constant 0 : index
    %c0_20 = arith.constant 0 : index
    %c20 = arith.constant 20 : index
    %12 = vector.load %arg2[%c0_18, %c0_19, %c0_20, %c20] : memref<1x1x16x256xbf16, #tpu.memory_space<vmem>>, vector<1x1x16x128xbf16>
    %13 = vector.shape_cast %12 : vector<1x1x16x128xbf16> to vector<16x128xbf16>
    %c0_21 = arith.constant 0 : index
    %c0_22 = arith.constant 0 : index
    %c0_23 = arith.constant 0 : index
    %c21 = arith.constant 21 : index
    %14 = vector.load %arg2[%c0_21, %c0_22, %c0_23, %c21] : memref<1x1x16x256xbf16, #tpu.memory_space<vmem>>, vector<1x1x16x128xbf16>
    %15 = vector.shape_cast %14 : vector<1x1x16x128xbf16> to vector<16x128xbf16>
    %c0_24 = arith.constant 0 : index
    %c0_25 = arith.constant 0 : index
    %c0_26 = arith.constant 0 : index
    %c22 = arith.constant 22 : index
    %16 = vector.load %arg2[%c0_24, %c0_25, %c0_26, %c22] : memref<1x1x16x256xbf16, #tpu.memory_space<vmem>>, vector<1x1x16x128xbf16>
    %17 = vector.shape_cast %16 : vector<1x1x16x128xbf16> to vector<16x128xbf16>
    %c0_27 = arith.constant 0 : index
    %c0_28 = arith.constant 0 : index
    %c0_29 = arith.constant 0 : index
    %c0_30 = arith.constant 0 : index
    %18 = vector.load %arg3[%c0_27, %c0_28, %c0_29, %c0_30] : memref<1x1x16x256xbf16, #tpu.memory_space<vmem>>, vector<1x1x16x128xbf16>
    %19 = vector.shape_cast %18 : vector<1x1x16x128xbf16> to vector<16x128xbf16>
    %c0_31 = arith.constant 0 : index
    %c0_32 = arith.constant 0 : index
    %c0_33 = arith.constant 0 : index
    %c1_34 = arith.constant 1 : index
    %20 = vector.load %arg3[%c0_31, %c0_32, %c0_33, %c1_34] : memref<1x1x16x256xbf16, #tpu.memory_space<vmem>>, vector<1x1x16x128xbf16>
    %21 = vector.shape_cast %20 : vector<1x1x16x128xbf16> to vector<16x128xbf16>
    %c0_35 = arith.constant 0 : index
    %c0_36 = arith.constant 0 : index
    %c0_37 = arith.constant 0 : index
    %c2_38 = arith.constant 2 : index
    %22 = vector.load %arg3[%c0_35, %c0_36, %c0_37, %c2_38] : memref<1x1x16x256xbf16, #tpu.memory_space<vmem>>, vector<1x1x16x128xbf16>
    %23 = vector.shape_cast %22 : vector<1x1x16x128xbf16> to vector<16x128xbf16>
    %c0_39 = arith.constant 0 : index
    %c0_40 = arith.constant 0 : index
    %c0_41 = arith.constant 0 : index
    %c10_42 = arith.constant 10 : index
    %24 = vector.load %arg3[%c0_39, %c0_40, %c0_41, %c10_42] : memref<1x1x16x256xbf16, #tpu.memory_space<vmem>>, vector<1x1x16x128xbf16>
    %25 = vector.shape_cast %24 : vector<1x1x16x128xbf16> to vector<16x128xbf16>
    %c0_43 = arith.constant 0 : index
    %c0_44 = arith.constant 0 : index
    %c0_45 = arith.constant 0 : index
    %c11_46 = arith.constant 11 : index
    %26 = vector.load %arg3[%c0_43, %c0_44, %c0_45, %c11_46] : memref<1x1x16x256xbf16, #tpu.memory_space<vmem>>, vector<1x1x16x128xbf16>
    %27 = vector.shape_cast %26 : vector<1x1x16x128xbf16> to vector<16x128xbf16>
    %c0_47 = arith.constant 0 : index
    %c0_48 = arith.constant 0 : index
    %c0_49 = arith.constant 0 : index
    %c12_50 = arith.constant 12 : index
    %28 = vector.load %arg3[%c0_47, %c0_48, %c0_49, %c12_50] : memref<1x1x16x256xbf16, #tpu.memory_space<vmem>>, vector<1x1x16x128xbf16>
    %29 = vector.shape_cast %28 : vector<1x1x16x128xbf16> to vector<16x128xbf16>
    %c0_51 = arith.constant 0 : index
    %c0_52 = arith.constant 0 : index
    %c0_53 = arith.constant 0 : index
    %c20_54 = arith.constant 20 : index
    %30 = vector.load %arg3[%c0_51, %c0_52, %c0_53, %c20_54] : memref<1x1x16x256xbf16, #tpu.memory_space<vmem>>, vector<1x1x16x128xbf16>
    %31 = vector.shape_cast %30 : vector<1x1x16x128xbf16> to vector<16x128xbf16>
    %c0_55 = arith.constant 0 : index
    %c0_56 = arith.constant 0 : index
    %c0_57 = arith.constant 0 : index
    %c21_58 = arith.constant 21 : index
    %32 = vector.load %arg3[%c0_55, %c0_56, %c0_57, %c21_58] : memref<1x1x16x256xbf16, #tpu.memory_space<vmem>>, vector<1x1x16x128xbf16>
    %33 = vector.shape_cast %32 : vector<1x1x16x128xbf16> to vector<16x128xbf16>
    %c0_59 = arith.constant 0 : index
    %c0_60 = arith.constant 0 : index
    %c0_61 = arith.constant 0 : index
    %c22_62 = arith.constant 22 : index
    %34 = vector.load %arg3[%c0_59, %c0_60, %c0_61, %c22_62] : memref<1x1x16x256xbf16, #tpu.memory_space<vmem>>, vector<1x1x16x128xbf16>
    %35 = vector.shape_cast %34 : vector<1x1x16x128xbf16> to vector<16x128xbf16>
    %36 = tpu.concatenate %1, %3, %5, %7, %9, %11, %13, %15, %17, %19, %21, %23, %25, %27, %29, %31 in 0 : vector<16x128xbf16>, vector<16x128xbf16>, vector<16x128xbf16>, vector<16x128xbf16>, vector<16x128xbf16>, vector<16x128xbf16>, vector<16x128xbf16>, vector<16x128xbf16>, vector<16x128xbf16>, vector<16x128xbf16>, vector<16x128xbf16>, vector<16x128xbf16>, vector<16x128xbf16>, vector<16x128xbf16>, vector<16x128xbf16>, vector<16x128xbf16> -> vector<256x128xbf16>
    %37 = tpu.concatenate %33, %35 in 0 : vector<16x128xbf16>, vector<16x128xbf16> -> vector<32x128xbf16>
    %38 = tpu.concatenate %36, %37 in 0 : vector<256x128xbf16>, vector<32x128xbf16> -> vector<288x128xbf16>
    %c0_63 = arith.constant 0 : index
    %c0_64 = arith.constant 0 : index
    %39 = vector.load %arg4[%c0_63, %c0_64] : memref<4x288xbf16, #tpu.memory_space<vmem>>, vector<4x288xbf16>
    %cst = arith.constant dense<0.000000e+00> : vector<4x128xf32>
    %40 = tpu.matmul %39, %38, %cst {dimension_numbers = #tpu.dot_dimension_numbers<[1], [0], [0], [1], [0, 0, 1, 1], [], []>} : vector<4x288xbf16>, vector<288x128xbf16>, vector<4x128xf32> -> vector<4x128xf32>
    %c0_65 = arith.constant 0 : index
    %c0_66 = arith.constant 0 : index
    %41 = vector.load %arg5[%c0_65, %c0_66] : memref<4x1xf32, #tpu.memory_space<vmem>>, vector<4x1xf32>
    %42 = vector.broadcast %41 : vector<4x1xf32> to vector<4x128xf32>
    %43 = arith.mulf %40, %42 : vector<4x128xf32>
    %c0_67 = arith.constant 0 : index
    %c0_68 = arith.constant 0 : index
    %44 = vector.load %arg6[%c0_67, %c0_68] : memref<4x1xf32, #tpu.memory_space<vmem>>, vector<4x1xf32>
    %45 = vector.broadcast %44 : vector<4x1xf32> to vector<4x128xf32>
    %46 = arith.addf %43, %45 : vector<4x128xf32>
    %c0_69 = arith.constant 0 : index
    %c0_70 = arith.constant 0 : index
    %c0_71 = arith.constant 0 : index
    %c0_72 = arith.constant 0 : index
    %47 = vector.load %arg7[%c0_69, %c0_70, %c0_71, %c0_72] : memref<1x1x4x128xf32, #tpu.memory_space<vmem>>, vector<1x1x4x128xf32>
    %48 = vector.shape_cast %47 : vector<1x1x4x128xf32> to vector<4x128xf32>
    %49 = vector.shape_cast %46 : vector<4x128xf32> to vector<1x1x4x128xf32>
    tpu.vector_store %arg7[%c0_69, %c0_70, %c0_71, %c0_72], %49 {strides = array<i32>} : memref<1x1x4x128xf32, #tpu.memory_space<vmem>>, vector<1x1x4x128xf32>,
    return
  }
  func.func @transform_0(%arg0: i32, %arg1: i32) -> (i32, i32, i32, i32) {
    %c1_i32 = arith.constant 1 : i32
    %0 = arith.muli %arg1, %c1_i32 : i32
    %c0_i32 = arith.constant 0 : i32
    %1 = arith.addi %0, %c0_i32 : i32
    %c0_i32_0 = arith.constant 0 : i32
    %c0_i32_1 = arith.constant 0 : i32
    %c0_i32_2 = arith.constant 0 : i32
    return %arg0, %1, %c0_i32_0, %c0_i32_1 : i32, i32, i32, i32
  }
  func.func @transform_1(%arg0: i32, %arg1: i32) -> (i32, i32, i32, i32) {
    %c1_i32 = arith.constant 1 : i32
    %0 = arith.muli %arg1, %c1_i32 : i32
    %c1_i32_0 = arith.constant 1 : i32
    %1 = arith.addi %0, %c1_i32_0 : i32
    %c0_i32 = arith.constant 0 : i32
    %c0_i32_1 = arith.constant 0 : i32
    %c0_i32_2 = arith.constant 0 : i32
    return %arg0, %1, %c0_i32, %c0_i32_1 : i32, i32, i32, i32
  }
  func.func @transform_2(%arg0: i32, %arg1: i32) -> (i32, i32) {
    %c0_i32 = arith.constant 0 : i32
    %c0_i32_0 = arith.constant 0 : i32
    %c0_i32_1 = arith.constant 0 : i32
    return %c0_i32, %c0_i32_0 : i32, i32
  }
  func.func @transform_3(%arg0: i32, %arg1: i32) -> (i32, i32) {
    %c0_i32 = arith.constant 0 : i32
    %c0_i32_0 = arith.constant 0 : i32
    %c0_i32_1 = arith.constant 0 : i32
    return %c0_i32, %c0_i32_0 : i32, i32
  }
  func.func @transform_4(%arg0: i32, %arg1: i32) -> (i32, i32) {
    %c0_i32 = arith.constant 0 : i32
    %c0_i32_0 = arith.constant 0 : i32
    %c0_i32_1 = arith.constant 0 : i32
    return %c0_i32, %c0_i32_0 : i32, i32
  }
  func.func @transform_5(%arg0: i32, %arg1: i32) -> (i32, i32, i32, i32) {
    %c0_i32 = arith.constant 0 : i32
    %c0_i32_0 = arith.constant 0 : i32
    %c0_i32_1 = arith.constant 0 : i32
    return %arg0, %arg1, %c0_i32, %c0_i32_0 : i32, i32, i32, i32
  }
}

</mosaic_0001>

<llo_original>
// kernel: tile.6
$region0: #{tile.6}
  #allocation2 [shape = 's32[1]{0}', space=sflag, size = 0x4, scoped, tag = 'scoped memory for tile.6']
  %s0 = inlined_call_operand.<no memory space> [shape: f32[], index: 0, kind: input, shape index: {}]
  %s1 = inlined_call_operand.hbm [shape: f32[128,1], index: 1, kind: output, shape index: {}]
  %v2 = vstv %s0
  $region1: #{tile.6} parent=0
    #allocation0 [shape = 'u8[65536]{0}', space=vmem, size = 0x10000, scoped, tag = 'operand span for operand 1']
    #allocation1 [shape = 's32[1]{0}', space=sflag, size = 0x4, scoped, tag = 'scoped memory for tile.6']
    %3 = vsyncpa [#allocation1], 0
    %4 = vst [vmem:[#allocation0] sm:$0xff] %v2
    %s5 = scalar_lea.vmem [#allocation0], 8
    %6 = vst [vmem:[%s5] sm:$0xff] %v2
    %s7 = scalar_lea.vmem [#allocation0], 16
    %8 = vst [vmem:[%s7] sm:$0xff] %v2
    %s9 = scalar_lea.vmem [#allocation0], 24
    %10 = vst [vmem:[%s9] sm:$0xff] %v2
    %s11 = scalar_lea.vmem [#allocation0], 32
    %12 = vst [vmem:[%s11] sm:$0xff] %v2
    %s13 = scalar_lea.vmem [#allocation0], 40
    %14 = vst [vmem:[%s13] sm:$0xff] %v2
    %s15 = scalar_lea.vmem [#allocation0], 48
    %16 = vst [vmem:[%s15] sm:$0xff] %v2
    %s17 = scalar_lea.vmem [#allocation0], 56
    %18 = vst [vmem:[%s17] sm:$0xff] %v2
    %s19 = scalar_lea.vmem [#allocation0], 64
    %20 = vst [vmem:[%s19] sm:$0xff] %v2
    %s21 = scalar_lea.vmem [#allocation0], 72
    %22 = vst [vmem:[%s21] sm:$0xff] %v2
    %s23 = scalar_lea.vmem [#allocation0], 80
    %24 = vst [vmem:[%s23] sm:$0xff] %v2
    %s25 = scalar_lea.vmem [#allocation0], 88
    %26 = vst [vmem:[%s25] sm:$0xff] %v2
    %s27 = scalar_lea.vmem [#allocation0], 96
    %28 = vst [vmem:[%s27] sm:$0xff] %v2
    %s29 = scalar_lea.vmem [#allocation0], 104
    %30 = vst [vmem:[%s29] sm:$0xff] %v2
    %s31 = scalar_lea.vmem [#allocation0], 112
    %32 = vst [vmem:[%s31] sm:$0xff] %v2
    %s33 = scalar_lea.vmem [#allocation0], 120
    %34 = vst [vmem:[%s33] sm:$0xff] %v2
    %s36 = ssub.s32 2048, 2048
    %37 = vsyncadd [#allocation1], %s36
    %s38 = sshll.u32 [#allocation0], 4
    %s39 = int_to_ptr.vmem [resolvable:$true] %s38
    %44 = dma.vmem_to_hbm [thread:$0]  %s39, 2048, %s1, [#allocation1], 128, 128, 8
    %45 = dma.done [#allocation1], 2048
    %46 = vsyncpa [#allocation1], 1

// kernel: tile.4
$region0: #{tile.4}
  #allocation2 [shape = 's32[1]{0}', space=sflag, size = 0x4, scoped, tag = 'scoped memory for tile.4']
  %s0 = inlined_call_operand.<no memory space> [shape: f32[], index: 0, kind: input, shape index: {}]
  %s1 = inlined_call_operand.hbm [shape: f32[64,1], index: 1, kind: output, shape index: {}]
  %v2 = vstv %s0
  $region1: #{tile.4} parent=0
    #allocation0 [shape = 'u8[32768]{0}', space=vmem, size = 0x8000, scoped, tag = 'operand span for operand 1']
    #allocation1 [shape = 's32[1]{0}', space=sflag, size = 0x4, scoped, tag = 'scoped memory for tile.4']
    %3 = vsyncpa [#allocation1], 0
    %4 = vst [vmem:[#allocation0] sm:$0xff] %v2
    %s5 = scalar_lea.vmem [#allocation0], 8
    %6 = vst [vmem:[%s5] sm:$0xff] %v2
    %s7 = scalar_lea.vmem [#allocation0], 16
    %8 = vst [vmem:[%s7] sm:$0xff] %v2
    %s9 = scalar_lea.vmem [#allocation0], 24
    %10 = vst [vmem:[%s9] sm:$0xff] %v2
    %s11 = scalar_lea.vmem [#allocation0], 32
    %12 = vst [vmem:[%s11] sm:$0xff] %v2
    %s13 = scalar_lea.vmem [#allocation0], 40
    %14 = vst [vmem:[%s13] sm:$0xff] %v2
    %s15 = scalar_lea.vmem [#allocation0], 48
    %16 = vst [vmem:[%s15] sm:$0xff] %v2
    %s17 = scalar_lea.vmem [#allocation0], 56
    %18 = vst [vmem:[%s17] sm:$0xff] %v2
    %s20 = ssub.s32 1024, 1024
    %21 = vsyncadd [#allocation1], %s20
    %s22 = sshll.u32 [#allocation0], 4
    %s23 = int_to_ptr.vmem [resolvable:$true] %s22
    %28 = dma.vmem_to_hbm [thread:$0]  %s23, 1024, %s1, [#allocation1], 128, 128, 8
    %29 = dma.done [#allocation1], 1024
    %30 = vsyncpa [#allocation1], 1

</llo_original>
